<compile_context>
chip_gen: v7x
topology: tpu7x:2x2x1
jax: 0.10.0
libtpu: 0.0.40
codegen_flags: <defaults>
</compile_context>

<pallas_src>
import functools

import jax
import jax.numpy as jnp
from jax.experimental import pallas as pl
from jax.experimental.pallas import tpu as pltpu

_NEG_BIG = -1e30  # finite "minus infinity" for padded class logits (exp -> 0)


def _round_up(x, m):
    return ((x + m - 1) // m) * m


def _smooth_l1(d):
    ad = jnp.abs(d)
    return jnp.where(ad < 1.0, 0.5 * d * d, ad - 0.5)


def _loss_kernel(ploc_ref, plabel_ref, gloc_ref, glabel_ref, dbox_ref,
                 out_ref, m_sc, s_sc, picked_sc,
                 *, scale_xy: float, scale_wh: float, num_anchors: int):
    c = pl.program_id(1)
    n_c = pl.num_programs(1)
    Bt, Ct, A = plabel_ref.shape          # A = anchor count padded to 128

    chunk = plabel_ref[...].astype(jnp.float32)        # (Bt, Ct, A)
    glabel = glabel_ref[...]                            # (Bt, A) int32

    # ---- one pass over this class chunk: running max / exp-sum / picked ----
    # NOTE: out-of-range glabel (>= C or < 0) silently yields picked == 0;
    # the PyTorch reference (CrossEntropyLoss) would raise.  Inputs are
    # assumed in-range.
    cls_iota = jax.lax.broadcasted_iota(jnp.int32, (Bt, Ct, A), 1) + c * Ct
    pick_chunk = jnp.sum(
        jnp.where(cls_iota == glabel[:, None, :], chunk, 0.0), axis=1)  # (Bt,A)
    m_chunk = jnp.max(chunk, axis=1)                                    # (Bt,A)

    @pl.when(c == 0)
    def _():
        m_sc[...] = jnp.full(m_sc.shape, _NEG_BIG, dtype=m_sc.dtype)
        s_sc[...] = jnp.zeros(s_sc.shape, dtype=s_sc.dtype)
        picked_sc[...] = jnp.zeros(picked_sc.shape, dtype=picked_sc.dtype)

    m_old = m_sc[...]
    m_new = jnp.maximum(m_old, m_chunk)
    s_sc[...] = (s_sc[...] * jnp.exp(m_old - m_new)
                 + jnp.sum(jnp.exp(chunk - m_new[:, None, :]), axis=1))
    m_sc[...] = m_new
    picked_sc[...] = picked_sc[...] + pick_chunk

    # ---- last class step: loc loss + hard-negative mining + output ---------
    @pl.when(c == n_c - 1)
    def _():
        ploc = ploc_ref[...]              # (Bt, 4, A)
        gloc = gloc_ref[...]              # (Bt, 4, A)
        db = dbox_ref[...]                # (1, 4, A): rows = x, y, 1/w, 1/h

        idx = jax.lax.broadcasted_iota(jnp.int32, (Bt, A), 1)
        valid = idx < num_anchors                                  # (Bt, A)
        mask = (glabel > 0) & valid
        maskf = mask.astype(jnp.float32)

        # _location_vec: gt regression targets relative to anchors
        inv_wh = db[:, 2:, :]
        gxy = scale_xy * (gloc[:, :2, :] - db[:, :2, :]) * inv_wh
        # keep log finite on masked-out anchors (their loc loss is zeroed)
        ratio = jnp.where(mask[:, None, :], gloc[:, 2:, :] * inv_wh, 1.0)
        gwh = scale_wh * jnp.log(ratio)

        loc_per = (jnp.sum(_smooth_l1(ploc[:, :2, :] - gxy), axis=1)
                   + jnp.sum(_smooth_l1(ploc[:, 2:, :] - gwh), axis=1))
        loc_loss = jnp.sum(maskf * loc_per, axis=-1, keepdims=True)   # (Bt,1)

        # per-anchor cross entropy from the online-LSE scratch
        lse = m_sc[...] + jnp.log(s_sc[...])
        con = lse - picked_sc[...]                                    # (Bt, A)

        pos_num = jnp.sum(mask.astype(jnp.int32), axis=-1, keepdims=True)
        neg_num = jnp.minimum(3 * pos_num, num_anchors)               # (Bt, 1)

        # Exclude positives AND padded lanes from the mining pool; clamp to
        # >= 0 so the int32 bit-pattern ordering is monotone.
        con_neg = jnp.where(mask | jnp.logical_not(valid), 0.0,
                            jnp.maximum(con, 0.0))
        u = pltpu.bitcast(con_neg, jnp.int32)

        def cnt_ge(cand):
            return jnp.sum((u >= cand).astype(jnp.int32),
                           axis=-1, keepdims=True)

        # (1) radix-select the neg_num-th largest bit pattern.
        #     Bit 30 alone first (bit 31 is the sign bit, always clear for
        #     non-negative floats), then 2 bits per step: 16 serial rounds.
        prefix = jnp.zeros_like(neg_num)
        cand = prefix | (1 << 30)
        prefix = jnp.where(cnt_ge(cand) >= neg_num, cand, prefix)
        for shift in range(28, -1, -2):
            d = jnp.zeros_like(neg_num)
            for v in (1, 2, 3):
                d = d + (cnt_ge(prefix | (v << shift)) >= neg_num
                         ).astype(jnp.int32)
            prefix = prefix + (d << shift)
        t_bits = prefix

        gt = u > t_bits
        eq = u == t_bits
        count_gt = jnp.sum(gt.astype(jnp.int32), axis=-1, keepdims=True)
        r = neg_num - count_gt     # tied-at-threshold anchors to keep

        def cnt_tie_lt(cand):
            return jnp.sum((eq & (idx < cand)).astype(jnp.int32),
                           axis=-1, keepdims=True)

        # (2) among ties keep the r earliest anchor indices (matches the
        #     stable descending argsort of the reference): 2-bit-per-step
        #     search for the r-th smallest tied index.  Padded lanes have
        #     u == 0 and sit at the highest indices, so they are never kept.
        nbits = max(2, (A - 1).bit_length())
        nbits += nbits & 1
        tidx = jnp.zeros_like(neg_num)
        for shift in range(nbits - 2, -1, -2):
            d = jnp.zeros_like(neg_num)
            for v in (1, 2, 3):
                d = d + (cnt_tie_lt(tidx | (v << shift)) < r).astype(jnp.int32)
            tidx = tidx + (d << shift)

        neg_mask = gt | (eq & (idx <= tidx))
        # NOTE: positive anchors tied at con_neg == 0 can enter neg_mask and
        # be double-counted; this matches the PyTorch reference behaviour.

        con_loss = jnp.sum(con * (maskf + neg_mask.astype(jnp.float32)),
                           axis=-1, keepdims=True)                   # (Bt, 1)
        total = loc_loss + con_loss
        num_mask = (pos_num > 0).astype(jnp.float32)
        pos_f = jnp.maximum(pos_num.astype(jnp.float32), 1e-6)
        res = total * num_mask / pos_f                               # (Bt, 1)

        out_ref[...] = jnp.broadcast_to(res, out_ref.shape).astype(out_ref.dtype)


def _vmem_capacity_bytes():
    try:
        info = pltpu.get_tpu_info()
        cap = getattr(info, "vmem_capacity_bytes", None)
        if cap:
            return int(cap)
    except Exception:
        pass
    return 64 * 1024 * 1024          # conservative (v7x per-TC)


def _vmem_estimate(Bt, Ct, A_pad, plabel_itemsize):
    plabel = 2 * Bt * Ct * A_pad * plabel_itemsize      # double-buffered
    locs = 2 * (2 * Bt * 4 * A_pad * 4)                 # ploc + gloc
    glab = 2 * Bt * A_pad * 4
    dbox = 2 * 4 * A_pad * 4
    outb = 2 * Bt * 128 * 4
    scratch = 3 * Bt * A_pad * 4                        # m / s / picked
    return plabel + locs + glab + dbox + outb + scratch


def multibox_loss(ploc, plabel, gloc, glabel, dboxes,
                  *, scale_xy=10.0, scale_wh=5.0,
                  class_block=None, plabel_bf16=False):
    """Pallas implementation of Loss.forward. Returns a scalar (mean over N)."""
    N, _, A = ploc.shape
    C = plabel.shape[1]

    A_pad = _round_up(A, 128)            # full 128-lane vregs, masked in-kernel
    C8 = _round_up(C, 8)                 # full sublanes for the class axis

    # Batch tile: full 8 sublanes when N > 8 (padded), else the whole batch
    # (block dim == full dim satisfies the (8,128) rule for 2-D operands).
    Bt = N if N <= 8 else 8
    Np = _round_up(N, Bt)

    vmem_cap = _vmem_capacity_bytes()
    budget = int(vmem_cap * 0.6)
    itm = 2 if plabel_bf16 else 4

    if class_block is not None:
        Ct = min(_round_up(int(class_block), 8), C8)
        n_c = -(-C8 // Ct)
        Ct = _round_up(-(-C8 // n_c), 8)
    else:
        n_c, Ct = 1, C8
        while _vmem_estimate(Bt, Ct, A_pad, itm) > budget and Ct > 8:
            n_c += 1
            Ct = _round_up(-(-C8 // n_c), 8)
    C_pad = n_c * Ct
    # TODO(synk): for A ~ 76k on v7x (64 MiB VMEM) even Ct=8 overflows the 60%
    # budget; the anchor axis would also need tiling.  Here we only raise the
    # scoped limit toward the physical capacity.
    need = _vmem_estimate(Bt, Ct, A_pad, itm)
    vmem_limit = int(min(0.9 * vmem_cap, max(need + (4 << 20), 32 << 20)))

    pf = jnp.float32
    ploc_p = jnp.pad(ploc.astype(pf), ((0, Np - N), (0, 0), (0, A_pad - A)))
    gloc_p = jnp.pad(gloc.astype(pf), ((0, Np - N), (0, 0), (0, A_pad - A)))
    glab_p = jnp.pad(glabel.astype(jnp.int32), ((0, Np - N), (0, A_pad - A)))
    plab_p = jnp.pad(plabel.astype(pf),
                     ((0, Np - N), (0, C_pad - C), (0, A_pad - A)),
                     constant_values=_NEG_BIG)
    if plabel_bf16:
        plab_p = plab_p.astype(jnp.bfloat16)   # halves the dominant HBM stream

    # Hoist the anchor-size reciprocals once: dboxes -> [x, y, 1/w, 1/h].
    db = dboxes.astype(pf)
    db_packed = jnp.concatenate([db[:, :2, :], 1.0 / db[:, 2:, :]], axis=1)
    db_packed = jnp.pad(db_packed, ((0, 0), (0, 0), (0, A_pad - A)))

    kernel = functools.partial(_loss_kernel, scale_xy=float(scale_xy),
                               scale_wh=float(scale_wh), num_anchors=int(A))

    per_row = pl.pallas_call(
        kernel,
        out_shape=jax.ShapeDtypeStruct((Np, 128), jnp.float32),
        grid_spec=pltpu.PrefetchScalarGridSpec(
            num_scalar_prefetch=0,
            grid=(Np // Bt, C_pad // Ct),
            in_specs=[
                pl.BlockSpec((Bt, 4, A_pad), lambda b, c: (b, 0, 0)),    # ploc
                pl.BlockSpec((Bt, Ct, A_pad), lambda b, c: (b, c, 0)),   # plabel
                pl.BlockSpec((Bt, 4, A_pad), lambda b, c: (b, 0, 0)),    # gloc
                pl.BlockSpec((Bt, A_pad), lambda b, c: (b, 0)),          # glabel
                pl.BlockSpec((1, 4, A_pad), lambda b, c: (0, 0, 0)),     # dboxes
            ],
            out_specs=pl.BlockSpec((Bt, 128), lambda b, c: (b, 0)),
            scratch_shapes=[pltpu.VMEM((Bt, A_pad), jnp.float32)] * 3,
        ),
        compiler_params=pltpu.CompilerParams(
            dimension_semantics=("parallel", "arbitrary"),
            vmem_limit_bytes=vmem_limit),
    )(ploc_p, plab_p, gloc_p, glab_p, db_packed)

    # final mean over the real batch is cheap glue
    return per_row[:N, 0].mean()


def multibox_loss_ref(ploc, plabel, gloc, glabel, dboxes,
                      *, scale_xy=10.0, scale_wh=5.0):
    """Pure-JAX reference mirroring the PyTorch module."""
    mask = glabel > 0
    pos_num = mask.sum(axis=1)
    gxy = scale_xy * (gloc[:, :2, :] - dboxes[:, :2, :]) / dboxes[:, 2:, :]
    gwh = scale_wh * jnp.log(gloc[:, 2:, :] / dboxes[:, 2:, :])
    vec_gd = jnp.concatenate([gxy, gwh], axis=1)
    d = ploc - vec_gd
    ad = jnp.abs(d)
    sl1 = jnp.where(ad < 1.0, 0.5 * d * d, ad - 0.5).sum(axis=1)
    loc_loss = (mask.astype(jnp.float32) * sl1).sum(axis=1)
    logp = jax.nn.log_softmax(plabel, axis=1)
    con = -jnp.take_along_axis(logp, glabel[:, None, :], axis=1)[:, 0, :]
    con_neg = jnp.where(mask, 0.0, con)
    con_idx = jnp.argsort(-con_neg, axis=1)        # stable
    con_rank = jnp.argsort(con_idx, axis=1)
    neg_num = jnp.minimum(3 * pos_num, mask.shape[1])[:, None]
    neg_mask = con_rank < neg_num
    con_loss = (con * (mask.astype(jnp.float32)
                       + neg_mask.astype(jnp.float32))).sum(axis=1)
    total = loc_loss + con_loss
    num_mask = (pos_num > 0).astype(jnp.float32)
    pos_f = jnp.maximum(pos_num.astype(jnp.float32), 1e-6)
    return (total * num_mask / pos_f).mean()


if __name__ == "__main__":
    SCALE_XY, SCALE_WH = 10.0, 5.0   # = 1/0.1, 1/0.2 (SSD defaults)

    def make_case(seed, N, C, A, pos_prob_per_row, quantize=False):
        key = jax.random.PRNGKey(seed)
        ks = jax.random.split(key, 8)
        ploc = jax.random.normal(ks[0], (N, 4, A), jnp.float32)
        plabel = jax.random.normal(ks[1], (N, C, A), jnp.float32)
        if quantize:
            plabel = jnp.round(plabel * 2.0) / 2.0   # heavy exact ties in con
        gloc_xy = jax.random.uniform(ks[2], (N, 2, A), minval=-1.0, maxval=1.0)
        gloc_wh = jax.random.uniform(ks[3], (N, 2, A), minval=0.1, maxval=2.0)
        gloc = jnp.concatenate([gloc_xy, gloc_wh], axis=1).astype(jnp.float32)
        cls = jax.random.randint(ks[4], (N, A), 1, C)
        u = jax.random.uniform(ks[5], (N, A))
        pp = jnp.asarray(pos_prob_per_row, jnp.float32)[:, None]
        glabel = jnp.where(u < pp, cls, 0).astype(jnp.int32)
        db_xy = jax.random.uniform(ks[6], (1, 2, A), minval=0.0, maxval=1.0)
        db_wh = jax.random.uniform(ks[7], (1, 2, A), minval=0.1, maxval=1.0)
        dboxes = jnp.concatenate([db_xy, db_wh], axis=1).astype(jnp.float32)
        return ploc, plabel, gloc, glabel, dboxes

    cases = [
        # name,     N, C,  A,   per-row positive prob,  tied logits, class_block
        ("base",    2, 8,  256, [0.15, 0.15],            False, None),
        # A not a multiple of 128, ragged C, one all-background row,
        # one row with 3*pos_num >= A, heavily tied logits.
        ("edge",    3, 7,  300, [0.0, 0.5, 0.12],        True,  None),
        # forces class-axis tiling (3 chunks) with ragged C -> online LSE path.
        ("ctile",   2, 20, 384, [0.2, 0.1],              False, 8),
    ]
    for name, N, C, A, pp, q, cb in cases:
        args = make_case(0, N, C, A, pp, q)
        out = multibox_loss(*args, scale_xy=SCALE_XY, scale_wh=SCALE_WH,
                            class_block=cb)
        out = jax.block_until_ready(out)
        ref = multibox_loss_ref(*args, scale_xy=SCALE_XY, scale_wh=SCALE_WH)
        assert jnp.isfinite(out), (name, out)
        assert jnp.allclose(out, ref, rtol=1e-3, atol=1e-3), (name, out, ref)
    print("KERNEL_OK")
</pallas_src>

<mosaic_0001>
module attributes {stable_mosaic.version = 11 : i64} {
  func.func @_loss_kernel(%arg0: i32, %arg1: i32, %arg2: memref<2x4x256xf32, #tpu.memory_space<vmem>>, %arg3: memref<2x8x256xf32, #tpu.memory_space<vmem>>, %arg4: memref<2x4x256xf32, #tpu.memory_space<vmem>>, %arg5: memref<2x256xi32, #tpu.memory_space<vmem>>, %arg6: memref<1x4x256xf32, #tpu.memory_space<vmem>>, %arg7: memref<2x128xf32, #tpu.memory_space<vmem>>, %arg8: memref<2x256xf32, #tpu.memory_space<vmem>>, %arg9: memref<2x256xf32, #tpu.memory_space<vmem>>, %arg10: memref<2x256xf32, #tpu.memory_space<vmem>>) attributes {dimension_semantics = [#tpu.dimension_semantics<parallel>, #tpu.dimension_semantics<arbitrary>], iteration_bounds = array<i64: 1, 1>, scalar_prefetch = 0 : i64, scratch_operands = 3 : i64, tpu.core_type = #tpu.core_type<tc>, window_params = [{transform_indices = @transform_0, window_bounds = array<i64: 2, 4, 256>}, {transform_indices = @transform_1, window_bounds = array<i64: 2, 8, 256>}, {transform_indices = @transform_2, window_bounds = array<i64: 2, 4, 256>}, {transform_indices = @transform_3, window_bounds = array<i64: 2, 256>}, {pipeline_mode = #tpu.pipeline_mode<synchronous>, transform_indices = @transform_4, window_bounds = array<i64: 1, 4, 256>}, {transform_indices = @transform_5, window_bounds = array<i64: 2, 128>}]} {
    %c0 = arith.constant 0 : index
    %c0_0 = arith.constant 0 : index
    %c0_1 = arith.constant 0 : index
    %0 = vector.load %arg3[%c0, %c0_0, %c0_1] : memref<2x8x256xf32, #tpu.memory_space<vmem>>, vector<2x8x256xf32>
    %c0_2 = arith.constant 0 : index
    %c0_3 = arith.constant 0 : index
    %1 = vector.load %arg5[%c0_2, %c0_3] : memref<2x256xi32, #tpu.memory_space<vmem>>, vector<2x256xi32>
    %2 = tpu.iota {dimensions = array<i32: 1>} : vector<2x8x256xi32>
    %c8_i32 = arith.constant 8 : i32
    %3 = arith.muli %arg1, %c8_i32 : i32
    %4 = vector.broadcast %3 : i32 to vector<2x8x256xi32>
    %5 = arith.addi %2, %4 : vector<2x8x256xi32>
    %6 = vector.shape_cast %1 : vector<2x256xi32> to vector<2x1x256xi32>
    %7 = vector.broadcast %6 : vector<2x1x256xi32> to vector<2x8x256xi32>
    %8 = arith.cmpi eq, %5, %7 : vector<2x8x256xi32>
    %cst = arith.constant 0.000000e+00 : f32
    %9 = vector.broadcast %cst : f32 to vector<2x8x256xf32>
    %10 = arith.select %8, %0, %9 : vector<2x8x256xi1>, vector<2x8x256xf32>
    %cst_4 = arith.constant dense<0.000000e+00> : vector<2x256xf32>
    %11 = vector.multi_reduction <add>, %10, %cst_4 [1] : vector<2x8x256xf32> to vector<2x256xf32>
    %cst_5 = arith.constant dense<0xFF800000> : vector<2x256xf32>
    %12 = vector.multi_reduction <maximumf>, %0, %cst_5 [1] : vector<2x8x256xf32> to vector<2x256xf32>
    %c0_i32 = arith.constant 0 : i32
    %13 = arith.cmpi eq, %arg1, %c0_i32 : i32
    %14 = arith.extui %13 : i1 to i32
    %c0_i32_6 = arith.constant 0 : i32
    %15 = arith.cmpi ne, %14, %c0_i32_6 : i32
    scf.if %15 {
      %cst_22 = arith.constant -1.000000e+30 : f32
      %36 = vector.broadcast %cst_22 : f32 to vector<2x256xf32>
      %c0_23 = arith.constant 0 : index
      %c0_24 = arith.constant 0 : index
      %37 = vector.load %arg8[%c0_23, %c0_24] : memref<2x256xf32, #tpu.memory_space<vmem>>, vector<2x256xf32>
      tpu.vector_store %arg8[%c0_23, %c0_24], %36 {strides = array<i32>} : memref<2x256xf32, #tpu.memory_space<vmem>>, vector<2x256xf32>,
      %cst_25 = arith.constant 0.000000e+00 : f32
      %38 = vector.broadcast %cst_25 : f32 to vector<2x256xf32>
      %c0_26 = arith.constant 0 : index
      %c0_27 = arith.constant 0 : index
      %39 = vector.load %arg9[%c0_26, %c0_27] : memref<2x256xf32, #tpu.memory_space<vmem>>, vector<2x256xf32>
      tpu.vector_store %arg9[%c0_26, %c0_27], %38 {strides = array<i32>} : memref<2x256xf32, #tpu.memory_space<vmem>>, vector<2x256xf32>,
      %cst_28 = arith.constant 0.000000e+00 : f32
      %40 = vector.broadcast %cst_28 : f32 to vector<2x256xf32>
      %c0_29 = arith.constant 0 : index
      %c0_30 = arith.constant 0 : index
      %41 = vector.load %arg10[%c0_29, %c0_30] : memref<2x256xf32, #tpu.memory_space<vmem>>, vector<2x256xf32>
      tpu.vector_store %arg10[%c0_29, %c0_30], %40 {strides = array<i32>} : memref<2x256xf32, #tpu.memory_space<vmem>>, vector<2x256xf32>,
    } else {
    }
    %c0_7 = arith.constant 0 : index
    %c0_8 = arith.constant 0 : index
    %16 = vector.load %arg8[%c0_7, %c0_8] : memref<2x256xf32, #tpu.memory_space<vmem>>, vector<2x256xf32>
    %17 = arith.maximumf %16, %12 : vector<2x256xf32>
    %c0_9 = arith.constant 0 : index
    %c0_10 = arith.constant 0 : index
    %18 = vector.load %arg9[%c0_9, %c0_10] : memref<2x256xf32, #tpu.memory_space<vmem>>, vector<2x256xf32>
    %19 = arith.subf %16, %17 : vector<2x256xf32>
    %20 = math.exp %19 : vector<2x256xf32>
    %21 = arith.mulf %18, %20 : vector<2x256xf32>
    %22 = vector.shape_cast %17 : vector<2x256xf32> to vector<2x1x256xf32>
    %23 = vector.broadcast %22 : vector<2x1x256xf32> to vector<2x8x256xf32>
    %24 = arith.subf %0, %23 : vector<2x8x256xf32>
    %25 = math.exp %24 : vector<2x8x256xf32>
    %cst_11 = arith.constant dense<0.000000e+00> : vector<2x256xf32>
    %26 = vector.multi_reduction <add>, %25, %cst_11 [1] : vector<2x8x256xf32> to vector<2x256xf32>
    %27 = arith.addf %21, %26 : vector<2x256xf32>
    %c0_12 = arith.constant 0 : index
    %c0_13 = arith.constant 0 : index
    %28 = vector.load %arg9[%c0_12, %c0_13] : memref<2x256xf32, #tpu.memory_space<vmem>>, vector<2x256xf32>
    tpu.vector_store %arg9[%c0_12, %c0_13], %27 {strides = array<i32>} : memref<2x256xf32, #tpu.memory_space<vmem>>, vector<2x256xf32>,
    %c0_14 = arith.constant 0 : index
    %c0_15 = arith.constant 0 : index
    %29 = vector.load %arg8[%c0_14, %c0_15] : memref<2x256xf32, #tpu.memory_space<vmem>>, vector<2x256xf32>
    tpu.vector_store %arg8[%c0_14, %c0_15], %17 {strides = array<i32>} : memref<2x256xf32, #tpu.memory_space<vmem>>, vector<2x256xf32>,
    %c0_16 = arith.constant 0 : index
    %c0_17 = arith.constant 0 : index
    %30 = vector.load %arg10[%c0_16, %c0_17] : memref<2x256xf32, #tpu.memory_space<vmem>>, vector<2x256xf32>
    %31 = arith.addf %30, %11 : vector<2x256xf32>
    %c0_18 = arith.constant 0 : index
    %c0_19 = arith.constant 0 : index
    %32 = vector.load %arg10[%c0_18, %c0_19] : memref<2x256xf32, #tpu.memory_space<vmem>>, vector<2x256xf32>
    tpu.vector_store %arg10[%c0_18, %c0_19], %31 {strides = array<i32>} : memref<2x256xf32, #tpu.memory_space<vmem>>, vector<2x256xf32>,
    %c0_i32_20 = arith.constant 0 : i32
    %33 = arith.cmpi eq, %arg1, %c0_i32_20 : i32
    %34 = arith.extui %33 : i1 to i32
    %c0_i32_21 = arith.constant 0 : i32
    %35 = arith.cmpi ne, %34, %c0_i32_21 : i32
    scf.if %35 {
      %c0_22 = arith.constant 0 : index
      %c0_23 = arith.constant 0 : index
      %c0_24 = arith.constant 0 : index
      %36 = vector.load %arg2[%c0_22, %c0_23, %c0_24] : memref<2x4x256xf32, #tpu.memory_space<vmem>>, vector<2x4x256xf32>
      %c0_25 = arith.constant 0 : index
      %c0_26 = arith.constant 0 : index
      %c0_27 = arith.constant 0 : index
      %37 = vector.load %arg4[%c0_25, %c0_26, %c0_27] : memref<2x4x256xf32, #tpu.memory_space<vmem>>, vector<2x4x256xf32>
      %c0_28 = arith.constant 0 : index
      %c0_29 = arith.constant 0 : index
      %c0_30 = arith.constant 0 : index
      %38 = vector.load %arg6[%c0_28, %c0_29, %c0_30] : memref<1x4x256xf32, #tpu.memory_space<vmem>>, vector<1x4x256xf32>
      %39 = tpu.iota {dimensions = array<i32: 1>} : vector<2x256xi32>
      %c256_i32 = arith.constant 256 : i32
      %40 = vector.broadcast %c256_i32 : i32 to vector<2x256xi32>
      %41 = arith.cmpi slt, %39, %40 : vector<2x256xi32>
      %c0_i32_31 = arith.constant 0 : i32
      %42 = vector.broadcast %c0_i32_31 : i32 to vector<2x256xi32>
      %43 = arith.cmpi sgt, %1, %42 : vector<2x256xi32>
      %44 = arith.andi %43, %41 : vector<2x256xi1>
      %45 = arith.extui %44 : vector<2x256xi1> to vector<2x256xi32>
      %46 = arith.sitofp %45 : vector<2x256xi32> to vector<2x256xf32>
      %47 = vector.extract_strided_slice %38 {offsets = [0, 2, 0], sizes = [1, 2, 256], strides = [1, 1, 1]} : vector<1x4x256xf32> to vector<1x2x256xf32>
      %48 = vector.extract_strided_slice %37 {offsets = [0, 0, 0], sizes = [2, 2, 256], strides = [1, 1, 1]} : vector<2x4x256xf32> to vector<2x2x256xf32>
      %49 = vector.extract_strided_slice %38 {offsets = [0, 0, 0], sizes = [1, 2, 256], strides = [1, 1, 1]} : vector<1x4x256xf32> to vector<1x2x256xf32>
      %50 = vector.broadcast %49 : vector<1x2x256xf32> to vector<2x2x256xf32>
      %51 = arith.subf %48, %50 : vector<2x2x256xf32>
      %cst_32 = arith.constant 1.000000e+01 : f32
      %52 = vector.broadcast %cst_32 : f32 to vector<2x2x256xf32>
      %53 = arith.mulf %52, %51 : vector<2x2x256xf32>
      %54 = vector.broadcast %47 : vector<1x2x256xf32> to vector<2x2x256xf32>
      %55 = arith.mulf %53, %54 : vector<2x2x256xf32>
      %56 = vector.shape_cast %44 : vector<2x256xi1> to vector<2x1x256xi1>
      %57 = vector.extract_strided_slice %37 {offsets = [0, 2, 0], sizes = [2, 2, 256], strides = [1, 1, 1]} : vector<2x4x256xf32> to vector<2x2x256xf32>
      %58 = vector.broadcast %47 : vector<1x2x256xf32> to vector<2x2x256xf32>
      %59 = arith.mulf %57, %58 : vector<2x2x256xf32>
      %cst_33 = arith.constant 1.000000e+00 : f32
      %60 = vector.shape_cast %56 : vector<2x1x256xi1> to vector<2x1x256xi1>
      %61 = vector.broadcast %60 : vector<2x1x256xi1> to vector<2x2x256xi1>
      %62 = vector.broadcast %cst_33 : f32 to vector<2x2x256xf32>
      %63 = arith.select %61, %59, %62 : vector<2x2x256xi1>, vector<2x2x256xf32>
      %64 = math.log %63 : vector<2x2x256xf32>
      %cst_34 = arith.constant 5.000000e+00 : f32
      %65 = vector.broadcast %cst_34 : f32 to vector<2x2x256xf32>
      %66 = arith.mulf %65, %64 : vector<2x2x256xf32>
      %67 = vector.extract_strided_slice %36 {offsets = [0, 0, 0], sizes = [2, 2, 256], strides = [1, 1, 1]} : vector<2x4x256xf32> to vector<2x2x256xf32>
      %68 = arith.subf %67, %55 : vector<2x2x256xf32>
      %69 = math.absf %68 : vector<2x2x256xf32>
      %cst_35 = arith.constant 1.000000e+00 : f32
      %70 = vector.broadcast %cst_35 : f32 to vector<2x2x256xf32>
      %71 = arith.cmpf olt, %69, %70 : vector<2x2x256xf32>
      %cst_36 = arith.constant 5.000000e-01 : f32
      %72 = vector.broadcast %cst_36 : f32 to vector<2x2x256xf32>
      %73 = arith.mulf %72, %68 : vector<2x2x256xf32>
      %74 = arith.mulf %73, %68 : vector<2x2x256xf32>
      %cst_37 = arith.constant 5.000000e-01 : f32
      %75 = vector.broadcast %cst_37 : f32 to vector<2x2x256xf32>
      %76 = arith.subf %69, %75 : vector<2x2x256xf32>
      %77 = arith.select %71, %74, %76 : vector<2x2x256xi1>, vector<2x2x256xf32>
      %cst_38 = arith.constant dense<0.000000e+00> : vector<2x256xf32>
      %78 = vector.multi_reduction <add>, %77, %cst_38 [1] : vector<2x2x256xf32> to vector<2x256xf32>
      %79 = vector.extract_strided_slice %36 {offsets = [0, 2, 0], sizes = [2, 2, 256], strides = [1, 1, 1]} : vector<2x4x256xf32> to vector<2x2x256xf32>
      %80 = arith.subf %79, %66 : vector<2x2x256xf32>
      %81 = math.absf %80 : vector<2x2x256xf32>
      %cst_39 = arith.constant 1.000000e+00 : f32
      %82 = vector.broadcast %cst_39 : f32 to vector<2x2x256xf32>
      %83 = arith.cmpf olt, %81, %82 : vector<2x2x256xf32>
      %cst_40 = arith.constant 5.000000e-01 : f32
      %84 = vector.broadcast %cst_40 : f32 to vector<2x2x256xf32>
      %85 = arith.mulf %84, %80 : vector<2x2x256xf32>
      %86 = arith.mulf %85, %80 : vector<2x2x256xf32>
      %cst_41 = arith.constant 5.000000e-01 : f32
      %87 = vector.broadcast %cst_41 : f32 to vector<2x2x256xf32>
      %88 = arith.subf %81, %87 : vector<2x2x256xf32>
      %89 = arith.select %83, %86, %88 : vector<2x2x256xi1>, vector<2x2x256xf32>
      %cst_42 = arith.constant dense<0.000000e+00> : vector<2x256xf32>
      %90 = vector.multi_reduction <add>, %89, %cst_42 [1] : vector<2x2x256xf32> to vector<2x256xf32>
      %91 = arith.addf %78, %90 : vector<2x256xf32>
      %92 = arith.mulf %46, %91 : vector<2x256xf32>
      %cst_43 = arith.constant dense<0.000000e+00> : vector<2xf32>
      %93 = vector.multi_reduction <add>, %92, %cst_43 [1] : vector<2x256xf32> to vector<2xf32>
      %94 = vector.shape_cast %93 : vector<2xf32> to vector<2x1xf32>
      %c0_44 = arith.constant 0 : index
      %c0_45 = arith.constant 0 : index
      %95 = vector.load %arg8[%c0_44, %c0_45] : memref<2x256xf32, #tpu.memory_space<vmem>>, vector<2x256xf32>
      %c0_46 = arith.constant 0 : index
      %c0_47 = arith.constant 0 : index
      %96 = vector.load %arg9[%c0_46, %c0_47] : memref<2x256xf32, #tpu.memory_space<vmem>>, vector<2x256xf32>
      %97 = math.log %96 : vector<2x256xf32>
      %98 = arith.addf %95, %97 : vector<2x256xf32>
      %c0_48 = arith.constant 0 : index
      %c0_49 = arith.constant 0 : index
      %99 = vector.load %arg10[%c0_48, %c0_49] : memref<2x256xf32, #tpu.memory_space<vmem>>, vector<2x256xf32>
      %100 = arith.subf %98, %99 : vector<2x256xf32>
      %101 = arith.extui %44 : vector<2x256xi1> to vector<2x256xi32>
      %cst_50 = arith.constant dense<0> : vector<2xi32>
      %102 = vector.multi_reduction <add>, %101, %cst_50 [1] : vector<2x256xi32> to vector<2xi32>
      %103 = vector.shape_cast %102 : vector<2xi32> to vector<2x1xi32>
      %c3_i32 = arith.constant 3 : i32
      %104 = vector.broadcast %c3_i32 : i32 to vector<2x1xi32>
      %105 = arith.muli %104, %103 : vector<2x1xi32>
      %c256_i32_51 = arith.constant 256 : i32
      %106 = vector.broadcast %c256_i32_51 : i32 to vector<2x1xi32>
      %107 = arith.minsi %105, %106 : vector<2x1xi32>
      %cst_52 = arith.constant dense<true> : vector<2x256xi1>
      %108 = arith.xori %41, %cst_52 : vector<2x256xi1>
      %109 = arith.ori %44, %108 : vector<2x256xi1>
      %cst_53 = arith.constant 0.000000e+00 : f32
      %110 = vector.broadcast %cst_53 : f32 to vector<2x256xf32>
      %111 = arith.maximumf %100, %110 : vector<2x256xf32>
      %cst_54 = arith.constant 0.000000e+00 : f32
      %112 = vector.broadcast %cst_54 : f32 to vector<2x256xf32>
      %113 = arith.select %109, %112, %111 : vector<2x256xi1>, vector<2x256xf32>
      %114 = tpu.bitcast %113 : vector<2x256xf32> -> vector<2x256xi32>
      %c0_i32_55 = arith.constant 0 : i32
      %115 = vector.broadcast %c0_i32_55 : i32 to vector<2x1xi32>
      %c1073741824_i32 = arith.constant 1073741824 : i32
      %116 = vector.broadcast %c1073741824_i32 : i32 to vector<2x1xi32>
      %117 = arith.ori %115, %116 : vector<2x1xi32>
      %118 = vector.broadcast %117 : vector<2x1xi32> to vector<2x256xi32>
      %119 = arith.cmpi sge, %114, %118 : vector<2x256xi32>
      %120 = arith.extui %119 : vector<2x256xi1> to vector<2x256xi32>
      %cst_56 = arith.constant dense<0> : vector<2xi32>
      %121 = vector.multi_reduction <add>, %120, %cst_56 [1] : vector<2x256xi32> to vector<2xi32>
      %122 = vector.shape_cast %121 : vector<2xi32> to vector<2x1xi32>
      %123 = arith.cmpi sge, %122, %107 : vector<2x1xi32>
      %124 = arith.select %123, %117, %115 : vector<2x1xi1>, vector<2x1xi32>
      %c0_i32_57 = arith.constant 0 : i32
      %125 = vector.broadcast %c0_i32_57 : i32 to vector<2x1xi32>
      %c268435456_i32 = arith.constant 268435456 : i32
      %126 = vector.broadcast %c268435456_i32 : i32 to vector<2x1xi32>
      %127 = arith.ori %124, %126 : vector<2x1xi32>
      %128 = vector.broadcast %127 : vector<2x1xi32> to vector<2x256xi32>
      %129 = arith.cmpi sge, %114, %128 : vector<2x256xi32>
      %130 = arith.extui %129 : vector<2x256xi1> to vector<2x256xi32>
      %cst_58 = arith.constant dense<0> : vector<2xi32>
      %131 = vector.multi_reduction <add>, %130, %cst_58 [1] : vector<2x256xi32> to vector<2xi32>
      %132 = vector.shape_cast %131 : vector<2xi32> to vector<2x1xi32>
      %133 = arith.cmpi sge, %132, %107 : vector<2x1xi32>
      %134 = arith.extui %133 : vector<2x1xi1> to vector<2x1xi32>
      %135 = arith.addi %125, %134 : vector<2x1xi32>
      %c536870912_i32 = arith.constant 536870912 : i32
      %136 = vector.broadcast %c536870912_i32 : i32 to vector<2x1xi32>
      %137 = arith.ori %124, %136 : vector<2x1xi32>
      %138 = vector.broadcast %137 : vector<2x1xi32> to vector<2x256xi32>
      %139 = arith.cmpi sge, %114, %138 : vector<2x256xi32>
      %140 = arith.extui %139 : vector<2x256xi1> to vector<2x256xi32>
      %cst_59 = arith.constant dense<0> : vector<2xi32>
      %141 = vector.multi_reduction <add>, %140, %cst_59 [1] : vector<2x256xi32> to vector<2xi32>
      %142 = vector.shape_cast %141 : vector<2xi32> to vector<2x1xi32>
      %143 = arith.cmpi sge, %142, %107 : vector<2x1xi32>
      %144 = arith.extui %143 : vector<2x1xi1> to vector<2x1xi32>
      %145 = arith.addi %135, %144 : vector<2x1xi32>
      %c805306368_i32 = arith.constant 805306368 : i32
      %146 = vector.broadcast %c805306368_i32 : i32 to vector<2x1xi32>
      %147 = arith.ori %124, %146 : vector<2x1xi32>
      %148 = vector.broadcast %147 : vector<2x1xi32> to vector<2x256xi32>
      %149 = arith.cmpi sge, %114, %148 : vector<2x256xi32>
      %150 = arith.extui %149 : vector<2x256xi1> to vector<2x256xi32>
      %cst_60 = arith.constant dense<0> : vector<2xi32>
      %151 = vector.multi_reduction <add>, %150, %cst_60 [1] : vector<2x256xi32> to vector<2xi32>
      %152 = vector.shape_cast %151 : vector<2xi32> to vector<2x1xi32>
      %153 = arith.cmpi sge, %152, %107 : vector<2x1xi32>
      %154 = arith.extui %153 : vector<2x1xi1> to vector<2x1xi32>
      %155 = arith.addi %145, %154 : vector<2x1xi32>
      %c28_i32 = arith.constant 28 : i32
      %156 = vector.broadcast %c28_i32 : i32 to vector<2x1xi32>
      %157 = arith.shli %155, %156 : vector<2x1xi32>
      %158 = arith.addi %124, %157 : vector<2x1xi32>
      %c0_i32_61 = arith.constant 0 : i32
      %159 = vector.broadcast %c0_i32_61 : i32 to vector<2x1xi32>
      %c67108864_i32 = arith.constant 67108864 : i32
      %160 = vector.broadcast %c67108864_i32 : i32 to vector<2x1xi32>
      %161 = arith.ori %158, %160 : vector<2x1xi32>
      %162 = vector.broadcast %161 : vector<2x1xi32> to vector<2x256xi32>
      %163 = arith.cmpi sge, %114, %162 : vector<2x256xi32>
      %164 = arith.extui %163 : vector<2x256xi1> to vector<2x256xi32>
      %cst_62 = arith.constant dense<0> : vector<2xi32>
      %165 = vector.multi_reduction <add>, %164, %cst_62 [1] : vector<2x256xi32> to vector<2xi32>
      %166 = vector.shape_cast %165 : vector<2xi32> to vector<2x1xi32>
      %167 = arith.cmpi sge, %166, %107 : vector<2x1xi32>
      %168 = arith.extui %167 : vector<2x1xi1> to vector<2x1xi32>
      %169 = arith.addi %159, %168 : vector<2x1xi32>
      %c134217728_i32 = arith.constant 134217728 : i32
      %170 = vector.broadcast %c134217728_i32 : i32 to vector<2x1xi32>
      %171 = arith.ori %158, %170 : vector<2x1xi32>
      %172 = vector.broadcast %171 : vector<2x1xi32> to vector<2x256xi32>
      %173 = arith.cmpi sge, %114, %172 : vector<2x256xi32>
      %174 = arith.extui %173 : vector<2x256xi1> to vector<2x256xi32>
      %cst_63 = arith.constant dense<0> : vector<2xi32>
      %175 = vector.multi_reduction <add>, %174, %cst_63 [1] : vector<2x256xi32> to vector<2xi32>
      %176 = vector.shape_cast %175 : vector<2xi32> to vector<2x1xi32>
      %177 = arith.cmpi sge, %176, %107 : vector<2x1xi32>
      %178 = arith.extui %177 : vector<2x1xi1> to vector<2x1xi32>
      %179 = arith.addi %169, %178 : vector<2x1xi32>
      %c201326592_i32 = arith.constant 201326592 : i32
      %180 = vector.broadcast %c201326592_i32 : i32 to vector<2x1xi32>
      %181 = arith.ori %158, %180 : vector<2x1xi32>
      %182 = vector.broadcast %181 : vector<2x1xi32> to vector<2x256xi32>
      %183 = arith.cmpi sge, %114, %182 : vector<2x256xi32>
      %184 = arith.extui %183 : vector<2x256xi1> to vector<2x256xi32>
      %cst_64 = arith.constant dense<0> : vector<2xi32>
      %185 = vector.multi_reduction <add>, %184, %cst_64 [1] : vector<2x256xi32> to vector<2xi32>
      %186 = vector.shape_cast %185 : vector<2xi32> to vector<2x1xi32>
      %187 = arith.cmpi sge, %186, %107 : vector<2x1xi32>
      %188 = arith.extui %187 : vector<2x1xi1> to vector<2x1xi32>
      %189 = arith.addi %179, %188 : vector<2x1xi32>
      %c26_i32 = arith.constant 26 : i32
      %190 = vector.broadcast %c26_i32 : i32 to vector<2x1xi32>
      %191 = arith.shli %189, %190 : vector<2x1xi32>
      %192 = arith.addi %158, %191 : vector<2x1xi32>
      %c0_i32_65 = arith.constant 0 : i32
      %193 = vector.broadcast %c0_i32_65 : i32 to vector<2x1xi32>
      %c16777216_i32 = arith.constant 16777216 : i32
      %194 = vector.broadcast %c16777216_i32 : i32 to vector<2x1xi32>
      %195 = arith.ori %192, %194 : vector<2x1xi32>
      %196 = vector.broadcast %195 : vector<2x1xi32> to vector<2x256xi32>
      %197 = arith.cmpi sge, %114, %196 : vector<2x256xi32>
      %198 = arith.extui %197 : vector<2x256xi1> to vector<2x256xi32>
      %cst_66 = arith.constant dense<0> : vector<2xi32>
      %199 = vector.multi_reduction <add>, %198, %cst_66 [1] : vector<2x256xi32> to vector<2xi32>
      %200 = vector.shape_cast %199 : vector<2xi32> to vector<2x1xi32>
      %201 = arith.cmpi sge, %200, %107 : vector<2x1xi32>
      %202 = arith.extui %201 : vector<2x1xi1> to vector<2x1xi32>
      %203 = arith.addi %193, %202 : vector<2x1xi32>
      %c33554432_i32 = arith.constant 33554432 : i32
      %204 = vector.broadcast %c33554432_i32 : i32 to vector<2x1xi32>
      %205 = arith.ori %192, %204 : vector<2x1xi32>
      %206 = vector.broadcast %205 : vector<2x1xi32> to vector<2x256xi32>
      %207 = arith.cmpi sge, %114, %206 : vector<2x256xi32>
      %208 = arith.extui %207 : vector<2x256xi1> to vector<2x256xi32>
      %cst_67 = arith.constant dense<0> : vector<2xi32>
      %209 = vector.multi_reduction <add>, %208, %cst_67 [1] : vector<2x256xi32> to vector<2xi32>
      %210 = vector.shape_cast %209 : vector<2xi32> to vector<2x1xi32>
      %211 = arith.cmpi sge, %210, %107 : vector<2x1xi32>
      %212 = arith.extui %211 : vector<2x1xi1> to vector<2x1xi32>
      %213 = arith.addi %203, %212 : vector<2x1xi32>
      %c50331648_i32 = arith.constant 50331648 : i32
      %214 = vector.broadcast %c50331648_i32 : i32 to vector<2x1xi32>
      %215 = arith.ori %192, %214 : vector<2x1xi32>
      %216 = vector.broadcast %215 : vector<2x1xi32> to vector<2x256xi32>
      %217 = arith.cmpi sge, %114, %216 : vector<2x256xi32>
      %218 = arith.extui %217 : vector<2x256xi1> to vector<2x256xi32>
      %cst_68 = arith.constant dense<0> : vector<2xi32>
      %219 = vector.multi_reduction <add>, %218, %cst_68 [1] : vector<2x256xi32> to vector<2xi32>
      %220 = vector.shape_cast %219 : vector<2xi32> to vector<2x1xi32>
      %221 = arith.cmpi sge, %220, %107 : vector<2x1xi32>
      %222 = arith.extui %221 : vector<2x1xi1> to vector<2x1xi32>
      %223 = arith.addi %213, %222 : vector<2x1xi32>
      %c24_i32 = arith.constant 24 : i32
      %224 = vector.broadcast %c24_i32 : i32 to vector<2x1xi32>
      %225 = arith.shli %223, %224 : vector<2x1xi32>
      %226 = arith.addi %192, %225 : vector<2x1xi32>
      %c0_i32_69 = arith.constant 0 : i32
      %227 = vector.broadcast %c0_i32_69 : i32 to vector<2x1xi32>
      %c4194304_i32 = arith.constant 4194304 : i32
      %228 = vector.broadcast %c4194304_i32 : i32 to vector<2x1xi32>
      %229 = arith.ori %226, %228 : vector<2x1xi32>
      %230 = vector.broadcast %229 : vector<2x1xi32> to vector<2x256xi32>
      %231 = arith.cmpi sge, %114, %230 : vector<2x256xi32>
      %232 = arith.extui %231 : vector<2x256xi1> to vector<2x256xi32>
      %cst_70 = arith.constant dense<0> : vector<2xi32>
      %233 = vector.multi_reduction <add>, %232, %cst_70 [1] : vector<2x256xi32> to vector<2xi32>
      %234 = vector.shape_cast %233 : vector<2xi32> to vector<2x1xi32>
      %235 = arith.cmpi sge, %234, %107 : vector<2x1xi32>
      %236 = arith.extui %235 : vector<2x1xi1> to vector<2x1xi32>
      %237 = arith.addi %227, %236 : vector<2x1xi32>
      %c8388608_i32 = arith.constant 8388608 : i32
      %238 = vector.broadcast %c8388608_i32 : i32 to vector<2x1xi32>
      %239 = arith.ori %226, %238 : vector<2x1xi32>
      %240 = vector.broadcast %239 : vector<2x1xi32> to vector<2x256xi32>
      %241 = arith.cmpi sge, %114, %240 : vector<2x256xi32>
      %242 = arith.extui %241 : vector<2x256xi1> to vector<2x256xi32>
      %cst_71 = arith.constant dense<0> : vector<2xi32>
      %243 = vector.multi_reduction <add>, %242, %cst_71 [1] : vector<2x256xi32> to vector<2xi32>
      %244 = vector.shape_cast %243 : vector<2xi32> to vector<2x1xi32>
      %245 = arith.cmpi sge, %244, %107 : vector<2x1xi32>
      %246 = arith.extui %245 : vector<2x1xi1> to vector<2x1xi32>
      %247 = arith.addi %237, %246 : vector<2x1xi32>
      %c12582912_i32 = arith.constant 12582912 : i32
      %248 = vector.broadcast %c12582912_i32 : i32 to vector<2x1xi32>
      %249 = arith.ori %226, %248 : vector<2x1xi32>
      %250 = vector.broadcast %249 : vector<2x1xi32> to vector<2x256xi32>
      %251 = arith.cmpi sge, %114, %250 : vector<2x256xi32>
      %252 = arith.extui %251 : vector<2x256xi1> to vector<2x256xi32>
      %cst_72 = arith.constant dense<0> : vector<2xi32>
      %253 = vector.multi_reduction <add>, %252, %cst_72 [1] : vector<2x256xi32> to vector<2xi32>
      %254 = vector.shape_cast %253 : vector<2xi32> to vector<2x1xi32>
      %255 = arith.cmpi sge, %254, %107 : vector<2x1xi32>
      %256 = arith.extui %255 : vector<2x1xi1> to vector<2x1xi32>
      %257 = arith.addi %247, %256 : vector<2x1xi32>
      %c22_i32 = arith.constant 22 : i32
      %258 = vector.broadcast %c22_i32 : i32 to vector<2x1xi32>
      %259 = arith.shli %257, %258 : vector<2x1xi32>
      %260 = arith.addi %226, %259 : vector<2x1xi32>
      %c0_i32_73 = arith.constant 0 : i32
      %261 = vector.broadcast %c0_i32_73 : i32 to vector<2x1xi32>
      %c1048576_i32 = arith.constant 1048576 : i32
      %262 = vector.broadcast %c1048576_i32 : i32 to vector<2x1xi32>
      %263 = arith.ori %260, %262 : vector<2x1xi32>
      %264 = vector.broadcast %263 : vector<2x1xi32> to vector<2x256xi32>
      %265 = arith.cmpi sge, %114, %264 : vector<2x256xi32>
      %266 = arith.extui %265 : vector<2x256xi1> to vector<2x256xi32>
      %cst_74 = arith.constant dense<0> : vector<2xi32>
      %267 = vector.multi_reduction <add>, %266, %cst_74 [1] : vector<2x256xi32> to vector<2xi32>
      %268 = vector.shape_cast %267 : vector<2xi32> to vector<2x1xi32>
      %269 = arith.cmpi sge, %268, %107 : vector<2x1xi32>
      %270 = arith.extui %269 : vector<2x1xi1> to vector<2x1xi32>
      %271 = arith.addi %261, %270 : vector<2x1xi32>
      %c2097152_i32 = arith.constant 2097152 : i32
      %272 = vector.broadcast %c2097152_i32 : i32 to vector<2x1xi32>
      %273 = arith.ori %260, %272 : vector<2x1xi32>
      %274 = vector.broadcast %273 : vector<2x1xi32> to vector<2x256xi32>
      %275 = arith.cmpi sge, %114, %274 : vector<2x256xi32>
      %276 = arith.extui %275 : vector<2x256xi1> to vector<2x256xi32>
      %cst_75 = arith.constant dense<0> : vector<2xi32>
      %277 = vector.multi_reduction <add>, %276, %cst_75 [1] : vector<2x256xi32> to vector<2xi32>
      %278 = vector.shape_cast %277 : vector<2xi32> to vector<2x1xi32>
      %279 = arith.cmpi sge, %278, %107 : vector<2x1xi32>
      %280 = arith.extui %279 : vector<2x1xi1> to vector<2x1xi32>
      %281 = arith.addi %271, %280 : vector<2x1xi32>
      %c3145728_i32 = arith.constant 3145728 : i32
      %282 = vector.broadcast %c3145728_i32 : i32 to vector<2x1xi32>
      %283 = arith.ori %260, %282 : vector<2x1xi32>
      %284 = vector.broadcast %283 : vector<2x1xi32> to vector<2x256xi32>
      %285 = arith.cmpi sge, %114, %284 : vector<2x256xi32>
      %286 = arith.extui %285 : vector<2x256xi1> to vector<2x256xi32>
      %cst_76 = arith.constant dense<0> : vector<2xi32>
      %287 = vector.multi_reduction <add>, %286, %cst_76 [1] : vector<2x256xi32> to vector<2xi32>
      %288 = vector.shape_cast %287 : vector<2xi32> to vector<2x1xi32>
      %289 = arith.cmpi sge, %288, %107 : vector<2x1xi32>
      %290 = arith.extui %289 : vector<2x1xi1> to vector<2x1xi32>
      %291 = arith.addi %281, %290 : vector<2x1xi32>
      %c20_i32 = arith.constant 20 : i32
      %292 = vector.broadcast %c20_i32 : i32 to vector<2x1xi32>
      %293 = arith.shli %291, %292 : vector<2x1xi32>
      %294 = arith.addi %260, %293 : vector<2x1xi32>
      %c0_i32_77 = arith.constant 0 : i32
      %295 = vector.broadcast %c0_i32_77 : i32 to vector<2x1xi32>
      %c262144_i32 = arith.constant 262144 : i32
      %296 = vector.broadcast %c262144_i32 : i32 to vector<2x1xi32>
      %297 = arith.ori %294, %296 : vector<2x1xi32>
      %298 = vector.broadcast %297 : vector<2x1xi32> to vector<2x256xi32>
      %299 = arith.cmpi sge, %114, %298 : vector<2x256xi32>
      %300 = arith.extui %299 : vector<2x256xi1> to vector<2x256xi32>
      %cst_78 = arith.constant dense<0> : vector<2xi32>
      %301 = vector.multi_reduction <add>, %300, %cst_78 [1] : vector<2x256xi32> to vector<2xi32>
      %302 = vector.shape_cast %301 : vector<2xi32> to vector<2x1xi32>
      %303 = arith.cmpi sge, %302, %107 : vector<2x1xi32>
      %304 = arith.extui %303 : vector<2x1xi1> to vector<2x1xi32>
      %305 = arith.addi %295, %304 : vector<2x1xi32>
      %c524288_i32 = arith.constant 524288 : i32
      %306 = vector.broadcast %c524288_i32 : i32 to vector<2x1xi32>
      %307 = arith.ori %294, %306 : vector<2x1xi32>
      %308 = vector.broadcast %307 : vector<2x1xi32> to vector<2x256xi32>
      %309 = arith.cmpi sge, %114, %308 : vector<2x256xi32>
      %310 = arith.extui %309 : vector<2x256xi1> to vector<2x256xi32>
      %cst_79 = arith.constant dense<0> : vector<2xi32>
      %311 = vector.multi_reduction <add>, %310, %cst_79 [1] : vector<2x256xi32> to vector<2xi32>
      %312 = vector.shape_cast %311 : vector<2xi32> to vector<2x1xi32>
      %313 = arith.cmpi sge, %312, %107 : vector<2x1xi32>
      %314 = arith.extui %313 : vector<2x1xi1> to vector<2x1xi32>
      %315 = arith.addi %305, %314 : vector<2x1xi32>
      %c786432_i32 = arith.constant 786432 : i32
      %316 = vector.broadcast %c786432_i32 : i32 to vector<2x1xi32>
      %317 = arith.ori %294, %316 : vector<2x1xi32>
      %318 = vector.broadcast %317 : vector<2x1xi32> to vector<2x256xi32>
      %319 = arith.cmpi sge, %114, %318 : vector<2x256xi32>
      %320 = arith.extui %319 : vector<2x256xi1> to vector<2x256xi32>
      %cst_80 = arith.constant dense<0> : vector<2xi32>
      %321 = vector.multi_reduction <add>, %320, %cst_80 [1] : vector<2x256xi32> to vector<2xi32>
      %322 = vector.shape_cast %321 : vector<2xi32> to vector<2x1xi32>
      %323 = arith.cmpi sge, %322, %107 : vector<2x1xi32>
      %324 = arith.extui %323 : vector<2x1xi1> to vector<2x1xi32>
      %325 = arith.addi %315, %324 : vector<2x1xi32>
      %c18_i32 = arith.constant 18 : i32
      %326 = vector.broadcast %c18_i32 : i32 to vector<2x1xi32>
      %327 = arith.shli %325, %326 : vector<2x1xi32>
      %328 = arith.addi %294, %327 : vector<2x1xi32>
      %c0_i32_81 = arith.constant 0 : i32
      %329 = vector.broadcast %c0_i32_81 : i32 to vector<2x1xi32>
      %c65536_i32 = arith.constant 65536 : i32
      %330 = vector.broadcast %c65536_i32 : i32 to vector<2x1xi32>
      %331 = arith.ori %328, %330 : vector<2x1xi32>
      %332 = vector.broadcast %331 : vector<2x1xi32> to vector<2x256xi32>
      %333 = arith.cmpi sge, %114, %332 : vector<2x256xi32>
      %334 = arith.extui %333 : vector<2x256xi1> to vector<2x256xi32>
      %cst_82 = arith.constant dense<0> : vector<2xi32>
      %335 = vector.multi_reduction <add>, %334, %cst_82 [1] : vector<2x256xi32> to vector<2xi32>
      %336 = vector.shape_cast %335 : vector<2xi32> to vector<2x1xi32>
      %337 = arith.cmpi sge, %336, %107 : vector<2x1xi32>
      %338 = arith.extui %337 : vector<2x1xi1> to vector<2x1xi32>
      %339 = arith.addi %329, %338 : vector<2x1xi32>
      %c131072_i32 = arith.constant 131072 : i32
      %340 = vector.broadcast %c131072_i32 : i32 to vector<2x1xi32>
      %341 = arith.ori %328, %340 : vector<2x1xi32>
      %342 = vector.broadcast %341 : vector<2x1xi32> to vector<2x256xi32>
      %343 = arith.cmpi sge, %114, %342 : vector<2x256xi32>
      %344 = arith.extui %343 : vector<2x256xi1> to vector<2x256xi32>
      %cst_83 = arith.constant dense<0> : vector<2xi32>
      %345 = vector.multi_reduction <add>, %344, %cst_83 [1] : vector<2x256xi32> to vector<2xi32>
      %346 = vector.shape_cast %345 : vector<2xi32> to vector<2x1xi32>
      %347 = arith.cmpi sge, %346, %107 : vector<2x1xi32>
      %348 = arith.extui %347 : vector<2x1xi1> to vector<2x1xi32>
      %349 = arith.addi %339, %348 : vector<2x1xi32>
      %c196608_i32 = arith.constant 196608 : i32
      %350 = vector.broadcast %c196608_i32 : i32 to vector<2x1xi32>
      %351 = arith.ori %328, %350 : vector<2x1xi32>
      %352 = vector.broadcast %351 : vector<2x1xi32> to vector<2x256xi32>
      %353 = arith.cmpi sge, %114, %352 : vector<2x256xi32>
      %354 = arith.extui %353 : vector<2x256xi1> to vector<2x256xi32>
      %cst_84 = arith.constant dense<0> : vector<2xi32>
      %355 = vector.multi_reduction <add>, %354, %cst_84 [1] : vector<2x256xi32> to vector<2xi32>
      %356 = vector.shape_cast %355 : vector<2xi32> to vector<2x1xi32>
      %357 = arith.cmpi sge, %356, %107 : vector<2x1xi32>
      %358 = arith.extui %357 : vector<2x1xi1> to vector<2x1xi32>
      %359 = arith.addi %349, %358 : vector<2x1xi32>
      %c16_i32 = arith.constant 16 : i32
      %360 = vector.broadcast %c16_i32 : i32 to vector<2x1xi32>
      %361 = arith.shli %359, %360 : vector<2x1xi32>
      %362 = arith.addi %328, %361 : vector<2x1xi32>
      %c0_i32_85 = arith.constant 0 : i32
      %363 = vector.broadcast %c0_i32_85 : i32 to vector<2x1xi32>
      %c16384_i32 = arith.constant 16384 : i32
      %364 = vector.broadcast %c16384_i32 : i32 to vector<2x1xi32>
      %365 = arith.ori %362, %364 : vector<2x1xi32>
      %366 = vector.broadcast %365 : vector<2x1xi32> to vector<2x256xi32>
      %367 = arith.cmpi sge, %114, %366 : vector<2x256xi32>
      %368 = arith.extui %367 : vector<2x256xi1> to vector<2x256xi32>
      %cst_86 = arith.constant dense<0> : vector<2xi32>
      %369 = vector.multi_reduction <add>, %368, %cst_86 [1] : vector<2x256xi32> to vector<2xi32>
      %370 = vector.shape_cast %369 : vector<2xi32> to vector<2x1xi32>
      %371 = arith.cmpi sge, %370, %107 : vector<2x1xi32>
      %372 = arith.extui %371 : vector<2x1xi1> to vector<2x1xi32>
      %373 = arith.addi %363, %372 : vector<2x1xi32>
      %c32768_i32 = arith.constant 32768 : i32
      %374 = vector.broadcast %c32768_i32 : i32 to vector<2x1xi32>
      %375 = arith.ori %362, %374 : vector<2x1xi32>
      %376 = vector.broadcast %375 : vector<2x1xi32> to vector<2x256xi32>
      %377 = arith.cmpi sge, %114, %376 : vector<2x256xi32>
      %378 = arith.extui %377 : vector<2x256xi1> to vector<2x256xi32>
      %cst_87 = arith.constant dense<0> : vector<2xi32>
      %379 = vector.multi_reduction <add>, %378, %cst_87 [1] : vector<2x256xi32> to vector<2xi32>
      %380 = vector.shape_cast %379 : vector<2xi32> to vector<2x1xi32>
      %381 = arith.cmpi sge, %380, %107 : vector<2x1xi32>
      %382 = arith.extui %381 : vector<2x1xi1> to vector<2x1xi32>
      %383 = arith.addi %373, %382 : vector<2x1xi32>
      %c49152_i32 = arith.constant 49152 : i32
      %384 = vector.broadcast %c49152_i32 : i32 to vector<2x1xi32>
      %385 = arith.ori %362, %384 : vector<2x1xi32>
      %386 = vector.broadcast %385 : vector<2x1xi32> to vector<2x256xi32>
      %387 = arith.cmpi sge, %114, %386 : vector<2x256xi32>
      %388 = arith.extui %387 : vector<2x256xi1> to vector<2x256xi32>
      %cst_88 = arith.constant dense<0> : vector<2xi32>
      %389 = vector.multi_reduction <add>, %388, %cst_88 [1] : vector<2x256xi32> to vector<2xi32>
      %390 = vector.shape_cast %389 : vector<2xi32> to vector<2x1xi32>
      %391 = arith.cmpi sge, %390, %107 : vector<2x1xi32>
      %392 = arith.extui %391 : vector<2x1xi1> to vector<2x1xi32>
      %393 = arith.addi %383, %392 : vector<2x1xi32>
      %c14_i32 = arith.constant 14 : i32
      %394 = vector.broadcast %c14_i32 : i32 to vector<2x1xi32>
      %395 = arith.shli %393, %394 : vector<2x1xi32>
      %396 = arith.addi %362, %395 : vector<2x1xi32>
      %c0_i32_89 = arith.constant 0 : i32
      %397 = vector.broadcast %c0_i32_89 : i32 to vector<2x1xi32>
      %c4096_i32 = arith.constant 4096 : i32
      %398 = vector.broadcast %c4096_i32 : i32 to vector<2x1xi32>
      %399 = arith.ori %396, %398 : vector<2x1xi32>
      %400 = vector.broadcast %399 : vector<2x1xi32> to vector<2x256xi32>
      %401 = arith.cmpi sge, %114, %400 : vector<2x256xi32>
      %402 = arith.extui %401 : vector<2x256xi1> to vector<2x256xi32>
      %cst_90 = arith.constant dense<0> : vector<2xi32>
      %403 = vector.multi_reduction <add>, %402, %cst_90 [1] : vector<2x256xi32> to vector<2xi32>
      %404 = vector.shape_cast %403 : vector<2xi32> to vector<2x1xi32>
      %405 = arith.cmpi sge, %404, %107 : vector<2x1xi32>
      %406 = arith.extui %405 : vector<2x1xi1> to vector<2x1xi32>
      %407 = arith.addi %397, %406 : vector<2x1xi32>
      %c8192_i32 = arith.constant 8192 : i32
      %408 = vector.broadcast %c8192_i32 : i32 to vector<2x1xi32>
      %409 = arith.ori %396, %408 : vector<2x1xi32>
      %410 = vector.broadcast %409 : vector<2x1xi32> to vector<2x256xi32>
      %411 = arith.cmpi sge, %114, %410 : vector<2x256xi32>
      %412 = arith.extui %411 : vector<2x256xi1> to vector<2x256xi32>
      %cst_91 = arith.constant dense<0> : vector<2xi32>
      %413 = vector.multi_reduction <add>, %412, %cst_91 [1] : vector<2x256xi32> to vector<2xi32>
      %414 = vector.shape_cast %413 : vector<2xi32> to vector<2x1xi32>
      %415 = arith.cmpi sge, %414, %107 : vector<2x1xi32>
      %416 = arith.extui %415 : vector<2x1xi1> to vector<2x1xi32>
      %417 = arith.addi %407, %416 : vector<2x1xi32>
      %c12288_i32 = arith.constant 12288 : i32
      %418 = vector.broadcast %c12288_i32 : i32 to vector<2x1xi32>
      %419 = arith.ori %396, %418 : vector<2x1xi32>
      %420 = vector.broadcast %419 : vector<2x1xi32> to vector<2x256xi32>
      %421 = arith.cmpi sge, %114, %420 : vector<2x256xi32>
      %422 = arith.extui %421 : vector<2x256xi1> to vector<2x256xi32>
      %cst_92 = arith.constant dense<0> : vector<2xi32>
      %423 = vector.multi_reduction <add>, %422, %cst_92 [1] : vector<2x256xi32> to vector<2xi32>
      %424 = vector.shape_cast %423 : vector<2xi32> to vector<2x1xi32>
      %425 = arith.cmpi sge, %424, %107 : vector<2x1xi32>
      %426 = arith.extui %425 : vector<2x1xi1> to vector<2x1xi32>
      %427 = arith.addi %417, %426 : vector<2x1xi32>
      %c12_i32 = arith.constant 12 : i32
      %428 = vector.broadcast %c12_i32 : i32 to vector<2x1xi32>
      %429 = arith.shli %427, %428 : vector<2x1xi32>
      %430 = arith.addi %396, %429 : vector<2x1xi32>
      %c0_i32_93 = arith.constant 0 : i32
      %431 = vector.broadcast %c0_i32_93 : i32 to vector<2x1xi32>
      %c1024_i32 = arith.constant 1024 : i32
      %432 = vector.broadcast %c1024_i32 : i32 to vector<2x1xi32>
      %433 = arith.ori %430, %432 : vector<2x1xi32>
      %434 = vector.broadcast %433 : vector<2x1xi32> to vector<2x256xi32>
      %435 = arith.cmpi sge, %114, %434 : vector<2x256xi32>
      %436 = arith.extui %435 : vector<2x256xi1> to vector<2x256xi32>
      %cst_94 = arith.constant dense<0> : vector<2xi32>
      %437 = vector.multi_reduction <add>, %436, %cst_94 [1] : vector<2x256xi32> to vector<2xi32>
      %438 = vector.shape_cast %437 : vector<2xi32> to vector<2x1xi32>
      %439 = arith.cmpi sge, %438, %107 : vector<2x1xi32>
      %440 = arith.extui %439 : vector<2x1xi1> to vector<2x1xi32>
      %441 = arith.addi %431, %440 : vector<2x1xi32>
      %c2048_i32 = arith.constant 2048 : i32
      %442 = vector.broadcast %c2048_i32 : i32 to vector<2x1xi32>
      %443 = arith.ori %430, %442 : vector<2x1xi32>
      %444 = vector.broadcast %443 : vector<2x1xi32> to vector<2x256xi32>
      %445 = arith.cmpi sge, %114, %444 : vector<2x256xi32>
      %446 = arith.extui %445 : vector<2x256xi1> to vector<2x256xi32>
      %cst_95 = arith.constant dense<0> : vector<2xi32>
      %447 = vector.multi_reduction <add>, %446, %cst_95 [1] : vector<2x256xi32> to vector<2xi32>
      %448 = vector.shape_cast %447 : vector<2xi32> to vector<2x1xi32>
      %449 = arith.cmpi sge, %448, %107 : vector<2x1xi32>
      %450 = arith.extui %449 : vector<2x1xi1> to vector<2x1xi32>
      %451 = arith.addi %441, %450 : vector<2x1xi32>
      %c3072_i32 = arith.constant 3072 : i32
      %452 = vector.broadcast %c3072_i32 : i32 to vector<2x1xi32>
      %453 = arith.ori %430, %452 : vector<2x1xi32>
      %454 = vector.broadcast %453 : vector<2x1xi32> to vector<2x256xi32>
      %455 = arith.cmpi sge, %114, %454 : vector<2x256xi32>
      %456 = arith.extui %455 : vector<2x256xi1> to vector<2x256xi32>
      %cst_96 = arith.constant dense<0> : vector<2xi32>
      %457 = vector.multi_reduction <add>, %456, %cst_96 [1] : vector<2x256xi32> to vector<2xi32>
      %458 = vector.shape_cast %457 : vector<2xi32> to vector<2x1xi32>
      %459 = arith.cmpi sge, %458, %107 : vector<2x1xi32>
      %460 = arith.extui %459 : vector<2x1xi1> to vector<2x1xi32>
      %461 = arith.addi %451, %460 : vector<2x1xi32>
      %c10_i32 = arith.constant 10 : i32
      %462 = vector.broadcast %c10_i32 : i32 to vector<2x1xi32>
      %463 = arith.shli %461, %462 : vector<2x1xi32>
      %464 = arith.addi %430, %463 : vector<2x1xi32>
      %c0_i32_97 = arith.constant 0 : i32
      %465 = vector.broadcast %c0_i32_97 : i32 to vector<2x1xi32>
      %c256_i32_98 = arith.constant 256 : i32
      %466 = vector.broadcast %c256_i32_98 : i32 to vector<2x1xi32>
      %467 = arith.ori %464, %466 : vector<2x1xi32>
      %468 = vector.broadcast %467 : vector<2x1xi32> to vector<2x256xi32>
      %469 = arith.cmpi sge, %114, %468 : vector<2x256xi32>
      %470 = arith.extui %469 : vector<2x256xi1> to vector<2x256xi32>
      %cst_99 = arith.constant dense<0> : vector<2xi32>
      %471 = vector.multi_reduction <add>, %470, %cst_99 [1] : vector<2x256xi32> to vector<2xi32>
      %472 = vector.shape_cast %471 : vector<2xi32> to vector<2x1xi32>
      %473 = arith.cmpi sge, %472, %107 : vector<2x1xi32>
      %474 = arith.extui %473 : vector<2x1xi1> to vector<2x1xi32>
      %475 = arith.addi %465, %474 : vector<2x1xi32>
      %c512_i32 = arith.constant 512 : i32
      %476 = vector.broadcast %c512_i32 : i32 to vector<2x1xi32>
      %477 = arith.ori %464, %476 : vector<2x1xi32>
      %478 = vector.broadcast %477 : vector<2x1xi32> to vector<2x256xi32>
      %479 = arith.cmpi sge, %114, %478 : vector<2x256xi32>
      %480 = arith.extui %479 : vector<2x256xi1> to vector<2x256xi32>
      %cst_100 = arith.constant dense<0> : vector<2xi32>
      %481 = vector.multi_reduction <add>, %480, %cst_100 [1] : vector<2x256xi32> to vector<2xi32>
      %482 = vector.shape_cast %481 : vector<2xi32> to vector<2x1xi32>
      %483 = arith.cmpi sge, %482, %107 : vector<2x1xi32>
      %484 = arith.extui %483 : vector<2x1xi1> to vector<2x1xi32>
      %485 = arith.addi %475, %484 : vector<2x1xi32>
      %c768_i32 = arith.constant 768 : i32
      %486 = vector.broadcast %c768_i32 : i32 to vector<2x1xi32>
      %487 = arith.ori %464, %486 : vector<2x1xi32>
      %488 = vector.broadcast %487 : vector<2x1xi32> to vector<2x256xi32>
      %489 = arith.cmpi sge, %114, %488 : vector<2x256xi32>
      %490 = arith.extui %489 : vector<2x256xi1> to vector<2x256xi32>
      %cst_101 = arith.constant dense<0> : vector<2xi32>
      %491 = vector.multi_reduction <add>, %490, %cst_101 [1] : vector<2x256xi32> to vector<2xi32>
      %492 = vector.shape_cast %491 : vector<2xi32> to vector<2x1xi32>
      %493 = arith.cmpi sge, %492, %107 : vector<2x1xi32>
      %494 = arith.extui %493 : vector<2x1xi1> to vector<2x1xi32>
      %495 = arith.addi %485, %494 : vector<2x1xi32>
      %c8_i32_102 = arith.constant 8 : i32
      %496 = vector.broadcast %c8_i32_102 : i32 to vector<2x1xi32>
      %497 = arith.shli %495, %496 : vector<2x1xi32>
      %498 = arith.addi %464, %497 : vector<2x1xi32>
      %c0_i32_103 = arith.constant 0 : i32
      %499 = vector.broadcast %c0_i32_103 : i32 to vector<2x1xi32>
      %c64_i32 = arith.constant 64 : i32
      %500 = vector.broadcast %c64_i32 : i32 to vector<2x1xi32>
      %501 = arith.ori %498, %500 : vector<2x1xi32>
      %502 = vector.broadcast %501 : vector<2x1xi32> to vector<2x256xi32>
      %503 = arith.cmpi sge, %114, %502 : vector<2x256xi32>
      %504 = arith.extui %503 : vector<2x256xi1> to vector<2x256xi32>
      %cst_104 = arith.constant dense<0> : vector<2xi32>
      %505 = vector.multi_reduction <add>, %504, %cst_104 [1] : vector<2x256xi32> to vector<2xi32>
      %506 = vector.shape_cast %505 : vector<2xi32> to vector<2x1xi32>
      %507 = arith.cmpi sge, %506, %107 : vector<2x1xi32>
      %508 = arith.extui %507 : vector<2x1xi1> to vector<2x1xi32>
      %509 = arith.addi %499, %508 : vector<2x1xi32>
      %c128_i32 = arith.constant 128 : i32
      %510 = vector.broadcast %c128_i32 : i32 to vector<2x1xi32>
      %511 = arith.ori %498, %510 : vector<2x1xi32>
      %512 = vector.broadcast %511 : vector<2x1xi32> to vector<2x256xi32>
      %513 = arith.cmpi sge, %114, %512 : vector<2x256xi32>
      %514 = arith.extui %513 : vector<2x256xi1> to vector<2x256xi32>
      %cst_105 = arith.constant dense<0> : vector<2xi32>
      %515 = vector.multi_reduction <add>, %514, %cst_105 [1] : vector<2x256xi32> to vector<2xi32>
      %516 = vector.shape_cast %515 : vector<2xi32> to vector<2x1xi32>
      %517 = arith.cmpi sge, %516, %107 : vector<2x1xi32>
      %518 = arith.extui %517 : vector<2x1xi1> to vector<2x1xi32>
      %519 = arith.addi %509, %518 : vector<2x1xi32>
      %c192_i32 = arith.constant 192 : i32
      %520 = vector.broadcast %c192_i32 : i32 to vector<2x1xi32>
      %521 = arith.ori %498, %520 : vector<2x1xi32>
      %522 = vector.broadcast %521 : vector<2x1xi32> to vector<2x256xi32>
      %523 = arith.cmpi sge, %114, %522 : vector<2x256xi32>
      %524 = arith.extui %523 : vector<2x256xi1> to vector<2x256xi32>
      %cst_106 = arith.constant dense<0> : vector<2xi32>
      %525 = vector.multi_reduction <add>, %524, %cst_106 [1] : vector<2x256xi32> to vector<2xi32>
      %526 = vector.shape_cast %525 : vector<2xi32> to vector<2x1xi32>
      %527 = arith.cmpi sge, %526, %107 : vector<2x1xi32>
      %528 = arith.extui %527 : vector<2x1xi1> to vector<2x1xi32>
      %529 = arith.addi %519, %528 : vector<2x1xi32>
      %c6_i32 = arith.constant 6 : i32
      %530 = vector.broadcast %c6_i32 : i32 to vector<2x1xi32>
      %531 = arith.shli %529, %530 : vector<2x1xi32>
      %532 = arith.addi %498, %531 : vector<2x1xi32>
      %c0_i32_107 = arith.constant 0 : i32
      %533 = vector.broadcast %c0_i32_107 : i32 to vector<2x1xi32>
      %c16_i32_108 = arith.constant 16 : i32
      %534 = vector.broadcast %c16_i32_108 : i32 to vector<2x1xi32>
      %535 = arith.ori %532, %534 : vector<2x1xi32>
      %536 = vector.broadcast %535 : vector<2x1xi32> to vector<2x256xi32>
      %537 = arith.cmpi sge, %114, %536 : vector<2x256xi32>
      %538 = arith.extui %537 : vector<2x256xi1> to vector<2x256xi32>
      %cst_109 = arith.constant dense<0> : vector<2xi32>
      %539 = vector.multi_reduction <add>, %538, %cst_109 [1] : vector<2x256xi32> to vector<2xi32>
      %540 = vector.shape_cast %539 : vector<2xi32> to vector<2x1xi32>
      %541 = arith.cmpi sge, %540, %107 : vector<2x1xi32>
      %542 = arith.extui %541 : vector<2x1xi1> to vector<2x1xi32>
      %543 = arith.addi %533, %542 : vector<2x1xi32>
      %c32_i32 = arith.constant 32 : i32
      %544 = vector.broadcast %c32_i32 : i32 to vector<2x1xi32>
      %545 = arith.ori %532, %544 : vector<2x1xi32>
      %546 = vector.broadcast %545 : vector<2x1xi32> to vector<2x256xi32>
      %547 = arith.cmpi sge, %114, %546 : vector<2x256xi32>
      %548 = arith.extui %547 : vector<2x256xi1> to vector<2x256xi32>
      %cst_110 = arith.constant dense<0> : vector<2xi32>
      %549 = vector.multi_reduction <add>, %548, %cst_110 [1] : vector<2x256xi32> to vector<2xi32>
      %550 = vector.shape_cast %549 : vector<2xi32> to vector<2x1xi32>
      %551 = arith.cmpi sge, %550, %107 : vector<2x1xi32>
      %552 = arith.extui %551 : vector<2x1xi1> to vector<2x1xi32>
      %553 = arith.addi %543, %552 : vector<2x1xi32>
      %c48_i32 = arith.constant 48 : i32
      %554 = vector.broadcast %c48_i32 : i32 to vector<2x1xi32>
      %555 = arith.ori %532, %554 : vector<2x1xi32>
      %556 = vector.broadcast %555 : vector<2x1xi32> to vector<2x256xi32>
      %557 = arith.cmpi sge, %114, %556 : vector<2x256xi32>
      %558 = arith.extui %557 : vector<2x256xi1> to vector<2x256xi32>
      %cst_111 = arith.constant dense<0> : vector<2xi32>
      %559 = vector.multi_reduction <add>, %558, %cst_111 [1] : vector<2x256xi32> to vector<2xi32>
      %560 = vector.shape_cast %559 : vector<2xi32> to vector<2x1xi32>
      %561 = arith.cmpi sge, %560, %107 : vector<2x1xi32>
      %562 = arith.extui %561 : vector<2x1xi1> to vector<2x1xi32>
      %563 = arith.addi %553, %562 : vector<2x1xi32>
      %c4_i32 = arith.constant 4 : i32
      %564 = vector.broadcast %c4_i32 : i32 to vector<2x1xi32>
      %565 = arith.shli %563, %564 : vector<2x1xi32>
      %566 = arith.addi %532, %565 : vector<2x1xi32>
      %c0_i32_112 = arith.constant 0 : i32
      %567 = vector.broadcast %c0_i32_112 : i32 to vector<2x1xi32>
      %c4_i32_113 = arith.constant 4 : i32
      %568 = vector.broadcast %c4_i32_113 : i32 to vector<2x1xi32>
      %569 = arith.ori %566, %568 : vector<2x1xi32>
      %570 = vector.broadcast %569 : vector<2x1xi32> to vector<2x256xi32>
      %571 = arith.cmpi sge, %114, %570 : vector<2x256xi32>
      %572 = arith.extui %571 : vector<2x256xi1> to vector<2x256xi32>
      %cst_114 = arith.constant dense<0> : vector<2xi32>
      %573 = vector.multi_reduction <add>, %572, %cst_114 [1] : vector<2x256xi32> to vector<2xi32>
      %574 = vector.shape_cast %573 : vector<2xi32> to vector<2x1xi32>
      %575 = arith.cmpi sge, %574, %107 : vector<2x1xi32>
      %576 = arith.extui %575 : vector<2x1xi1> to vector<2x1xi32>
      %577 = arith.addi %567, %576 : vector<2x1xi32>
      %c8_i32_115 = arith.constant 8 : i32
      %578 = vector.broadcast %c8_i32_115 : i32 to vector<2x1xi32>
      %579 = arith.ori %566, %578 : vector<2x1xi32>
      %580 = vector.broadcast %579 : vector<2x1xi32> to vector<2x256xi32>
      %581 = arith.cmpi sge, %114, %580 : vector<2x256xi32>
      %582 = arith.extui %581 : vector<2x256xi1> to vector<2x256xi32>
      %cst_116 = arith.constant dense<0> : vector<2xi32>
      %583 = vector.multi_reduction <add>, %582, %cst_116 [1] : vector<2x256xi32> to vector<2xi32>
      %584 = vector.shape_cast %583 : vector<2xi32> to vector<2x1xi32>
      %585 = arith.cmpi sge, %584, %107 : vector<2x1xi32>
      %586 = arith.extui %585 : vector<2x1xi1> to vector<2x1xi32>
      %587 = arith.addi %577, %586 : vector<2x1xi32>
      %c12_i32_117 = arith.constant 12 : i32
      %588 = vector.broadcast %c12_i32_117 : i32 to vector<2x1xi32>
      %589 = arith.ori %566, %588 : vector<2x1xi32>
      %590 = vector.broadcast %589 : vector<2x1xi32> to vector<2x256xi32>
      %591 = arith.cmpi sge, %114, %590 : vector<2x256xi32>
      %592 = arith.extui %591 : vector<2x256xi1> to vector<2x256xi32>
      %cst_118 = arith.constant dense<0> : vector<2xi32>
      %593 = vector.multi_reduction <add>, %592, %cst_118 [1] : vector<2x256xi32> to vector<2xi32>
      %594 = vector.shape_cast %593 : vector<2xi32> to vector<2x1xi32>
      %595 = arith.cmpi sge, %594, %107 : vector<2x1xi32>
      %596 = arith.extui %595 : vector<2x1xi1> to vector<2x1xi32>
      %597 = arith.addi %587, %596 : vector<2x1xi32>
      %c2_i32 = arith.constant 2 : i32
      %598 = vector.broadcast %c2_i32 : i32 to vector<2x1xi32>
      %599 = arith.shli %597, %598 : vector<2x1xi32>
      %600 = arith.addi %566, %599 : vector<2x1xi32>
      %c0_i32_119 = arith.constant 0 : i32
      %601 = vector.broadcast %c0_i32_119 : i32 to vector<2x1xi32>
      %c1_i32 = arith.constant 1 : i32
      %602 = vector.broadcast %c1_i32 : i32 to vector<2x1xi32>
      %603 = arith.ori %600, %602 : vector<2x1xi32>
      %604 = vector.broadcast %603 : vector<2x1xi32> to vector<2x256xi32>
      %605 = arith.cmpi sge, %114, %604 : vector<2x256xi32>
      %606 = arith.extui %605 : vector<2x256xi1> to vector<2x256xi32>
      %cst_120 = arith.constant dense<0> : vector<2xi32>
      %607 = vector.multi_reduction <add>, %606, %cst_120 [1] : vector<2x256xi32> to vector<2xi32>
      %608 = vector.shape_cast %607 : vector<2xi32> to vector<2x1xi32>
      %609 = arith.cmpi sge, %608, %107 : vector<2x1xi32>
      %610 = arith.extui %609 : vector<2x1xi1> to vector<2x1xi32>
      %611 = arith.addi %601, %610 : vector<2x1xi32>
      %c2_i32_121 = arith.constant 2 : i32
      %612 = vector.broadcast %c2_i32_121 : i32 to vector<2x1xi32>
      %613 = arith.ori %600, %612 : vector<2x1xi32>
      %614 = vector.broadcast %613 : vector<2x1xi32> to vector<2x256xi32>
      %615 = arith.cmpi sge, %114, %614 : vector<2x256xi32>
      %616 = arith.extui %615 : vector<2x256xi1> to vector<2x256xi32>
      %cst_122 = arith.constant dense<0> : vector<2xi32>
      %617 = vector.multi_reduction <add>, %616, %cst_122 [1] : vector<2x256xi32> to vector<2xi32>
      %618 = vector.shape_cast %617 : vector<2xi32> to vector<2x1xi32>
      %619 = arith.cmpi sge, %618, %107 : vector<2x1xi32>
      %620 = arith.extui %619 : vector<2x1xi1> to vector<2x1xi32>
      %621 = arith.addi %611, %620 : vector<2x1xi32>
      %c3_i32_123 = arith.constant 3 : i32
      %622 = vector.broadcast %c3_i32_123 : i32 to vector<2x1xi32>
      %623 = arith.ori %600, %622 : vector<2x1xi32>
      %624 = vector.broadcast %623 : vector<2x1xi32> to vector<2x256xi32>
      %625 = arith.cmpi sge, %114, %624 : vector<2x256xi32>
      %626 = arith.extui %625 : vector<2x256xi1> to vector<2x256xi32>
      %cst_124 = arith.constant dense<0> : vector<2xi32>
      %627 = vector.multi_reduction <add>, %626, %cst_124 [1] : vector<2x256xi32> to vector<2xi32>
      %628 = vector.shape_cast %627 : vector<2xi32> to vector<2x1xi32>
      %629 = arith.cmpi sge, %628, %107 : vector<2x1xi32>
      %630 = arith.extui %629 : vector<2x1xi1> to vector<2x1xi32>
      %631 = arith.addi %621, %630 : vector<2x1xi32>
      %c0_i32_125 = arith.constant 0 : i32
      %632 = vector.broadcast %c0_i32_125 : i32 to vector<2x1xi32>
      %633 = arith.shli %631, %632 : vector<2x1xi32>
      %634 = arith.addi %600, %633 : vector<2x1xi32>
      %635 = vector.broadcast %634 : vector<2x1xi32> to vector<2x256xi32>
      %636 = arith.cmpi sgt, %114, %635 : vector<2x256xi32>
      %637 = vector.broadcast %634 : vector<2x1xi32> to vector<2x256xi32>
      %638 = arith.cmpi eq, %114, %637 : vector<2x256xi32>
      %639 = arith.extui %636 : vector<2x256xi1> to vector<2x256xi32>
      %cst_126 = arith.constant dense<0> : vector<2xi32>
      %640 = vector.multi_reduction <add>, %639, %cst_126 [1] : vector<2x256xi32> to vector<2xi32>
      %641 = vector.shape_cast %640 : vector<2xi32> to vector<2x1xi32>
      %642 = arith.subi %107, %641 : vector<2x1xi32>
      %c0_i32_127 = arith.constant 0 : i32
      %643 = vector.broadcast %c0_i32_127 : i32 to vector<2x1xi32>
      %c0_i32_128 = arith.constant 0 : i32
      %644 = vector.broadcast %c0_i32_128 : i32 to vector<2x1xi32>
      %c64_i32_129 = arith.constant 64 : i32
      %645 = vector.broadcast %c64_i32_129 : i32 to vector<2x1xi32>
      %646 = arith.ori %643, %645 : vector<2x1xi32>
      %647 = vector.broadcast %646 : vector<2x1xi32> to vector<2x256xi32>
      %648 = arith.cmpi slt, %39, %647 : vector<2x256xi32>
      %649 = arith.andi %638, %648 : vector<2x256xi1>
      %650 = arith.extui %649 : vector<2x256xi1> to vector<2x256xi32>
      %cst_130 = arith.constant dense<0> : vector<2xi32>
      %651 = vector.multi_reduction <add>, %650, %cst_130 [1] : vector<2x256xi32> to vector<2xi32>
      %652 = vector.shape_cast %651 : vector<2xi32> to vector<2x1xi32>
      %653 = arith.cmpi slt, %652, %642 : vector<2x1xi32>
      %654 = arith.extui %653 : vector<2x1xi1> to vector<2x1xi32>
      %655 = arith.addi %644, %654 : vector<2x1xi32>
      %c128_i32_131 = arith.constant 128 : i32
      %656 = vector.broadcast %c128_i32_131 : i32 to vector<2x1xi32>
      %657 = arith.ori %643, %656 : vector<2x1xi32>
      %658 = vector.broadcast %657 : vector<2x1xi32> to vector<2x256xi32>
      %659 = arith.cmpi slt, %39, %658 : vector<2x256xi32>
      %660 = arith.andi %638, %659 : vector<2x256xi1>
      %661 = arith.extui %660 : vector<2x256xi1> to vector<2x256xi32>
      %cst_132 = arith.constant dense<0> : vector<2xi32>
      %662 = vector.multi_reduction <add>, %661, %cst_132 [1] : vector<2x256xi32> to vector<2xi32>
      %663 = vector.shape_cast %662 : vector<2xi32> to vector<2x1xi32>
      %664 = arith.cmpi slt, %663, %642 : vector<2x1xi32>
      %665 = arith.extui %664 : vector<2x1xi1> to vector<2x1xi32>
      %666 = arith.addi %655, %665 : vector<2x1xi32>
      %c192_i32_133 = arith.constant 192 : i32
      %667 = vector.broadcast %c192_i32_133 : i32 to vector<2x1xi32>
      %668 = arith.ori %643, %667 : vector<2x1xi32>
      %669 = vector.broadcast %668 : vector<2x1xi32> to vector<2x256xi32>
      %670 = arith.cmpi slt, %39, %669 : vector<2x256xi32>
      %671 = arith.andi %638, %670 : vector<2x256xi1>
      %672 = arith.extui %671 : vector<2x256xi1> to vector<2x256xi32>
      %cst_134 = arith.constant dense<0> : vector<2xi32>
      %673 = vector.multi_reduction <add>, %672, %cst_134 [1] : vector<2x256xi32> to vector<2xi32>
      %674 = vector.shape_cast %673 : vector<2xi32> to vector<2x1xi32>
      %675 = arith.cmpi slt, %674, %642 : vector<2x1xi32>
      %676 = arith.extui %675 : vector<2x1xi1> to vector<2x1xi32>
      %677 = arith.addi %666, %676 : vector<2x1xi32>
      %c6_i32_135 = arith.constant 6 : i32
      %678 = vector.broadcast %c6_i32_135 : i32 to vector<2x1xi32>
      %679 = arith.shli %677, %678 : vector<2x1xi32>
      %680 = arith.addi %643, %679 : vector<2x1xi32>
      %c0_i32_136 = arith.constant 0 : i32
      %681 = vector.broadcast %c0_i32_136 : i32 to vector<2x1xi32>
      %c16_i32_137 = arith.constant 16 : i32
      %682 = vector.broadcast %c16_i32_137 : i32 to vector<2x1xi32>
      %683 = arith.ori %680, %682 : vector<2x1xi32>
      %684 = vector.broadcast %683 : vector<2x1xi32> to vector<2x256xi32>
      %685 = arith.cmpi slt, %39, %684 : vector<2x256xi32>
      %686 = arith.andi %638, %685 : vector<2x256xi1>
      %687 = arith.extui %686 : vector<2x256xi1> to vector<2x256xi32>
      %cst_138 = arith.constant dense<0> : vector<2xi32>
      %688 = vector.multi_reduction <add>, %687, %cst_138 [1] : vector<2x256xi32> to vector<2xi32>
      %689 = vector.shape_cast %688 : vector<2xi32> to vector<2x1xi32>
      %690 = arith.cmpi slt, %689, %642 : vector<2x1xi32>
      %691 = arith.extui %690 : vector<2x1xi1> to vector<2x1xi32>
      %692 = arith.addi %681, %691 : vector<2x1xi32>
      %c32_i32_139 = arith.constant 32 : i32
      %693 = vector.broadcast %c32_i32_139 : i32 to vector<2x1xi32>
      %694 = arith.ori %680, %693 : vector<2x1xi32>
      %695 = vector.broadcast %694 : vector<2x1xi32> to vector<2x256xi32>
      %696 = arith.cmpi slt, %39, %695 : vector<2x256xi32>
      %697 = arith.andi %638, %696 : vector<2x256xi1>
      %698 = arith.extui %697 : vector<2x256xi1> to vector<2x256xi32>
      %cst_140 = arith.constant dense<0> : vector<2xi32>
      %699 = vector.multi_reduction <add>, %698, %cst_140 [1] : vector<2x256xi32> to vector<2xi32>
      %700 = vector.shape_cast %699 : vector<2xi32> to vector<2x1xi32>
      %701 = arith.cmpi slt, %700, %642 : vector<2x1xi32>
      %702 = arith.extui %701 : vector<2x1xi1> to vector<2x1xi32>
      %703 = arith.addi %692, %702 : vector<2x1xi32>
      %c48_i32_141 = arith.constant 48 : i32
      %704 = vector.broadcast %c48_i32_141 : i32 to vector<2x1xi32>
      %705 = arith.ori %680, %704 : vector<2x1xi32>
      %706 = vector.broadcast %705 : vector<2x1xi32> to vector<2x256xi32>
      %707 = arith.cmpi slt, %39, %706 : vector<2x256xi32>
      %708 = arith.andi %638, %707 : vector<2x256xi1>
      %709 = arith.extui %708 : vector<2x256xi1> to vector<2x256xi32>
      %cst_142 = arith.constant dense<0> : vector<2xi32>
      %710 = vector.multi_reduction <add>, %709, %cst_142 [1] : vector<2x256xi32> to vector<2xi32>
      %711 = vector.shape_cast %710 : vector<2xi32> to vector<2x1xi32>
      %712 = arith.cmpi slt, %711, %642 : vector<2x1xi32>
      %713 = arith.extui %712 : vector<2x1xi1> to vector<2x1xi32>
      %714 = arith.addi %703, %713 : vector<2x1xi32>
      %c4_i32_143 = arith.constant 4 : i32
      %715 = vector.broadcast %c4_i32_143 : i32 to vector<2x1xi32>
      %716 = arith.shli %714, %715 : vector<2x1xi32>
      %717 = arith.addi %680, %716 : vector<2x1xi32>
      %c0_i32_144 = arith.constant 0 : i32
      %718 = vector.broadcast %c0_i32_144 : i32 to vector<2x1xi32>
      %c4_i32_145 = arith.constant 4 : i32
      %719 = vector.broadcast %c4_i32_145 : i32 to vector<2x1xi32>
      %720 = arith.ori %717, %719 : vector<2x1xi32>
      %721 = vector.broadcast %720 : vector<2x1xi32> to vector<2x256xi32>
      %722 = arith.cmpi slt, %39, %721 : vector<2x256xi32>
      %723 = arith.andi %638, %722 : vector<2x256xi1>
      %724 = arith.extui %723 : vector<2x256xi1> to vector<2x256xi32>
      %cst_146 = arith.constant dense<0> : vector<2xi32>
      %725 = vector.multi_reduction <add>, %724, %cst_146 [1] : vector<2x256xi32> to vector<2xi32>
      %726 = vector.shape_cast %725 : vector<2xi32> to vector<2x1xi32>
      %727 = arith.cmpi slt, %726, %642 : vector<2x1xi32>
      %728 = arith.extui %727 : vector<2x1xi1> to vector<2x1xi32>
      %729 = arith.addi %718, %728 : vector<2x1xi32>
      %c8_i32_147 = arith.constant 8 : i32
      %730 = vector.broadcast %c8_i32_147 : i32 to vector<2x1xi32>
      %731 = arith.ori %717, %730 : vector<2x1xi32>
      %732 = vector.broadcast %731 : vector<2x1xi32> to vector<2x256xi32>
      %733 = arith.cmpi slt, %39, %732 : vector<2x256xi32>
      %734 = arith.andi %638, %733 : vector<2x256xi1>
      %735 = arith.extui %734 : vector<2x256xi1> to vector<2x256xi32>
      %cst_148 = arith.constant dense<0> : vector<2xi32>
      %736 = vector.multi_reduction <add>, %735, %cst_148 [1] : vector<2x256xi32> to vector<2xi32>
      %737 = vector.shape_cast %736 : vector<2xi32> to vector<2x1xi32>
      %738 = arith.cmpi slt, %737, %642 : vector<2x1xi32>
      %739 = arith.extui %738 : vector<2x1xi1> to vector<2x1xi32>
      %740 = arith.addi %729, %739 : vector<2x1xi32>
      %c12_i32_149 = arith.constant 12 : i32
      %741 = vector.broadcast %c12_i32_149 : i32 to vector<2x1xi32>
      %742 = arith.ori %717, %741 : vector<2x1xi32>
      %743 = vector.broadcast %742 : vector<2x1xi32> to vector<2x256xi32>
      %744 = arith.cmpi slt, %39, %743 : vector<2x256xi32>
      %745 = arith.andi %638, %744 : vector<2x256xi1>
      %746 = arith.extui %745 : vector<2x256xi1> to vector<2x256xi32>
      %cst_150 = arith.constant dense<0> : vector<2xi32>
      %747 = vector.multi_reduction <add>, %746, %cst_150 [1] : vector<2x256xi32> to vector<2xi32>
      %748 = vector.shape_cast %747 : vector<2xi32> to vector<2x1xi32>
      %749 = arith.cmpi slt, %748, %642 : vector<2x1xi32>
      %750 = arith.extui %749 : vector<2x1xi1> to vector<2x1xi32>
      %751 = arith.addi %740, %750 : vector<2x1xi32>
      %c2_i32_151 = arith.constant 2 : i32
      %752 = vector.broadcast %c2_i32_151 : i32 to vector<2x1xi32>
      %753 = arith.shli %751, %752 : vector<2x1xi32>
      %754 = arith.addi %717, %753 : vector<2x1xi32>
      %c0_i32_152 = arith.constant 0 : i32
      %755 = vector.broadcast %c0_i32_152 : i32 to vector<2x1xi32>
      %c1_i32_153 = arith.constant 1 : i32
      %756 = vector.broadcast %c1_i32_153 : i32 to vector<2x1xi32>
      %757 = arith.ori %754, %756 : vector<2x1xi32>
      %758 = vector.broadcast %757 : vector<2x1xi32> to vector<2x256xi32>
      %759 = arith.cmpi slt, %39, %758 : vector<2x256xi32>
      %760 = arith.andi %638, %759 : vector<2x256xi1>
      %761 = arith.extui %760 : vector<2x256xi1> to vector<2x256xi32>
      %cst_154 = arith.constant dense<0> : vector<2xi32>
      %762 = vector.multi_reduction <add>, %761, %cst_154 [1] : vector<2x256xi32> to vector<2xi32>
      %763 = vector.shape_cast %762 : vector<2xi32> to vector<2x1xi32>
      %764 = arith.cmpi slt, %763, %642 : vector<2x1xi32>
      %765 = arith.extui %764 : vector<2x1xi1> to vector<2x1xi32>
      %766 = arith.addi %755, %765 : vector<2x1xi32>
      %c2_i32_155 = arith.constant 2 : i32
      %767 = vector.broadcast %c2_i32_155 : i32 to vector<2x1xi32>
      %768 = arith.ori %754, %767 : vector<2x1xi32>
      %769 = vector.broadcast %768 : vector<2x1xi32> to vector<2x256xi32>
      %770 = arith.cmpi slt, %39, %769 : vector<2x256xi32>
      %771 = arith.andi %638, %770 : vector<2x256xi1>
      %772 = arith.extui %771 : vector<2x256xi1> to vector<2x256xi32>
      %cst_156 = arith.constant dense<0> : vector<2xi32>
      %773 = vector.multi_reduction <add>, %772, %cst_156 [1] : vector<2x256xi32> to vector<2xi32>
      %774 = vector.shape_cast %773 : vector<2xi32> to vector<2x1xi32>
      %775 = arith.cmpi slt, %774, %642 : vector<2x1xi32>
      %776 = arith.extui %775 : vector<2x1xi1> to vector<2x1xi32>
      %777 = arith.addi %766, %776 : vector<2x1xi32>
      %c3_i32_157 = arith.constant 3 : i32
      %778 = vector.broadcast %c3_i32_157 : i32 to vector<2x1xi32>
      %779 = arith.ori %754, %778 : vector<2x1xi32>
      %780 = vector.broadcast %779 : vector<2x1xi32> to vector<2x256xi32>
      %781 = arith.cmpi slt, %39, %780 : vector<2x256xi32>
      %782 = arith.andi %638, %781 : vector<2x256xi1>
      %783 = arith.extui %782 : vector<2x256xi1> to vector<2x256xi32>
      %cst_158 = arith.constant dense<0> : vector<2xi32>
      %784 = vector.multi_reduction <add>, %783, %cst_158 [1] : vector<2x256xi32> to vector<2xi32>
      %785 = vector.shape_cast %784 : vector<2xi32> to vector<2x1xi32>
      %786 = arith.cmpi slt, %785, %642 : vector<2x1xi32>
      %787 = arith.extui %786 : vector<2x1xi1> to vector<2x1xi32>
      %788 = arith.addi %777, %787 : vector<2x1xi32>
      %c0_i32_159 = arith.constant 0 : i32
      %789 = vector.broadcast %c0_i32_159 : i32 to vector<2x1xi32>
      %790 = arith.shli %788, %789 : vector<2x1xi32>
      %791 = arith.addi %754, %790 : vector<2x1xi32>
      %792 = vector.broadcast %791 : vector<2x1xi32> to vector<2x256xi32>
      %793 = arith.cmpi sle, %39, %792 : vector<2x256xi32>
      %794 = arith.andi %638, %793 : vector<2x256xi1>
      %795 = arith.ori %636, %794 : vector<2x256xi1>
      %796 = arith.extui %795 : vector<2x256xi1> to vector<2x256xi32>
      %797 = arith.sitofp %796 : vector<2x256xi32> to vector<2x256xf32>
      %798 = arith.addf %46, %797 : vector<2x256xf32>
      %799 = arith.mulf %100, %798 : vector<2x256xf32>
      %cst_160 = arith.constant dense<0.000000e+00> : vector<2xf32>
      %800 = vector.multi_reduction <add>, %799, %cst_160 [1] : vector<2x256xf32> to vector<2xf32>
      %801 = vector.shape_cast %800 : vector<2xf32> to vector<2x1xf32>
      %802 = arith.addf %94, %801 : vector<2x1xf32>
      %c0_i32_161 = arith.constant 0 : i32
      %803 = vector.broadcast %c0_i32_161 : i32 to vector<2x1xi32>
      %804 = arith.cmpi sgt, %103, %803 : vector<2x1xi32>
      %805 = arith.extui %804 : vector<2x1xi1> to vector<2x1xi32>
      %806 = arith.sitofp %805 : vector<2x1xi32> to vector<2x1xf32>
      %807 = arith.sitofp %103 : vector<2x1xi32> to vector<2x1xf32>
      %cst_162 = arith.constant 9.99999997E-7 : f32
      %808 = vector.broadcast %cst_162 : f32 to vector<2x1xf32>
      %809 = arith.maximumf %807, %808 : vector<2x1xf32>
      %810 = arith.mulf %802, %806 : vector<2x1xf32>
      %811 = arith.divf %810, %809 : vector<2x1xf32>
      %812 = vector.shape_cast %811 : vector<2x1xf32> to vector<2x1xf32>
      %813 = vector.broadcast %812 : vector<2x1xf32> to vector<2x128xf32>
      %c0_163 = arith.constant 0 : index
      %c0_164 = arith.constant 0 : index
      %814 = vector.load %arg7[%c0_163, %c0_164] : memref<2x128xf32, #tpu.memory_space<vmem>>, vector<2x128xf32>
      tpu.vector_store %arg7[%c0_163, %c0_164], %813 {strides = array<i32>} : memref<2x128xf32, #tpu.memory_space<vmem>>, vector<2x128xf32>,
    } else {
    }
    return
  }
  func.func @transform_0(%arg0: i32, %arg1: i32) -> (i32, i32, i32) {
    %c0_i32 = arith.constant 0 : i32
    %c0_i32_0 = arith.constant 0 : i32
    %c0_i32_1 = arith.constant 0 : i32
    return %arg0, %c0_i32, %c0_i32_0 : i32, i32, i32
  }
  func.func @transform_1(%arg0: i32, %arg1: i32) -> (i32, i32, i32) {
    %c0_i32 = arith.constant 0 : i32
    %c0_i32_0 = arith.constant 0 : i32
    return %arg0, %arg1, %c0_i32 : i32, i32, i32
  }
  func.func @transform_2(%arg0: i32, %arg1: i32) -> (i32, i32, i32) {
    %c0_i32 = arith.constant 0 : i32
    %c0_i32_0 = arith.constant 0 : i32
    %c0_i32_1 = arith.constant 0 : i32
    return %arg0, %c0_i32, %c0_i32_0 : i32, i32, i32
  }
  func.func @transform_3(%arg0: i32, %arg1: i32) -> (i32, i32) {
    %c0_i32 = arith.constant 0 : i32
    %c0_i32_0 = arith.constant 0 : i32
    return %arg0, %c0_i32 : i32, i32
  }
  func.func @transform_4(%arg0: i32, %arg1: i32) -> (i32, i32, i32) {
    %c0_i32 = arith.constant 0 : i32
    %c0_i32_0 = arith.constant 0 : i32
    %c0_i32_1 = arith.constant 0 : i32
    %c0_i32_2 = arith.constant 0 : i32
    return %c0_i32, %c0_i32_0, %c0_i32_1 : i32, i32, i32
  }
  func.func @transform_5(%arg0: i32, %arg1: i32) -> (i32, i32) {
    %c0_i32 = arith.constant 0 : i32
    %c0_i32_0 = arith.constant 0 : i32
    return %arg0, %c0_i32 : i32, i32
  }
}

</mosaic_0001>

<llo_original>
// kernel: tpu_custom_call.1
$region0: #{tpu_custom_call.1}
  #allocation0 [shape = 'u32[]', space=smem, size = 0x4, offset = 0x4, fixed_abs, tag = 'smem constant byte address 0x4 - core index']
  #allocation1 [shape = 'u32[144,128]{1,0:T(1,128)}', space=vmem, size = 0x12000, scoped, tag = 'internal scratch']
  #allocation2 [shape = 'f32[2,256]{1,0:T(2,128)}', space=vmem, size = 0x800, scoped, tag = 'scratch operand']
  #allocation3 [shape = 'f32[2,256]{1,0:T(2,128)}', space=vmem, size = 0x800, scoped, tag = 'scratch operand']
  #allocation4 [shape = 'f32[2,256]{1,0:T(2,128)}', space=vmem, size = 0x800, scoped, tag = 'scratch operand']
  %s0 = inlined_call_operand.hbm [shape: f32[2,4,256], index: 0, kind: input, shape index: {}]
  %s1 = inlined_call_operand.hbm [shape: f32[2,8,256], index: 1, kind: input, shape index: {}]
  %s2 = inlined_call_operand.hbm [shape: f32[2,4,256], index: 2, kind: input, shape index: {}]
  %s3 = inlined_call_operand.vmem [shape: s32[2,256], index: 3, kind: input, shape index: {}]
  %s4 = inlined_call_operand.vmem [shape: f32[1,4,256], index: 4, kind: input, shape index: {}]
  %s5 = inlined_call_operand.hbm [shape: f32[2,128], index: 5, kind: output, shape index: {}]
  %s6 = sld [smem:[#allocation0]]
  $region50: #{tpu_custom_call.1} parent=0
    _
  %s8 = ssub.s32 1, %s6
  %s9 = scalar_select 0, %s8, %s6
  $region1: #{tpu_custom_call.1} parent=0
    #allocation5 [shape = 'u8[8192]{0}', space=vmem, size = 0x2000, scoped, tag = 'input window, operand 0, single buffered']
    #allocation6 [shape = 's32[1]{0}', space=sflag, size = 0x4, scoped, tag = 'scoped memory for tpu_custom_call.1']
    #allocation7 [shape = 's32[1]{0}', space=sflag, size = 0x4, scoped, tag = 'scoped memory for tpu_custom_call.1']
    #allocation8 [shape = 'u8[16384]{0}', space=vmem, size = 0x4000, scoped, tag = 'input window, operand 1, single buffered']
    #allocation9 [shape = 's32[1]{0}', space=sflag, size = 0x4, scoped, tag = 'scoped memory for tpu_custom_call.1']
    #allocation10 [shape = 'u8[8192]{0}', space=vmem, size = 0x2000, scoped, tag = 'input window, operand 2, single buffered']
    #allocation11 [shape = 'u8[1024]{0}', space=vmem, size = 0x400, scoped, tag = 'output window, operand 0, single buffered']
    %10 = vsyncpa [#allocation6], 0
    %11 = vsyncpa [#allocation9], 0
    %12 = vsyncpa [#allocation7], 0
    // Predicated region
    $region2: #{tpu_custom_call.1} parent=1 // pred_check
      _
    $region3: #{tpu_custom_call.1} parent=1 // pred_check_branch
      %14 = sbr.rel (0) target = $region5
    $region4: #{tpu_custom_call.1} parent=1 // pred_region
      %s16 = ssub.s32 256, 256
      %17 = vsyncadd [#allocation6], %s16
      %s18 = sshll.u32 [#allocation5], 4
      %s19 = int_to_ptr.vmem [resolvable:$true] %s18
      %24 = dma.hbm_to_vmem [thread:$0]  %s0, 256, %s19, [#allocation6], 128, 128, 8
    $region5: #{tpu_custom_call.1} parent=1 // pred_fallthru
      _
    // Predicated region
    $region6: #{tpu_custom_call.1} parent=1 // pred_check
      _
    $region7: #{tpu_custom_call.1} parent=1 // pred_check_branch
      %26 = sbr.rel (0) target = $region9
    $region8: #{tpu_custom_call.1} parent=1 // pred_region
      %s28 = ssub.s32 512, 512
      %29 = vsyncadd [#allocation9], %s28
      %s30 = sshll.u32 [#allocation8], 4
      %s31 = int_to_ptr.vmem [resolvable:$true] %s30
      %36 = dma.hbm_to_vmem [thread:$0]  %s1, 512, %s31, [#allocation9], 256, 256, 16
    $region9: #{tpu_custom_call.1} parent=1 // pred_fallthru
      _
    // Predicated region
    $region10: #{tpu_custom_call.1} parent=1 // pred_check
      _
    $region11: #{tpu_custom_call.1} parent=1 // pred_check_branch
      %38 = sbr.rel (0) target = $region13
    $region12: #{tpu_custom_call.1} parent=1 // pred_region
      %s40 = ssub.s32 256, 256
      %41 = vsyncadd [#allocation9], %s40
      %s42 = sshll.u32 [#allocation10], 4
      %s43 = int_to_ptr.vmem [resolvable:$true] %s42
      %48 = dma.hbm_to_vmem [thread:$0]  %s2, 256, %s43, [#allocation9], 128, 128, 8
    $region13: #{tpu_custom_call.1} parent=1 // pred_fallthru
      _
    // Predicated region
    $region14: #{tpu_custom_call.1} parent=1 // pred_check
      _
    $region15: #{tpu_custom_call.1} parent=1 // pred_check_branch
      %50 = sbr.rel (0) target = $region17
    $region16: #{tpu_custom_call.1} parent=1 // pred_region
      _
    $region17: #{tpu_custom_call.1} parent=1 // pred_fallthru
      _
    // Predicated region
    $region18: #{tpu_custom_call.1} parent=1 // pred_check
      _
    $region19: #{tpu_custom_call.1} parent=1 // pred_check_branch
      %52 = sbr.rel (0) target = $region21
    $region20: #{tpu_custom_call.1} parent=1 // pred_region
      _
    $region21: #{tpu_custom_call.1} parent=1 // pred_fallthru
      _
    // Predicated region
    $region22: #{tpu_custom_call.1} parent=1 // pred_check
      _
    $region23: #{tpu_custom_call.1} parent=1 // pred_check_branch
      %54 = sbr.rel (0) target = $region25
    $region24: #{tpu_custom_call.1} parent=1 // pred_region
      %55 = dma.done [#allocation6], 256
    $region25: #{tpu_custom_call.1} parent=1 // pred_fallthru
      _
    // Predicated region
    $region26: #{tpu_custom_call.1} parent=1 // pred_check
      _
    $region27: #{tpu_custom_call.1} parent=1 // pred_check_branch
      %57 = sbr.rel (0) target = $region29
    $region28: #{tpu_custom_call.1} parent=1 // pred_region
      %58 = dma.done [#allocation9], 512
    $region29: #{tpu_custom_call.1} parent=1 // pred_fallthru
      _
    // Predicated region
    $region30: #{tpu_custom_call.1} parent=1 // pred_check
      _
    $region31: #{tpu_custom_call.1} parent=1 // pred_check_branch
      %60 = sbr.rel (0) target = $region33
    $region32: #{tpu_custom_call.1} parent=1 // pred_region
      %61 = dma.done [#allocation9], 256
    $region33: #{tpu_custom_call.1} parent=1 // pred_fallthru
      _
    %v62 = vld [vmem:[#allocation8] sm:$0xff]
    %v63 = vld [vmem:[#allocation8 + $0x8] sm:$0xff]
    %v64 = vld [vmem:[#allocation8 + $0x10] sm:$0xff]
    %v65 = vld [vmem:[#allocation8 + $0x18] sm:$0xff]
    %v66 = vld [vmem:[%s3] sm:$0xf]
    %v67 = vlaneseq
    %v68 = vshrl.u32 %v67, 7
    %s69 = smul.u32 0, 8
    %v70 = vstv %s69
    %v71 = vadd.s32 %v68, %v70
    %v73 = vunpack.c.l.s4 1966171168
    %v74 = vunpack.c.0.s8 %v73
    %v75 = vlaneseq
    %v76 = vshrl.u32 %v75, 7
    %v77 = vsub.s32 %v74, %v76
    %v78 = vrot.slane %v66, %v77
    %v79 = vcombine.high %v78, %v78
    %v80 = vlaneseq
    %v81 = vshrl.u32 %v80, 7
    %v82 = vsub.s32 0, %v81
    %v83 = vrot.slane %v78, %v82
    %v84 = vlaneseq
    %v85 = vshrl.u32 %v84, 7
    %v86 = vsub.s32 1, %v85
    %v87 = vrot.slane %v78, %v86
    %v88 = vlaneseq
    %v89 = vshrl.u32 %v88, 7
    %v90 = vsub.s32 0, %v89
    %v91 = vrot.slane %v79, %v90
    %v92 = vlaneseq
    %v93 = vshrl.u32 %v92, 7
    %v94 = vsub.s32 1, %v93
    %v95 = vrot.slane %v79, %v94
    %vm96 = vcmp.eq.s32.totalorder %v71, %v83
    %vm97 = vcmp.eq.s32.totalorder %v71, %v87
    %vm98 = vcmp.eq.s32.totalorder %v71, %v91
    %vm99 = vcmp.eq.s32.totalorder %v71, %v95
    %v100 = vsel %vm96, %v62, 0.0
    %v101 = vsel %vm97, %v63, 0.0
    %v102 = vsel %vm98, %v64, 0.0
    %v103 = vsel %vm99, %v65, 0.0
    %v104 = vrot.slane %v100, 4
    %v105 = vadd.f32 %v100, %v104
    %v106 = vrot.slane %v105, 2
    %v107 = vadd.f32 %v105, %v106
    %v108 = vrot.slane %v107, 1
    %v109 = vadd.f32 %v107, %v108
    %v110 = vrot.slane %v101, 4
    %v111 = vadd.f32 %v101, %v110
    %v112 = vrot.slane %v111, 2
    %v113 = vadd.f32 %v111, %v112
    %v114 = vrot.slane %v113, 1
    %v115 = vadd.f32 %v113, %v114
    %v116 = vrot.slane %v102, 4
    %v117 = vadd.f32 %v102, %v116
    %v118 = vrot.slane %v117, 2
    %v119 = vadd.f32 %v117, %v118
    %v120 = vrot.slane %v119, 1
    %v121 = vadd.f32 %v119, %v120
    %v122 = vrot.slane %v103, 4
    %v123 = vadd.f32 %v103, %v122
    %v124 = vrot.slane %v123, 2
    %v125 = vadd.f32 %v123, %v124
    %v126 = vrot.slane %v125, 1
    %v127 = vadd.f32 %v125, %v126
    %v128 = vrot.slane %v62, 4
    %v129 = vmax.f32 %v62, %v128
    %v130 = vrot.slane %v129, 2
    %v131 = vmax.f32 %v129, %v130
    %v132 = vrot.slane %v131, 1
    %v133 = vmax.f32 %v131, %v132
    %v134 = vrot.slane %v63, 4
    %v135 = vmax.f32 %v63, %v134
    %v136 = vrot.slane %v135, 2
    %v137 = vmax.f32 %v135, %v136
    %v138 = vrot.slane %v137, 1
    %v139 = vmax.f32 %v137, %v138
    %v140 = vrot.slane %v64, 4
    %v141 = vmax.f32 %v64, %v140
    %v142 = vrot.slane %v141, 2
    %v143 = vmax.f32 %v141, %v142
    %v144 = vrot.slane %v143, 1
    %v145 = vmax.f32 %v143, %v144
    %v146 = vrot.slane %v65, 4
    %v147 = vmax.f32 %v65, %v146
    %v148 = vrot.slane %v147, 2
    %v149 = vmax.f32 %v147, %v148
    %v150 = vrot.slane %v149, 1
    %v151 = vmax.f32 %v149, %v150
    %p152 = scmp.eq.s32.totalorder 0, 0
    // Predicated region
    $region34: #{tpu_custom_call.1} parent=1 // pred_check
      %p153 = pneg %p152
    $region35: #{tpu_custom_call.1} parent=1 // pred_check_branch
      %155 = sbr.rel (%p153) target = $region37
    $region36: #{tpu_custom_call.1} parent=1 // pred_region
      %156 = vst [vmem:[#allocation2] sm:$0xf] -1e+30
      %157 = vst [vmem:[#allocation3] sm:$0xf] 0.0
      %158 = vst [vmem:[#allocation4] sm:$0xf] 0.0
    $region37: #{tpu_custom_call.1} parent=1 // pred_fallthru
      _
    %v159 = vld [vmem:[#allocation2] sm:$0xf]
    %v164 = vcombine.low %v133, %v139
    %v166 = vunpack.c.l.s4 1983009808
    %v167 = vunpack.c.0.s8 %v166
    %v168 = vlaneseq
    %v169 = vshrl.u32 %v168, 7
    %v170 = vsub.s32 %v167, %v169
    %v171 = vrot.slane %v164, %v170
    %v172 = vcombine.low %v145, %v151
    %v174 = vunpack.c.l.s4 1983009808
    %v175 = vunpack.c.0.s8 %v174
    %v176 = vlaneseq
    %v177 = vshrl.u32 %v176, 7
    %v178 = vsub.s32 %v175, %v177
    %v179 = vrot.slane %v172, %v178
    %vm180 = vcmask 1044484
    %v181 = vsel %vm180, %v171, %v171
    %vm182 = vcmask 1046534
    %v183 = vsel %vm182, %v171, %v181
    %v184 = vrot.slane %v179, 7
    %vm185 = vcmask 1041409
    %v186 = vsel %vm185, %v184, %v183
    %vm187 = vcmask 1043459
    %v188 = vsel %vm187, %v184, %v186
    %vm189 = vcmask 1045509
    %v190 = vsel %vm189, %v184, %v188
    %vm191 = vcmask 1047559
    %v192 = vsel %vm191, %v184, %v190
    %v194 = vmax.f32 %v159, %v192
    %v195 = vld [vmem:[#allocation3] sm:$0xf]
    %v196 = vsub.f32 %v159, %v194
    %v197 = vmul.f32 %v196, 1.442695
    %v198 = vpow.pop %v197
    %v199 = vmul.f32 %v195, %v198
    %v202 = vunpack.c.l.s4 1966171168
    %v203 = vunpack.c.0.s8 %v202
    %v204 = vlaneseq
    %v205 = vshrl.u32 %v204, 7
    %v206 = vsub.s32 %v203, %v205
    %v207 = vrot.slane %v194, %v206
    %v208 = vcombine.high %v207, %v207
    %v209 = vlaneseq
    %v210 = vshrl.u32 %v209, 7
    %v211 = vsub.s32 0, %v210
    %v212 = vrot.slane %v207, %v211
    %v213 = vlaneseq
    %v214 = vshrl.u32 %v213, 7
    %v215 = vsub.s32 1, %v214
    %v216 = vrot.slane %v207, %v215
    %v217 = vlaneseq
    %v218 = vshrl.u32 %v217, 7
    %v219 = vsub.s32 0, %v218
    %v220 = vrot.slane %v208, %v219
    %v221 = vlaneseq
    %v222 = vshrl.u32 %v221, 7
    %v223 = vsub.s32 1, %v222
    %v224 = vrot.slane %v208, %v223
    %v229 = vsub.f32 %v62, %v212
    %v230 = vsub.f32 %v63, %v216
    %v231 = vsub.f32 %v64, %v220
    %v232 = vsub.f32 %v65, %v224
    %v233 = vmul.f32 %v229, 1.442695
    %v234 = vpow.pop %v233
    %v235 = vmul.f32 %v230, 1.442695
    %v236 = vpow.pop %v235
    %v237 = vmul.f32 %v231, 1.442695
    %v238 = vpow.pop %v237
    %v239 = vmul.f32 %v232, 1.442695
    %v240 = vpow.pop %v239
    %v241 = vrot.slane %v234, 4
    %v242 = vadd.f32 %v234, %v241
    %v243 = vrot.slane %v242, 2
    %v244 = vadd.f32 %v242, %v243
    %v245 = vrot.slane %v244, 1
    %v246 = vadd.f32 %v244, %v245
    %v247 = vrot.slane %v236, 4
    %v248 = vadd.f32 %v236, %v247
    %v249 = vrot.slane %v248, 2
    %v250 = vadd.f32 %v248, %v249
    %v251 = vrot.slane %v250, 1
    %v252 = vadd.f32 %v250, %v251
    %v253 = vrot.slane %v238, 4
    %v254 = vadd.f32 %v238, %v253
    %v255 = vrot.slane %v254, 2
    %v256 = vadd.f32 %v254, %v255
    %v257 = vrot.slane %v256, 1
    %v258 = vadd.f32 %v256, %v257
    %v259 = vrot.slane %v240, 4
    %v260 = vadd.f32 %v240, %v259
    %v261 = vrot.slane %v260, 2
    %v262 = vadd.f32 %v260, %v261
    %v263 = vrot.slane %v262, 1
    %v264 = vadd.f32 %v262, %v263
    %v269 = vcombine.low %v246, %v252
    %v271 = vunpack.c.l.s4 1983009808
    %v272 = vunpack.c.0.s8 %v271
    %v273 = vlaneseq
    %v274 = vshrl.u32 %v273, 7
    %v275 = vsub.s32 %v272, %v274
    %v276 = vrot.slane %v269, %v275
    %v277 = vcombine.low %v258, %v264
    %v279 = vunpack.c.l.s4 1983009808
    %v280 = vunpack.c.0.s8 %v279
    %v281 = vlaneseq
    %v282 = vshrl.u32 %v281, 7
    %v283 = vsub.s32 %v280, %v282
    %v284 = vrot.slane %v277, %v283
    %v285 = vsel %vm180, %v276, %v276
    %v286 = vsel %vm182, %v276, %v285
    %v287 = vrot.slane %v284, 7
    %v288 = vsel %vm185, %v287, %v286
    %v289 = vsel %vm187, %v287, %v288
    %v290 = vsel %vm189, %v287, %v289
    %v291 = vsel %vm191, %v287, %v290
    %v293 = vadd.f32 %v199, %v291
    %294 = vst [vmem:[#allocation3] sm:$0xf] %v293
    %295 = vst [vmem:[#allocation2] sm:$0xf] %v194
    %v296 = vld [vmem:[#allocation4] sm:$0xf]
    %v301 = vcombine.low %v109, %v115
    %v303 = vunpack.c.l.s4 1983009808
    %v304 = vunpack.c.0.s8 %v303
    %v305 = vlaneseq
    %v306 = vshrl.u32 %v305, 7
    %v307 = vsub.s32 %v304, %v306
    %v308 = vrot.slane %v301, %v307
    %v309 = vcombine.low %v121, %v127
    %v311 = vunpack.c.l.s4 1983009808
    %v312 = vunpack.c.0.s8 %v311
    %v313 = vlaneseq
    %v314 = vshrl.u32 %v313, 7
    %v315 = vsub.s32 %v312, %v314
    %v316 = vrot.slane %v309, %v315
    %v317 = vsel %vm180, %v308, %v308
    %v318 = vsel %vm182, %v308, %v317
    %v319 = vrot.slane %v316, 7
    %v320 = vsel %vm185, %v319, %v318
    %v321 = vsel %vm187, %v319, %v320
    %v322 = vsel %vm189, %v319, %v321
    %v323 = vsel %vm191, %v319, %v322
    %v325 = vadd.f32 %v296, %v323
    %326 = vst [vmem:[#allocation4] sm:$0xf] %v325
    // Predicated region
    $region38: #{tpu_custom_call.1} parent=1 // pred_check
      %p327 = pneg %p152
    $region39: #{tpu_custom_call.1} parent=1 // pred_check_branch
      %329 = sbr.rel (%p327) target = $region41
    $region40: #{tpu_custom_call.1} parent=1 // pred_region
      %v330 = vld [vmem:[#allocation5] sm:$0xff]
      %v331 = vld [vmem:[#allocation5 + $0x8] sm:$0xff]
      %v332 = vld [vmem:[#allocation10] sm:$0xff]
      %v333 = vld [vmem:[#allocation10 + $0x8] sm:$0xff]
      %v334 = vld [vmem:[%s4] sm:$0xff]
      %v335 = vlaneseq
      %v336 = vand.u32 %v335, 127
      %v337 = vadd.s32 %v336, 128
      %vm338 = vcmp.lt.s32.totalorder %v336, 256
      %vm339 = vcmp.lt.s32.totalorder %v337, 256
      %vm340 = vcmp.gt.s32.totalorder %v66, 0
      %v341 = vsel %vm338, 1, 0
      %v342 = vsel %vm339, 1, 0
      %v343 = vcombine.low %v341, %v342
      %v345 = vunpack.c.l.s4 1983009808
      %v346 = vunpack.c.0.s8 %v345
      %v347 = vlaneseq
      %v348 = vshrl.u32 %v347, 7
      %v349 = vsub.s32 %v346, %v348
      %v350 = vrot.slane %v343, %v349
      %vm351 = vcmp.ne.s32.totalorder %v350, 0
      %vm352 = vmand %vm340, %vm351
      %v353 = vsel %vm352, 1, 0
      %v354 = vcvt.s32.f32 %v353
      %v355 = vsub.f32 %v332, %v334
      %v356 = vsub.f32 %v333, %v334
      %v357 = vmul.f32 %v355, 10.0
      %v358 = vmul.f32 %v356, 10.0
      %v360 = vrot.slane %v334, 6
      %v361 = vrot.slane %v360, 4
      %v363 = vmul.f32 %v357, %v361
      %v364 = vmul.f32 %v358, %v361
      %v366 = vunpack.c.l.s4 1966171168
      %v367 = vunpack.c.0.s8 %v366
      %v368 = vlaneseq
      %v369 = vshrl.u32 %v368, 7
      %v370 = vsub.s32 %v367, %v369
      %v371 = vrot.slane %v353, %v370
      %v372 = vcombine.high %v371, %v371
      %vm373 = vcmp.ne.s32.totalorder %v371, 0
      %vm374 = vcmp.ne.s32.totalorder %v372, 0
      %v375 = vmul.f32 %v332, %v334
      %v376 = vmul.f32 %v333, %v334
      %v377 = vsel %vm373, 1, 0
      %v378 = vsel %vm374, 1, 0
      %v379 = vlaneseq
      %v380 = vshrl.u32 %v379, 7
      %v381 = vsub.s32 0, %v380
      %v382 = vrot.slane %v377, %v381
      %v383 = vlaneseq
      %v384 = vshrl.u32 %v383, 7
      %v385 = vsub.s32 1, %v384
      %v386 = vrot.slane %v377, %v385
      %v387 = vlaneseq
      %v388 = vshrl.u32 %v387, 7
      %v389 = vsub.s32 0, %v388
      %v390 = vrot.slane %v378, %v389
      %v391 = vlaneseq
      %v392 = vshrl.u32 %v391, 7
      %v393 = vsub.s32 1, %v392
      %v394 = vrot.slane %v378, %v393
      %vm395 = vcmp.eq.s32.totalorder %v382, 1
      %vm396 = vcmp.eq.s32.totalorder %v386, 1
      %vm397 = vcmp.eq.s32.totalorder %v390, 1
      %vm398 = vcmp.eq.s32.totalorder %v394, 1
      %v401 = vcombine.high %v375, %v375
      %v402 = vcombine.high %v376, %v376
      %v403 = vrot.slane %v375, 2
      %v404 = vrot.slane %v401, 2
      %v405 = vrot.slane %v376, 2
      %v406 = vrot.slane %v402, 2
      %v411 = vsel %vm395, %v403, 1.0
      %v412 = vsel %vm396, %v404, 1.0
      %v413 = vsel %vm397, %v405, 1.0
      %v414 = vsel %vm398, %v406, 1.0
      %v415 = vlog2.pop %v411
      %v416 = vmul.f32 %v415, 0.6931472
      %v417 = vlog2.pop %v412
      %v418 = vmul.f32 %v417, 0.6931472
      %v419 = vlog2.pop %v413
      %v420 = vmul.f32 %v419, 0.6931472
      %v421 = vlog2.pop %v414
      %v422 = vmul.f32 %v421, 0.6931472
      %v423 = vmul.f32 %v416, 5.0
      %v424 = vmul.f32 %v418, 5.0
      %v425 = vmul.f32 %v420, 5.0
      %v426 = vmul.f32 %v422, 5.0
      %v427 = vsub.f32 %v330, %v363
      %v428 = vsub.f32 %v331, %v364
      %v429 = vand.u32 2147483647, %v427
      %v430 = vand.u32 2147483647, %v428
      %vm431 = vcmp.lt.f32.partialorder %v429, 1.0
      %vm432 = vcmp.lt.f32.partialorder %v430, 1.0
      %v433 = vmul.f32 %v427, 0.5
      %v434 = vmul.f32 %v428, 0.5
      %v435 = vmul.f32 %v433, %v427
      %v436 = vmul.f32 %v434, %v428
      %v437 = vsub.f32 %v429, 0.5
      %v438 = vsub.f32 %v430, 0.5
      %v439 = vsel %vm431, %v435, %v437
      %v440 = vsel %vm432, %v436, %v438
      %v443 = vcombine.high %v439, %v439
      %v444 = vcombine.high %v440, %v440
      %vm447 = vcmask 1041408
      %v448 = vsel %vm447, %v439, 0.0
      %v449 = vrot.slane %v448, 4
      %v450 = vadd.f32 %v448, %v449
      %v451 = vrot.slane %v450, 2
      %v452 = vadd.f32 %v450, %v451
      %v453 = vrot.slane %v452, 1
      %v454 = vadd.f32 %v452, %v453
      %v455 = vsel %vm447, %v443, 0.0
      %v456 = vrot.slane %v455, 4
      %v457 = vadd.f32 %v455, %v456
      %v458 = vrot.slane %v457, 2
      %v459 = vadd.f32 %v457, %v458
      %v460 = vrot.slane %v459, 1
      %v461 = vadd.f32 %v459, %v460
      %v462 = vsel %vm447, %v440, 0.0
      %v463 = vrot.slane %v462, 4
      %v464 = vadd.f32 %v462, %v463
      %v465 = vrot.slane %v464, 2
      %v466 = vadd.f32 %v464, %v465
      %v467 = vrot.slane %v466, 1
      %v468 = vadd.f32 %v466, %v467
      %v469 = vsel %vm447, %v444, 0.0
      %v470 = vrot.slane %v469, 4
      %v471 = vadd.f32 %v469, %v470
      %v472 = vrot.slane %v471, 2
      %v473 = vadd.f32 %v471, %v472
      %v474 = vrot.slane %v473, 1
      %v475 = vadd.f32 %v473, %v474
      %v480 = vcombine.low %v423, %v424
      %v481 = vcombine.low %v425, %v426
      %v482 = vrot.slane %v480, 6
      %v483 = vrot.slane %v481, 6
      %v486 = vsub.f32 %v330, %v482
      %v487 = vsub.f32 %v331, %v483
      %v488 = vand.u32 2147483647, %v486
      %v489 = vand.u32 2147483647, %v487
      %vm490 = vcmp.lt.f32.partialorder %v488, 1.0
      %vm491 = vcmp.lt.f32.partialorder %v489, 1.0
      %v492 = vmul.f32 %v486, 0.5
      %v493 = vmul.f32 %v487, 0.5
      %v494 = vmul.f32 %v492, %v486
      %v495 = vmul.f32 %v493, %v487
      %v496 = vsub.f32 %v488, 0.5
      %v497 = vsub.f32 %v489, 0.5
      %v498 = vsel %vm490, %v494, %v496
      %v499 = vsel %vm491, %v495, %v497
      %v502 = vcombine.high %v498, %v498
      %v503 = vcombine.high %v499, %v499
      %v504 = vrot.slane %v498, 2
      %v505 = vrot.slane %v502, 2
      %v506 = vrot.slane %v499, 2
      %v507 = vrot.slane %v503, 2
      %v512 = vsel %vm447, %v504, 0.0
      %v513 = vrot.slane %v512, 4
      %v514 = vadd.f32 %v512, %v513
      %v515 = vrot.slane %v514, 2
      %v516 = vadd.f32 %v514, %v515
      %v517 = vrot.slane %v516, 1
      %v518 = vadd.f32 %v516, %v517
      %v519 = vsel %vm447, %v505, 0.0
      %v520 = vrot.slane %v519, 4
      %v521 = vadd.f32 %v519, %v520
      %v522 = vrot.slane %v521, 2
      %v523 = vadd.f32 %v521, %v522
      %v524 = vrot.slane %v523, 1
      %v525 = vadd.f32 %v523, %v524
      %v526 = vsel %vm447, %v506, 0.0
      %v527 = vrot.slane %v526, 4
      %v528 = vadd.f32 %v526, %v527
      %v529 = vrot.slane %v528, 2
      %v530 = vadd.f32 %v528, %v529
      %v531 = vrot.slane %v530, 1
      %v532 = vadd.f32 %v530, %v531
      %v533 = vsel %vm447, %v507, 0.0
      %v534 = vrot.slane %v533, 4
      %v535 = vadd.f32 %v533, %v534
      %v536 = vrot.slane %v535, 2
      %v537 = vadd.f32 %v535, %v536
      %v538 = vrot.slane %v537, 1
      %v539 = vadd.f32 %v537, %v538
      %v540 = vadd.f32 %v454, %v518
      %v541 = vadd.f32 %v461, %v525
      %v542 = vadd.f32 %v468, %v532
      %v543 = vadd.f32 %v475, %v539
      %v548 = vcombine.low %v540, %v541
      %v550 = vunpack.c.l.s4 1983009808
      %v551 = vunpack.c.0.s8 %v550
      %v552 = vlaneseq
      %v553 = vshrl.u32 %v552, 7
      %v554 = vsub.s32 %v551, %v553
      %v555 = vrot.slane %v548, %v554
      %v556 = vcombine.low %v542, %v543
      %v558 = vunpack.c.l.s4 1983009808
      %v559 = vunpack.c.0.s8 %v558
      %v560 = vlaneseq
      %v561 = vshrl.u32 %v560, 7
      %v562 = vsub.s32 %v559, %v561
      %v563 = vrot.slane %v556, %v562
      %v564 = vsel %vm180, %v555, %v555
      %v565 = vsel %vm182, %v555, %v564
      %v566 = vrot.slane %v563, 7
      %v567 = vsel %vm185, %v566, %v565
      %v568 = vsel %vm187, %v566, %v567
      %v569 = vsel %vm189, %v566, %v568
      %v570 = vsel %vm191, %v566, %v569
      %v572 = vmul.f32 %v354, %v570
      %v575 = vunpack.c.l.s4 1983009808
      %v576 = vunpack.c.0.s8 %v575
      %v577 = vlaneseq
      %v578 = vshrl.u32 %v577, 7
      %v579 = vsub.s32 %v576, %v578
      %v580 = vrot.slane %v572, %v579
      %v581 = vcombine.high %v580, %v580
      %v584 = vsel %vm447, %v580, 0.0
      %v585 = vsel %vm447, %v581, 0.0
      %v586 = vadd.f32 %v584, %v585
      %587 = vadd.xlane.f32.xlu0 %v586
      %v588 = vpop.xlane.xlu0 %587
      %v589 = vld [vmem:[#allocation2] sm:$0xf]
      %v590 = vld [vmem:[#allocation3] sm:$0xf]
      %v591 = vlog2.pop %v590
      %v592 = vmul.f32 %v591, 0.6931472
      %v593 = vadd.f32 %v589, %v592
      %v594 = vld [vmem:[#allocation4] sm:$0xf]
      %v595 = vsub.f32 %v593, %v594
      %v597 = vunpack.c.l.s4 1983009808
      %v598 = vunpack.c.0.s8 %v597
      %v599 = vlaneseq
      %v600 = vshrl.u32 %v599, 7
      %v601 = vsub.s32 %v598, %v600
      %v602 = vrot.slane %v353, %v601
      %v603 = vcombine.high %v602, %v602
      %v604 = vsel %vm447, %v602, 0
      %v605 = vsel %vm447, %v603, 0
      %v606 = vadd.s32 %v604, %v605
      %v607 = vand.u32 %v606, 65535
      %v608 = vshrl.u32 %v606, 16
      %v609 = vcvt.s32.f32 %v607
      %v610 = vcvt.s32.f32 %v608
      %611 = vadd.xlane.f32.xlu0 %v609
      %v612 = vpop.xlane.xlu0 %611
      %613 = vadd.xlane.f32.xlu0 %v610
      %v614 = vpop.xlane.xlu0 %613
      %v615 = vcvt.f32.s32 %v612
      %v616 = vcvt.f32.s32 %v614
      %v617 = vshll.u32 %v616, 16
      %v618 = vadd.s32 %v617, %v615
      %v619 = vmul.u32 %v618, 3
      %vm620 = vcmp.lt.s32.totalorder %v619, 256
      %v621 = vsel %vm620, %v619, 256
      %vm622 = vmxor %vm338, 1
      %vm623 = vmxor %vm339, 1
      %v624 = vsel %vm622, 1, 0
      %v625 = vsel %vm623, 1, 0
      %v626 = vcombine.low %v624, %v625
      %v628 = vunpack.c.l.s4 1983009808
      %v629 = vunpack.c.0.s8 %v628
      %v630 = vlaneseq
      %v631 = vshrl.u32 %v630, 7
      %v632 = vsub.s32 %v629, %v631
      %v633 = vrot.slane %v626, %v632
      %vm634 = vcmp.ne.s32.totalorder %v633, 0
      %vm635 = vmor %vm352, %vm634
      %v636 = vmax.f32 %v595, 0.0
      %v637 = vsel %vm635, 0.0, %v636
      %v640 = vunpack.c.l.s4 1983009808
      %v641 = vunpack.c.0.s8 %v640
      %v642 = vlaneseq
      %v643 = vshrl.u32 %v642, 7
      %v644 = vsub.s32 %v641, %v643
      %v645 = vrot.slane %v637, %v644
      %v646 = vcombine.high %v645, %v645
      %vm647 = vcmp.ge.s32.totalorder %v645, 1073741824
      %vm648 = vcmp.ge.s32.totalorder %v646, 1073741824
      %v649 = vsel %vm647, 1, 0
      %v650 = vsel %vm648, 1, 0
      %v651 = vsel %vm447, %v649, 0
      %v652 = vsel %vm447, %v650, 0
      %v653 = vadd.s32 %v651, %v652
      %v654 = vand.u32 %v653, 65535
      %v655 = vshrl.u32 %v653, 16
      %v656 = vcvt.s32.f32 %v654
      %v657 = vcvt.s32.f32 %v655
      %658 = vadd.xlane.f32.xlu0 %v656
      %v659 = vpop.xlane.xlu0 %658
      %660 = vadd.xlane.f32.xlu0 %v657
      %v661 = vpop.xlane.xlu0 %660
      %v662 = vcvt.f32.s32 %v659
      %v663 = vcvt.f32.s32 %v661
      %v664 = vshll.u32 %v663, 16
      %v665 = vadd.s32 %v664, %v662
      %vm666 = vcmp.ge.s32.totalorder %v665, %v621
      %v667 = vsel %vm666, 1073741824, 0
      %v668 = vor.u32 %v667, 268435456
      %vm669 = vcmp.ge.s32.totalorder %v645, %v668
      %vm670 = vcmp.ge.s32.totalorder %v646, %v668
      %v671 = vsel %vm669, 1, 0
      %v672 = vsel %vm670, 1, 0
      %v673 = vsel %vm447, %v671, 0
      %v674 = vsel %vm447, %v672, 0
      %v675 = vadd.s32 %v673, %v674
      %v676 = vand.u32 %v675, 65535
      %v677 = vshrl.u32 %v675, 16
      %v678 = vcvt.s32.f32 %v676
      %v679 = vcvt.s32.f32 %v677
      %680 = vadd.xlane.f32.xlu0 %v678
      %v681 = vpop.xlane.xlu0 %680
      %682 = vadd.xlane.f32.xlu0 %v679
      %v683 = vpop.xlane.xlu0 %682
      %v684 = vcvt.f32.s32 %v681
      %v685 = vcvt.f32.s32 %v683
      %v686 = vshll.u32 %v685, 16
      %v687 = vadd.s32 %v686, %v684
      %vm688 = vcmp.ge.s32.totalorder %v687, %v621
      %v689 = vsel %vm688, 1, 0
      %v690 = vor.u32 %v667, 536870912
      %vm691 = vcmp.ge.s32.totalorder %v645, %v690
      %vm692 = vcmp.ge.s32.totalorder %v646, %v690
      %v693 = vsel %vm691, 1, 0
      %v694 = vsel %vm692, 1, 0
      %v695 = vsel %vm447, %v693, 0
      %v696 = vsel %vm447, %v694, 0
      %v697 = vadd.s32 %v695, %v696
      %v698 = vand.u32 %v697, 65535
      %v699 = vshrl.u32 %v697, 16
      %v700 = vcvt.s32.f32 %v698
      %v701 = vcvt.s32.f32 %v699
      %702 = vadd.xlane.f32.xlu0 %v700
      %v703 = vpop.xlane.xlu0 %702
      %704 = vadd.xlane.f32.xlu0 %v701
      %v705 = vpop.xlane.xlu0 %704
      %v706 = vcvt.f32.s32 %v703
      %v707 = vcvt.f32.s32 %v705
      %v708 = vshll.u32 %v707, 16
      %v709 = vadd.s32 %v708, %v706
      %vm710 = vcmp.ge.s32.totalorder %v709, %v621
      %v711 = vsel %vm710, 1, 0
      %v712 = vadd.s32 %v689, %v711
      %v713 = vor.u32 %v667, 805306368
      %vm714 = vcmp.ge.s32.totalorder %v645, %v713
      %vm715 = vcmp.ge.s32.totalorder %v646, %v713
      %v716 = vsel %vm714, 1, 0
      %v717 = vsel %vm715, 1, 0
      %v718 = vsel %vm447, %v716, 0
      %v719 = vsel %vm447, %v717, 0
      %v720 = vadd.s32 %v718, %v719
      %v721 = vand.u32 %v720, 65535
      %v722 = vshrl.u32 %v720, 16
      %v723 = vcvt.s32.f32 %v721
      %v724 = vcvt.s32.f32 %v722
      %725 = vadd.xlane.f32.xlu0 %v723
      %v726 = vpop.xlane.xlu0 %725
      %727 = vadd.xlane.f32.xlu0 %v724
      %v728 = vpop.xlane.xlu0 %727
      %v729 = vcvt.f32.s32 %v726
      %v730 = vcvt.f32.s32 %v728
      %v731 = vshll.u32 %v730, 16
      %v732 = vadd.s32 %v731, %v729
      %vm733 = vcmp.ge.s32.totalorder %v732, %v621
      %v734 = vsel %vm733, 1, 0
      %v735 = vadd.s32 %v712, %v734
      %v736 = vshll.u32 %v735, 28
      %v737 = vadd.s32 %v667, %v736
      %v738 = vor.u32 %v737, 67108864
      %vm739 = vcmp.ge.s32.totalorder %v645, %v738
      %vm740 = vcmp.ge.s32.totalorder %v646, %v738
      %v741 = vsel %vm739, 1, 0
      %v742 = vsel %vm740, 1, 0
      %v743 = vsel %vm447, %v741, 0
      %v744 = vsel %vm447, %v742, 0
      %v745 = vadd.s32 %v743, %v744
      %v746 = vand.u32 %v745, 65535
      %v747 = vshrl.u32 %v745, 16
      %v748 = vcvt.s32.f32 %v746
      %v749 = vcvt.s32.f32 %v747
      %750 = vadd.xlane.f32.xlu0 %v748
      %v751 = vpop.xlane.xlu0 %750
      %752 = vadd.xlane.f32.xlu0 %v749
      %v753 = vpop.xlane.xlu0 %752
      %v754 = vcvt.f32.s32 %v751
      %v755 = vcvt.f32.s32 %v753
      %v756 = vshll.u32 %v755, 16
      %v757 = vadd.s32 %v756, %v754
      %vm758 = vcmp.ge.s32.totalorder %v757, %v621
      %v759 = vsel %vm758, 1, 0
      %v760 = vor.u32 %v737, 134217728
      %vm761 = vcmp.ge.s32.totalorder %v645, %v760
      %vm762 = vcmp.ge.s32.totalorder %v646, %v760
      %v763 = vsel %vm761, 1, 0
      %v764 = vsel %vm762, 1, 0
      %v765 = vsel %vm447, %v763, 0
      %v766 = vsel %vm447, %v764, 0
      %v767 = vadd.s32 %v765, %v766
      %v768 = vand.u32 %v767, 65535
      %v769 = vshrl.u32 %v767, 16
      %v770 = vcvt.s32.f32 %v768
      %v771 = vcvt.s32.f32 %v769
      %772 = vadd.xlane.f32.xlu0 %v770
      %v773 = vpop.xlane.xlu0 %772
      %774 = vadd.xlane.f32.xlu0 %v771
      %v775 = vpop.xlane.xlu0 %774
      %v776 = vcvt.f32.s32 %v773
      %v777 = vcvt.f32.s32 %v775
      %v778 = vshll.u32 %v777, 16
      %v779 = vadd.s32 %v778, %v776
      %vm780 = vcmp.ge.s32.totalorder %v779, %v621
      %v781 = vsel %vm780, 1, 0
      %v782 = vadd.s32 %v759, %v781
      %v783 = vor.u32 %v737, 201326592
      %vm784 = vcmp.ge.s32.totalorder %v645, %v783
      %vm785 = vcmp.ge.s32.totalorder %v646, %v783
      %v786 = vsel %vm784, 1, 0
      %v787 = vsel %vm785, 1, 0
      %v788 = vsel %vm447, %v786, 0
      %v789 = vsel %vm447, %v787, 0
      %v790 = vadd.s32 %v788, %v789
      %v791 = vand.u32 %v790, 65535
      %v792 = vshrl.u32 %v790, 16
      %v793 = vcvt.s32.f32 %v791
      %v794 = vcvt.s32.f32 %v792
      %795 = vadd.xlane.f32.xlu0 %v793
      %v796 = vpop.xlane.xlu0 %795
      %797 = vadd.xlane.f32.xlu0 %v794
      %v798 = vpop.xlane.xlu0 %797
      %v799 = vcvt.f32.s32 %v796
      %v800 = vcvt.f32.s32 %v798
      %v801 = vshll.u32 %v800, 16
      %v802 = vadd.s32 %v801, %v799
      %vm803 = vcmp.ge.s32.totalorder %v802, %v621
      %v804 = vsel %vm803, 1, 0
      %v805 = vadd.s32 %v782, %v804
      %v806 = vshll.u32 %v805, 26
      %v807 = vadd.s32 %v737, %v806
      %v808 = vor.u32 %v807, 16777216
      %vm809 = vcmp.ge.s32.totalorder %v645, %v808
      %vm810 = vcmp.ge.s32.totalorder %v646, %v808
      %v811 = vsel %vm809, 1, 0
      %v812 = vsel %vm810, 1, 0
      %v813 = vsel %vm447, %v811, 0
      %v814 = vsel %vm447, %v812, 0
      %v815 = vadd.s32 %v813, %v814
      %v816 = vand.u32 %v815, 65535
      %v817 = vshrl.u32 %v815, 16
      %v818 = vcvt.s32.f32 %v816
      %v819 = vcvt.s32.f32 %v817
      %820 = vadd.xlane.f32.xlu0 %v818
      %v821 = vpop.xlane.xlu0 %820
      %822 = vadd.xlane.f32.xlu0 %v819
      %v823 = vpop.xlane.xlu0 %822
      %v824 = vcvt.f32.s32 %v821
      %v825 = vcvt.f32.s32 %v823
      %v826 = vshll.u32 %v825, 16
      %v827 = vadd.s32 %v826, %v824
      %vm828 = vcmp.ge.s32.totalorder %v827, %v621
      %v829 = vsel %vm828, 1, 0
      %v830 = vor.u32 %v807, 33554432
      %vm831 = vcmp.ge.s32.totalorder %v645, %v830
      %vm832 = vcmp.ge.s32.totalorder %v646, %v830
      %v833 = vsel %vm831, 1, 0
      %v834 = vsel %vm832, 1, 0
      %v835 = vsel %vm447, %v833, 0
      %v836 = vsel %vm447, %v834, 0
      %v837 = vadd.s32 %v835, %v836
      %v838 = vand.u32 %v837, 65535
      %v839 = vshrl.u32 %v837, 16
      %v840 = vcvt.s32.f32 %v838
      %v841 = vcvt.s32.f32 %v839
      %842 = vadd.xlane.f32.xlu0 %v840
      %v843 = vpop.xlane.xlu0 %842
      %844 = vadd.xlane.f32.xlu0 %v841
      %v845 = vpop.xlane.xlu0 %844
      %v846 = vcvt.f32.s32 %v843
      %v847 = vcvt.f32.s32 %v845
      %v848 = vshll.u32 %v847, 16
      %v849 = vadd.s32 %v848, %v846
      %vm850 = vcmp.ge.s32.totalorder %v849, %v621
      %v851 = vsel %vm850, 1, 0
      %v852 = vadd.s32 %v829, %v851
      %v853 = vor.u32 %v807, 50331648
      %vm854 = vcmp.ge.s32.totalorder %v645, %v853
      %vm855 = vcmp.ge.s32.totalorder %v646, %v853
      %v856 = vsel %vm854, 1, 0
      %v857 = vsel %vm855, 1, 0
      %v858 = vsel %vm447, %v856, 0
      %v859 = vsel %vm447, %v857, 0
      %v860 = vadd.s32 %v858, %v859
      %v861 = vand.u32 %v860, 65535
      %v862 = vshrl.u32 %v860, 16
      %v863 = vcvt.s32.f32 %v861
      %v864 = vcvt.s32.f32 %v862
      %865 = vadd.xlane.f32.xlu0 %v863
      %v866 = vpop.xlane.xlu0 %865
      %867 = vadd.xlane.f32.xlu0 %v864
      %v868 = vpop.xlane.xlu0 %867
      %v869 = vcvt.f32.s32 %v866
      %v870 = vcvt.f32.s32 %v868
      %v871 = vshll.u32 %v870, 16
      %v872 = vadd.s32 %v871, %v869
      %vm873 = vcmp.ge.s32.totalorder %v872, %v621
      %v874 = vsel %vm873, 1, 0
      %v875 = vadd.s32 %v852, %v874
      %v876 = vshll.u32 %v875, 24
      %v877 = vadd.s32 %v807, %v876
      %v878 = vor.u32 %v877, 4194304
      %vm879 = vcmp.ge.s32.totalorder %v645, %v878
      %vm880 = vcmp.ge.s32.totalorder %v646, %v878
      %v881 = vsel %vm879, 1, 0
      %v882 = vsel %vm880, 1, 0
      %v883 = vsel %vm447, %v881, 0
      %v884 = vsel %vm447, %v882, 0
      %v885 = vadd.s32 %v883, %v884
      %v886 = vand.u32 %v885, 65535
      %v887 = vshrl.u32 %v885, 16
      %v888 = vcvt.s32.f32 %v886
      %v889 = vcvt.s32.f32 %v887
      %890 = vadd.xlane.f32.xlu0 %v888
      %v891 = vpop.xlane.xlu0 %890
      %892 = vadd.xlane.f32.xlu0 %v889
      %v893 = vpop.xlane.xlu0 %892
      %v894 = vcvt.f32.s32 %v891
      %v895 = vcvt.f32.s32 %v893
      %v896 = vshll.u32 %v895, 16
      %v897 = vadd.s32 %v896, %v894
      %vm898 = vcmp.ge.s32.totalorder %v897, %v621
      %v899 = vsel %vm898, 1, 0
      %v900 = vor.u32 %v877, 8388608
      %vm901 = vcmp.ge.s32.totalorder %v645, %v900
      %vm902 = vcmp.ge.s32.totalorder %v646, %v900
      %v903 = vsel %vm901, 1, 0
      %v904 = vsel %vm902, 1, 0
      %v905 = vsel %vm447, %v903, 0
      %v906 = vsel %vm447, %v904, 0
      %v907 = vadd.s32 %v905, %v906
      %v908 = vand.u32 %v907, 65535
      %v909 = vshrl.u32 %v907, 16
      %v910 = vcvt.s32.f32 %v908
      %v911 = vcvt.s32.f32 %v909
      %912 = vadd.xlane.f32.xlu0 %v910
      %v913 = vpop.xlane.xlu0 %912
      %914 = vadd.xlane.f32.xlu0 %v911
      %v915 = vpop.xlane.xlu0 %914
      %v916 = vcvt.f32.s32 %v913
      %v917 = vcvt.f32.s32 %v915
      %v918 = vshll.u32 %v917, 16
      %v919 = vadd.s32 %v918, %v916
      %vm920 = vcmp.ge.s32.totalorder %v919, %v621
      %v921 = vsel %vm920, 1, 0
      %v922 = vadd.s32 %v899, %v921
      %v923 = vor.u32 %v877, 12582912
      %vm924 = vcmp.ge.s32.totalorder %v645, %v923
      %vm925 = vcmp.ge.s32.totalorder %v646, %v923
      %v926 = vsel %vm924, 1, 0
      %v927 = vsel %vm925, 1, 0
      %v928 = vsel %vm447, %v926, 0
      %v929 = vsel %vm447, %v927, 0
      %v930 = vadd.s32 %v928, %v929
      %v931 = vand.u32 %v930, 65535
      %v932 = vshrl.u32 %v930, 16
      %v933 = vcvt.s32.f32 %v931
      %v934 = vcvt.s32.f32 %v932
      %935 = vadd.xlane.f32.xlu0 %v933
      %v936 = vpop.xlane.xlu0 %935
      %937 = vadd.xlane.f32.xlu0 %v934
      %v938 = vpop.xlane.xlu0 %937
      %v939 = vcvt.f32.s32 %v936
      %v940 = vcvt.f32.s32 %v938
      %v941 = vshll.u32 %v940, 16
      %v942 = vadd.s32 %v941, %v939
      %vm943 = vcmp.ge.s32.totalorder %v942, %v621
      %v944 = vsel %vm943, 1, 0
      %v945 = vadd.s32 %v922, %v944
      %v946 = vshll.u32 %v945, 22
      %v947 = vadd.s32 %v877, %v946
      %v948 = vor.u32 %v947, 1048576
      %vm949 = vcmp.ge.s32.totalorder %v645, %v948
      %vm950 = vcmp.ge.s32.totalorder %v646, %v948
      %v951 = vsel %vm949, 1, 0
      %v952 = vsel %vm950, 1, 0
      %v953 = vsel %vm447, %v951, 0
      %v954 = vsel %vm447, %v952, 0
      %v955 = vadd.s32 %v953, %v954
      %v956 = vand.u32 %v955, 65535
      %v957 = vshrl.u32 %v955, 16
      %v958 = vcvt.s32.f32 %v956
      %v959 = vcvt.s32.f32 %v957
      %960 = vadd.xlane.f32.xlu0 %v958
      %v961 = vpop.xlane.xlu0 %960
      %962 = vadd.xlane.f32.xlu0 %v959
      %v963 = vpop.xlane.xlu0 %962
      %v964 = vcvt.f32.s32 %v961
      %v965 = vcvt.f32.s32 %v963
      %v966 = vshll.u32 %v965, 16
      %v967 = vadd.s32 %v966, %v964
      %vm968 = vcmp.ge.s32.totalorder %v967, %v621
      %v969 = vsel %vm968, 1, 0
      %v970 = vor.u32 %v947, 2097152
      %vm971 = vcmp.ge.s32.totalorder %v645, %v970
      %vm972 = vcmp.ge.s32.totalorder %v646, %v970
      %v973 = vsel %vm971, 1, 0
      %v974 = vsel %vm972, 1, 0
      %v975 = vsel %vm447, %v973, 0
      %v976 = vsel %vm447, %v974, 0
      %v977 = vadd.s32 %v975, %v976
      %v978 = vand.u32 %v977, 65535
      %v979 = vshrl.u32 %v977, 16
      %v980 = vcvt.s32.f32 %v978
      %v981 = vcvt.s32.f32 %v979
      %982 = vadd.xlane.f32.xlu0 %v980
      %v983 = vpop.xlane.xlu0 %982
      %984 = vadd.xlane.f32.xlu0 %v981
      %v985 = vpop.xlane.xlu0 %984
      %v986 = vcvt.f32.s32 %v983
      %v987 = vcvt.f32.s32 %v985
      %v988 = vshll.u32 %v987, 16
      %v989 = vadd.s32 %v988, %v986
      %vm990 = vcmp.ge.s32.totalorder %v989, %v621
      %v991 = vsel %vm990, 1, 0
      %v992 = vadd.s32 %v969, %v991
      %v993 = vor.u32 %v947, 3145728
      %vm994 = vcmp.ge.s32.totalorder %v645, %v993
      %vm995 = vcmp.ge.s32.totalorder %v646, %v993
      %v996 = vsel %vm994, 1, 0
      %v997 = vsel %vm995, 1, 0
      %v998 = vsel %vm447, %v996, 0
      %v999 = vsel %vm447, %v997, 0
      %v1000 = vadd.s32 %v998, %v999
      %v1001 = vand.u32 %v1000, 65535
      %v1002 = vshrl.u32 %v1000, 16
      %v1003 = vcvt.s32.f32 %v1001
      %v1004 = vcvt.s32.f32 %v1002
      %1005 = vadd.xlane.f32.xlu0 %v1003
      %v1006 = vpop.xlane.xlu0 %1005
      %1007 = vadd.xlane.f32.xlu0 %v1004
      %v1008 = vpop.xlane.xlu0 %1007
      %v1009 = vcvt.f32.s32 %v1006
      %v1010 = vcvt.f32.s32 %v1008
      %v1011 = vshll.u32 %v1010, 16
      %v1012 = vadd.s32 %v1011, %v1009
      %vm1013 = vcmp.ge.s32.totalorder %v1012, %v621
      %v1014 = vsel %vm1013, 1, 0
      %v1015 = vadd.s32 %v992, %v1014
      %v1016 = vshll.u32 %v1015, 20
      %v1017 = vadd.s32 %v947, %v1016
      %v1018 = vor.u32 %v1017, 262144
      %vm1019 = vcmp.ge.s32.totalorder %v645, %v1018
      %vm1020 = vcmp.ge.s32.totalorder %v646, %v1018
      %v1021 = vsel %vm1019, 1, 0
      %v1022 = vsel %vm1020, 1, 0
      %v1023 = vsel %vm447, %v1021, 0
      %v1024 = vsel %vm447, %v1022, 0
      %v1025 = vadd.s32 %v1023, %v1024
      %v1026 = vand.u32 %v1025, 65535
      %v1027 = vshrl.u32 %v1025, 16
      %v1028 = vcvt.s32.f32 %v1026
      %v1029 = vcvt.s32.f32 %v1027
      %1030 = vadd.xlane.f32.xlu0 %v1028
      %v1031 = vpop.xlane.xlu0 %1030
      %1032 = vadd.xlane.f32.xlu0 %v1029
      %v1033 = vpop.xlane.xlu0 %1032
      %v1034 = vcvt.f32.s32 %v1031
      %v1035 = vcvt.f32.s32 %v1033
      %v1036 = vshll.u32 %v1035, 16
      %v1037 = vadd.s32 %v1036, %v1034
      %vm1038 = vcmp.ge.s32.totalorder %v1037, %v621
      %v1039 = vsel %vm1038, 1, 0
      %v1040 = vor.u32 %v1017, 524288
      %vm1041 = vcmp.ge.s32.totalorder %v645, %v1040
      %vm1042 = vcmp.ge.s32.totalorder %v646, %v1040
      %v1043 = vsel %vm1041, 1, 0
      %v1044 = vsel %vm1042, 1, 0
      %v1045 = vsel %vm447, %v1043, 0
      %v1046 = vsel %vm447, %v1044, 0
      %v1047 = vadd.s32 %v1045, %v1046
      %v1048 = vand.u32 %v1047, 65535
      %v1049 = vshrl.u32 %v1047, 16
      %v1050 = vcvt.s32.f32 %v1048
      %v1051 = vcvt.s32.f32 %v1049
      %1052 = vadd.xlane.f32.xlu0 %v1050
      %v1053 = vpop.xlane.xlu0 %1052
      %1054 = vadd.xlane.f32.xlu0 %v1051
      %v1055 = vpop.xlane.xlu0 %1054
      %v1056 = vcvt.f32.s32 %v1053
      %v1057 = vcvt.f32.s32 %v1055
      %v1058 = vshll.u32 %v1057, 16
      %v1059 = vadd.s32 %v1058, %v1056
      %vm1060 = vcmp.ge.s32.totalorder %v1059, %v621
      %v1061 = vsel %vm1060, 1, 0
      %v1062 = vadd.s32 %v1039, %v1061
      %v1063 = vor.u32 %v1017, 786432
      %vm1064 = vcmp.ge.s32.totalorder %v645, %v1063
      %vm1065 = vcmp.ge.s32.totalorder %v646, %v1063
      %v1066 = vsel %vm1064, 1, 0
      %v1067 = vsel %vm1065, 1, 0
      %v1068 = vsel %vm447, %v1066, 0
      %v1069 = vsel %vm447, %v1067, 0
      %v1070 = vadd.s32 %v1068, %v1069
      %v1071 = vand.u32 %v1070, 65535
      %v1072 = vshrl.u32 %v1070, 16
      %v1073 = vcvt.s32.f32 %v1071
      %v1074 = vcvt.s32.f32 %v1072
      %1075 = vadd.xlane.f32.xlu0 %v1073
      %v1076 = vpop.xlane.xlu0 %1075
      %1077 = vadd.xlane.f32.xlu0 %v1074
      %v1078 = vpop.xlane.xlu0 %1077
      %v1079 = vcvt.f32.s32 %v1076
      %v1080 = vcvt.f32.s32 %v1078
      %v1081 = vshll.u32 %v1080, 16
      %v1082 = vadd.s32 %v1081, %v1079
      %vm1083 = vcmp.ge.s32.totalorder %v1082, %v621
      %v1084 = vsel %vm1083, 1, 0
      %v1085 = vadd.s32 %v1062, %v1084
      %v1086 = vshll.u32 %v1085, 18
      %v1087 = vadd.s32 %v1017, %v1086
      %v1088 = vor.u32 %v1087, 65536
      %vm1089 = vcmp.ge.s32.totalorder %v645, %v1088
      %vm1090 = vcmp.ge.s32.totalorder %v646, %v1088
      %v1091 = vsel %vm1089, 1, 0
      %v1092 = vsel %vm1090, 1, 0
      %v1093 = vsel %vm447, %v1091, 0
      %v1094 = vsel %vm447, %v1092, 0
      %v1095 = vadd.s32 %v1093, %v1094
      %v1096 = vand.u32 %v1095, 65535
      %v1097 = vshrl.u32 %v1095, 16
      %v1098 = vcvt.s32.f32 %v1096
      %v1099 = vcvt.s32.f32 %v1097
      %1100 = vadd.xlane.f32.xlu0 %v1098
      %v1101 = vpop.xlane.xlu0 %1100
      %1102 = vadd.xlane.f32.xlu0 %v1099
      %v1103 = vpop.xlane.xlu0 %1102
      %v1104 = vcvt.f32.s32 %v1101
      %v1105 = vcvt.f32.s32 %v1103
      %v1106 = vshll.u32 %v1105, 16
      %v1107 = vadd.s32 %v1106, %v1104
      %vm1108 = vcmp.ge.s32.totalorder %v1107, %v621
      %v1109 = vsel %vm1108, 1, 0
      %v1110 = vor.u32 %v1087, 131072
      %vm1111 = vcmp.ge.s32.totalorder %v645, %v1110
      %vm1112 = vcmp.ge.s32.totalorder %v646, %v1110
      %v1113 = vsel %vm1111, 1, 0
      %v1114 = vsel %vm1112, 1, 0
      %v1115 = vsel %vm447, %v1113, 0
      %v1116 = vsel %vm447, %v1114, 0
      %v1117 = vadd.s32 %v1115, %v1116
      %v1118 = vand.u32 %v1117, 65535
      %v1119 = vshrl.u32 %v1117, 16
      %v1120 = vcvt.s32.f32 %v1118
      %v1121 = vcvt.s32.f32 %v1119
      %1122 = vadd.xlane.f32.xlu0 %v1120
      %v1123 = vpop.xlane.xlu0 %1122
      %1124 = vadd.xlane.f32.xlu0 %v1121
      %v1125 = vpop.xlane.xlu0 %1124
      %v1126 = vcvt.f32.s32 %v1123
      %v1127 = vcvt.f32.s32 %v1125
      %v1128 = vshll.u32 %v1127, 16
      %v1129 = vadd.s32 %v1128, %v1126
      %vm1130 = vcmp.ge.s32.totalorder %v1129, %v621
      %v1131 = vsel %vm1130, 1, 0
      %v1132 = vadd.s32 %v1109, %v1131
      %v1133 = vor.u32 %v1087, 196608
      %vm1134 = vcmp.ge.s32.totalorder %v645, %v1133
      %vm1135 = vcmp.ge.s32.totalorder %v646, %v1133
      %v1136 = vsel %vm1134, 1, 0
      %v1137 = vsel %vm1135, 1, 0
      %v1138 = vsel %vm447, %v1136, 0
      %v1139 = vsel %vm447, %v1137, 0
      %v1140 = vadd.s32 %v1138, %v1139
      %v1141 = vand.u32 %v1140, 65535
      %v1142 = vshrl.u32 %v1140, 16
      %v1143 = vcvt.s32.f32 %v1141
      %v1144 = vcvt.s32.f32 %v1142
      %1145 = vadd.xlane.f32.xlu0 %v1143
      %v1146 = vpop.xlane.xlu0 %1145
      %1147 = vadd.xlane.f32.xlu0 %v1144
      %v1148 = vpop.xlane.xlu0 %1147
      %v1149 = vcvt.f32.s32 %v1146
      %v1150 = vcvt.f32.s32 %v1148
      %v1151 = vshll.u32 %v1150, 16
      %v1152 = vadd.s32 %v1151, %v1149
      %vm1153 = vcmp.ge.s32.totalorder %v1152, %v621
      %v1154 = vsel %vm1153, 1, 0
      %v1155 = vadd.s32 %v1132, %v1154
      %v1156 = vshll.u32 %v1155, 16
      %v1157 = vadd.s32 %v1087, %v1156
      %v1158 = vor.u32 %v1157, 16384
      %vm1159 = vcmp.ge.s32.totalorder %v645, %v1158
      %vm1160 = vcmp.ge.s32.totalorder %v646, %v1158
      %v1161 = vsel %vm1159, 1, 0
      %v1162 = vsel %vm1160, 1, 0
      %v1163 = vsel %vm447, %v1161, 0
      %v1164 = vsel %vm447, %v1162, 0
      %v1165 = vadd.s32 %v1163, %v1164
      %v1166 = vand.u32 %v1165, 65535
      %v1167 = vshrl.u32 %v1165, 16
      %v1168 = vcvt.s32.f32 %v1166
      %v1169 = vcvt.s32.f32 %v1167
      %1170 = vadd.xlane.f32.xlu0 %v1168
      %v1171 = vpop.xlane.xlu0 %1170
      %1172 = vadd.xlane.f32.xlu0 %v1169
      %v1173 = vpop.xlane.xlu0 %1172
      %v1174 = vcvt.f32.s32 %v1171
      %v1175 = vcvt.f32.s32 %v1173
      %v1176 = vshll.u32 %v1175, 16
      %v1177 = vadd.s32 %v1176, %v1174
      %vm1178 = vcmp.ge.s32.totalorder %v1177, %v621
      %v1179 = vsel %vm1178, 1, 0
      %v1180 = vor.u32 %v1157, 32768
      %vm1181 = vcmp.ge.s32.totalorder %v645, %v1180
      %vm1182 = vcmp.ge.s32.totalorder %v646, %v1180
      %v1183 = vsel %vm1181, 1, 0
      %v1184 = vsel %vm1182, 1, 0
      %v1185 = vsel %vm447, %v1183, 0
      %v1186 = vsel %vm447, %v1184, 0
      %v1187 = vadd.s32 %v1185, %v1186
      %v1188 = vand.u32 %v1187, 65535
      %v1189 = vshrl.u32 %v1187, 16
      %v1190 = vcvt.s32.f32 %v1188
      %v1191 = vcvt.s32.f32 %v1189
      %1192 = vadd.xlane.f32.xlu0 %v1190
      %v1193 = vpop.xlane.xlu0 %1192
      %1194 = vadd.xlane.f32.xlu0 %v1191
      %v1195 = vpop.xlane.xlu0 %1194
      %v1196 = vcvt.f32.s32 %v1193
      %v1197 = vcvt.f32.s32 %v1195
      %v1198 = vshll.u32 %v1197, 16
      %v1199 = vadd.s32 %v1198, %v1196
      %vm1200 = vcmp.ge.s32.totalorder %v1199, %v621
      %v1201 = vsel %vm1200, 1, 0
      %v1202 = vadd.s32 %v1179, %v1201
      %v1203 = vor.u32 %v1157, 49152
      %vm1204 = vcmp.ge.s32.totalorder %v645, %v1203
      %vm1205 = vcmp.ge.s32.totalorder %v646, %v1203
      %v1206 = vsel %vm1204, 1, 0
      %v1207 = vsel %vm1205, 1, 0
      %v1208 = vsel %vm447, %v1206, 0
      %v1209 = vsel %vm447, %v1207, 0
      %v1210 = vadd.s32 %v1208, %v1209
      %v1211 = vand.u32 %v1210, 65535
      %v1212 = vshrl.u32 %v1210, 16
      %v1213 = vcvt.s32.f32 %v1211
      %v1214 = vcvt.s32.f32 %v1212
      %1215 = vadd.xlane.f32.xlu0 %v1213
      %v1216 = vpop.xlane.xlu0 %1215
      %1217 = vadd.xlane.f32.xlu0 %v1214
      %v1218 = vpop.xlane.xlu0 %1217
      %v1219 = vcvt.f32.s32 %v1216
      %v1220 = vcvt.f32.s32 %v1218
      %v1221 = vshll.u32 %v1220, 16
      %v1222 = vadd.s32 %v1221, %v1219
      %vm1223 = vcmp.ge.s32.totalorder %v1222, %v621
      %v1224 = vsel %vm1223, 1, 0
      %v1225 = vadd.s32 %v1202, %v1224
      %v1226 = vshll.u32 %v1225, 14
      %v1227 = vadd.s32 %v1157, %v1226
      %v1228 = vor.u32 %v1227, 4096
      %vm1229 = vcmp.ge.s32.totalorder %v645, %v1228
      %vm1230 = vcmp.ge.s32.totalorder %v646, %v1228
      %v1231 = vsel %vm1229, 1, 0
      %v1232 = vsel %vm1230, 1, 0
      %v1233 = vsel %vm447, %v1231, 0
      %v1234 = vsel %vm447, %v1232, 0
      %v1235 = vadd.s32 %v1233, %v1234
      %v1236 = vand.u32 %v1235, 65535
      %v1237 = vshrl.u32 %v1235, 16
      %v1238 = vcvt.s32.f32 %v1236
      %v1239 = vcvt.s32.f32 %v1237
      %1240 = vadd.xlane.f32.xlu0 %v1238
      %v1241 = vpop.xlane.xlu0 %1240
      %1242 = vadd.xlane.f32.xlu0 %v1239
      %v1243 = vpop.xlane.xlu0 %1242
      %v1244 = vcvt.f32.s32 %v1241
      %v1245 = vcvt.f32.s32 %v1243
      %v1246 = vshll.u32 %v1245, 16
      %v1247 = vadd.s32 %v1246, %v1244
      %vm1248 = vcmp.ge.s32.totalorder %v1247, %v621
      %v1249 = vsel %vm1248, 1, 0
      %v1250 = vor.u32 %v1227, 8192
      %vm1251 = vcmp.ge.s32.totalorder %v645, %v1250
      %vm1252 = vcmp.ge.s32.totalorder %v646, %v1250
      %v1253 = vsel %vm1251, 1, 0
      %v1254 = vsel %vm1252, 1, 0
      %v1255 = vsel %vm447, %v1253, 0
      %v1256 = vsel %vm447, %v1254, 0
      %v1257 = vadd.s32 %v1255, %v1256
      %v1258 = vand.u32 %v1257, 65535
      %v1259 = vshrl.u32 %v1257, 16
      %v1260 = vcvt.s32.f32 %v1258
      %v1261 = vcvt.s32.f32 %v1259
      %1262 = vadd.xlane.f32.xlu0 %v1260
      %v1263 = vpop.xlane.xlu0 %1262
      %1264 = vadd.xlane.f32.xlu0 %v1261
      %v1265 = vpop.xlane.xlu0 %1264
      %v1266 = vcvt.f32.s32 %v1263
      %v1267 = vcvt.f32.s32 %v1265
      %v1268 = vshll.u32 %v1267, 16
      %v1269 = vadd.s32 %v1268, %v1266
      %vm1270 = vcmp.ge.s32.totalorder %v1269, %v621
      %v1271 = vsel %vm1270, 1, 0
      %v1272 = vadd.s32 %v1249, %v1271
      %v1273 = vor.u32 %v1227, 12288
      %vm1274 = vcmp.ge.s32.totalorder %v645, %v1273
      %vm1275 = vcmp.ge.s32.totalorder %v646, %v1273
      %v1276 = vsel %vm1274, 1, 0
      %v1277 = vsel %vm1275, 1, 0
      %v1278 = vsel %vm447, %v1276, 0
      %v1279 = vsel %vm447, %v1277, 0
      %v1280 = vadd.s32 %v1278, %v1279
      %v1281 = vand.u32 %v1280, 65535
      %v1282 = vshrl.u32 %v1280, 16
      %v1283 = vcvt.s32.f32 %v1281
      %v1284 = vcvt.s32.f32 %v1282
      %1285 = vadd.xlane.f32.xlu0 %v1283
      %v1286 = vpop.xlane.xlu0 %1285
      %1287 = vadd.xlane.f32.xlu0 %v1284
      %v1288 = vpop.xlane.xlu0 %1287
      %v1289 = vcvt.f32.s32 %v1286
      %v1290 = vcvt.f32.s32 %v1288
      %v1291 = vshll.u32 %v1290, 16
      %v1292 = vadd.s32 %v1291, %v1289
      %vm1293 = vcmp.ge.s32.totalorder %v1292, %v621
      %v1294 = vsel %vm1293, 1, 0
      %v1295 = vadd.s32 %v1272, %v1294
      %v1296 = vshll.u32 %v1295, 12
      %v1297 = vadd.s32 %v1227, %v1296
      %v1298 = vor.u32 %v1297, 1024
      %vm1299 = vcmp.ge.s32.totalorder %v645, %v1298
      %vm1300 = vcmp.ge.s32.totalorder %v646, %v1298
      %v1301 = vsel %vm1299, 1, 0
      %v1302 = vsel %vm1300, 1, 0
      %v1303 = vsel %vm447, %v1301, 0
      %v1304 = vsel %vm447, %v1302, 0
      %v1305 = vadd.s32 %v1303, %v1304
      %v1306 = vand.u32 %v1305, 65535
      %v1307 = vshrl.u32 %v1305, 16
      %v1308 = vcvt.s32.f32 %v1306
      %v1309 = vcvt.s32.f32 %v1307
      %1310 = vadd.xlane.f32.xlu0 %v1308
      %v1311 = vpop.xlane.xlu0 %1310
      %1312 = vadd.xlane.f32.xlu0 %v1309
      %v1313 = vpop.xlane.xlu0 %1312
      %v1314 = vcvt.f32.s32 %v1311
      %v1315 = vcvt.f32.s32 %v1313
      %v1316 = vshll.u32 %v1315, 16
      %v1317 = vadd.s32 %v1316, %v1314
      %vm1318 = vcmp.ge.s32.totalorder %v1317, %v621
      %v1319 = vsel %vm1318, 1, 0
      %v1320 = vor.u32 %v1297, 2048
      %vm1321 = vcmp.ge.s32.totalorder %v645, %v1320
      %vm1322 = vcmp.ge.s32.totalorder %v646, %v1320
      %v1323 = vsel %vm1321, 1, 0
      %v1324 = vsel %vm1322, 1, 0
      %v1325 = vsel %vm447, %v1323, 0
      %v1326 = vsel %vm447, %v1324, 0
      %v1327 = vadd.s32 %v1325, %v1326
      %v1328 = vand.u32 %v1327, 65535
      %v1329 = vshrl.u32 %v1327, 16
      %v1330 = vcvt.s32.f32 %v1328
      %v1331 = vcvt.s32.f32 %v1329
      %1332 = vadd.xlane.f32.xlu0 %v1330
      %v1333 = vpop.xlane.xlu0 %1332
      %1334 = vadd.xlane.f32.xlu0 %v1331
      %v1335 = vpop.xlane.xlu0 %1334
      %v1336 = vcvt.f32.s32 %v1333
      %v1337 = vcvt.f32.s32 %v1335
      %v1338 = vshll.u32 %v1337, 16
      %v1339 = vadd.s32 %v1338, %v1336
      %vm1340 = vcmp.ge.s32.totalorder %v1339, %v621
      %v1341 = vsel %vm1340, 1, 0
      %v1342 = vadd.s32 %v1319, %v1341
      %v1343 = vor.u32 %v1297, 3072
      %vm1344 = vcmp.ge.s32.totalorder %v645, %v1343
      %vm1345 = vcmp.ge.s32.totalorder %v646, %v1343
      %v1346 = vsel %vm1344, 1, 0
      %v1347 = vsel %vm1345, 1, 0
      %v1348 = vsel %vm447, %v1346, 0
      %v1349 = vsel %vm447, %v1347, 0
      %v1350 = vadd.s32 %v1348, %v1349
      %v1351 = vand.u32 %v1350, 65535
      %v1352 = vshrl.u32 %v1350, 16
      %v1353 = vcvt.s32.f32 %v1351
      %v1354 = vcvt.s32.f32 %v1352
      %1355 = vadd.xlane.f32.xlu0 %v1353
      %v1356 = vpop.xlane.xlu0 %1355
      %1357 = vadd.xlane.f32.xlu0 %v1354
      %v1358 = vpop.xlane.xlu0 %1357
      %v1359 = vcvt.f32.s32 %v1356
      %v1360 = vcvt.f32.s32 %v1358
      %v1361 = vshll.u32 %v1360, 16
      %v1362 = vadd.s32 %v1361, %v1359
      %vm1363 = vcmp.ge.s32.totalorder %v1362, %v621
      %v1364 = vsel %vm1363, 1, 0
      %v1365 = vadd.s32 %v1342, %v1364
      %v1366 = vshll.u32 %v1365, 10
      %v1367 = vadd.s32 %v1297, %v1366
      %v1368 = vor.u32 %v1367, 256
      %vm1369 = vcmp.ge.s32.totalorder %v645, %v1368
      %vm1370 = vcmp.ge.s32.totalorder %v646, %v1368
      %v1371 = vsel %vm1369, 1, 0
      %v1372 = vsel %vm1370, 1, 0
      %v1373 = vsel %vm447, %v1371, 0
      %v1374 = vsel %vm447, %v1372, 0
      %v1375 = vadd.s32 %v1373, %v1374
      %v1376 = vand.u32 %v1375, 65535
      %v1377 = vshrl.u32 %v1375, 16
      %v1378 = vcvt.s32.f32 %v1376
      %v1379 = vcvt.s32.f32 %v1377
      %1380 = vadd.xlane.f32.xlu0 %v1378
      %v1381 = vpop.xlane.xlu0 %1380
      %1382 = vadd.xlane.f32.xlu0 %v1379
      %v1383 = vpop.xlane.xlu0 %1382
      %v1384 = vcvt.f32.s32 %v1381
      %v1385 = vcvt.f32.s32 %v1383
      %v1386 = vshll.u32 %v1385, 16
      %v1387 = vadd.s32 %v1386, %v1384
      %vm1388 = vcmp.ge.s32.totalorder %v1387, %v621
      %v1389 = vsel %vm1388, 1, 0
      %v1390 = vor.u32 %v1367, 512
      %vm1391 = vcmp.ge.s32.totalorder %v645, %v1390
      %vm1392 = vcmp.ge.s32.totalorder %v646, %v1390
      %v1393 = vsel %vm1391, 1, 0
      %v1394 = vsel %vm1392, 1, 0
      %v1395 = vsel %vm447, %v1393, 0
      %v1396 = vsel %vm447, %v1394, 0
      %v1397 = vadd.s32 %v1395, %v1396
      %v1398 = vand.u32 %v1397, 65535
      %v1399 = vshrl.u32 %v1397, 16
      %v1400 = vcvt.s32.f32 %v1398
      %v1401 = vcvt.s32.f32 %v1399
      %1402 = vadd.xlane.f32.xlu0 %v1400
      %v1403 = vpop.xlane.xlu0 %1402
      %1404 = vadd.xlane.f32.xlu0 %v1401
      %v1405 = vpop.xlane.xlu0 %1404
      %v1406 = vcvt.f32.s32 %v1403
      %v1407 = vcvt.f32.s32 %v1405
      %v1408 = vshll.u32 %v1407, 16
      %v1409 = vadd.s32 %v1408, %v1406
      %vm1410 = vcmp.ge.s32.totalorder %v1409, %v621
      %v1411 = vsel %vm1410, 1, 0
      %v1412 = vadd.s32 %v1389, %v1411
      %v1413 = vor.u32 %v1367, 768
      %vm1414 = vcmp.ge.s32.totalorder %v645, %v1413
      %vm1415 = vcmp.ge.s32.totalorder %v646, %v1413
      %v1416 = vsel %vm1414, 1, 0
      %v1417 = vsel %vm1415, 1, 0
      %v1418 = vsel %vm447, %v1416, 0
      %v1419 = vsel %vm447, %v1417, 0
      %v1420 = vadd.s32 %v1418, %v1419
      %v1421 = vand.u32 %v1420, 65535
      %v1422 = vshrl.u32 %v1420, 16
      %v1423 = vcvt.s32.f32 %v1421
      %v1424 = vcvt.s32.f32 %v1422
      %1425 = vadd.xlane.f32.xlu0 %v1423
      %v1426 = vpop.xlane.xlu0 %1425
      %1427 = vadd.xlane.f32.xlu0 %v1424
      %v1428 = vpop.xlane.xlu0 %1427
      %v1429 = vcvt.f32.s32 %v1426
      %v1430 = vcvt.f32.s32 %v1428
      %v1431 = vshll.u32 %v1430, 16
      %v1432 = vadd.s32 %v1431, %v1429
      %vm1433 = vcmp.ge.s32.totalorder %v1432, %v621
      %v1434 = vsel %vm1433, 1, 0
      %v1435 = vadd.s32 %v1412, %v1434
      %v1436 = vshll.u32 %v1435, 8
      %v1437 = vadd.s32 %v1367, %v1436
      %v1438 = vor.u32 %v1437, 64
      %vm1439 = vcmp.ge.s32.totalorder %v645, %v1438
      %vm1440 = vcmp.ge.s32.totalorder %v646, %v1438
      %v1441 = vsel %vm1439, 1, 0
      %v1442 = vsel %vm1440, 1, 0
      %v1443 = vsel %vm447, %v1441, 0
      %v1444 = vsel %vm447, %v1442, 0
      %v1445 = vadd.s32 %v1443, %v1444
      %v1446 = vand.u32 %v1445, 65535
      %v1447 = vshrl.u32 %v1445, 16
      %v1448 = vcvt.s32.f32 %v1446
      %v1449 = vcvt.s32.f32 %v1447
      %1450 = vadd.xlane.f32.xlu0 %v1448
      %v1451 = vpop.xlane.xlu0 %1450
      %1452 = vadd.xlane.f32.xlu0 %v1449
      %v1453 = vpop.xlane.xlu0 %1452
      %v1454 = vcvt.f32.s32 %v1451
      %v1455 = vcvt.f32.s32 %v1453
      %v1456 = vshll.u32 %v1455, 16
      %v1457 = vadd.s32 %v1456, %v1454
      %vm1458 = vcmp.ge.s32.totalorder %v1457, %v621
      %v1459 = vsel %vm1458, 1, 0
      %v1460 = vor.u32 %v1437, 128
      %vm1461 = vcmp.ge.s32.totalorder %v645, %v1460
      %vm1462 = vcmp.ge.s32.totalorder %v646, %v1460
      %v1463 = vsel %vm1461, 1, 0
      %v1464 = vsel %vm1462, 1, 0
      %v1465 = vsel %vm447, %v1463, 0
      %v1466 = vsel %vm447, %v1464, 0
      %v1467 = vadd.s32 %v1465, %v1466
      %v1468 = vand.u32 %v1467, 65535
      %v1469 = vshrl.u32 %v1467, 16
      %v1470 = vcvt.s32.f32 %v1468
      %v1471 = vcvt.s32.f32 %v1469
      %1472 = vadd.xlane.f32.xlu0 %v1470
      %v1473 = vpop.xlane.xlu0 %1472
      %1474 = vadd.xlane.f32.xlu0 %v1471
      %v1475 = vpop.xlane.xlu0 %1474
      %v1476 = vcvt.f32.s32 %v1473
      %v1477 = vcvt.f32.s32 %v1475
      %v1478 = vshll.u32 %v1477, 16
      %v1479 = vadd.s32 %v1478, %v1476
      %vm1480 = vcmp.ge.s32.totalorder %v1479, %v621
      %v1481 = vsel %vm1480, 1, 0
      %v1482 = vadd.s32 %v1459, %v1481
      %v1483 = vor.u32 %v1437, 192
      %vm1484 = vcmp.ge.s32.totalorder %v645, %v1483
      %vm1485 = vcmp.ge.s32.totalorder %v646, %v1483
      %v1486 = vsel %vm1484, 1, 0
      %v1487 = vsel %vm1485, 1, 0
      %v1488 = vsel %vm447, %v1486, 0
      %v1489 = vsel %vm447, %v1487, 0
      %v1490 = vadd.s32 %v1488, %v1489
      %v1491 = vand.u32 %v1490, 65535
      %v1492 = vshrl.u32 %v1490, 16
      %v1493 = vcvt.s32.f32 %v1491
      %v1494 = vcvt.s32.f32 %v1492
      %1495 = vadd.xlane.f32.xlu0 %v1493
      %v1496 = vpop.xlane.xlu0 %1495
      %1497 = vadd.xlane.f32.xlu0 %v1494
      %v1498 = vpop.xlane.xlu0 %1497
      %v1499 = vcvt.f32.s32 %v1496
      %v1500 = vcvt.f32.s32 %v1498
      %v1501 = vshll.u32 %v1500, 16
      %v1502 = vadd.s32 %v1501, %v1499
      %vm1503 = vcmp.ge.s32.totalorder %v1502, %v621
      %v1504 = vsel %vm1503, 1, 0
      %v1505 = vadd.s32 %v1482, %v1504
      %v1506 = vshll.u32 %v1505, 6
      %v1507 = vadd.s32 %v1437, %v1506
      %v1508 = vor.u32 %v1507, 16
      %vm1509 = vcmp.ge.s32.totalorder %v645, %v1508
      %vm1510 = vcmp.ge.s32.totalorder %v646, %v1508
      %v1511 = vsel %vm1509, 1, 0
      %v1512 = vsel %vm1510, 1, 0
      %v1513 = vsel %vm447, %v1511, 0
      %v1514 = vsel %vm447, %v1512, 0
      %v1515 = vadd.s32 %v1513, %v1514
      %v1516 = vand.u32 %v1515, 65535
      %v1517 = vshrl.u32 %v1515, 16
      %v1518 = vcvt.s32.f32 %v1516
      %v1519 = vcvt.s32.f32 %v1517
      %1520 = vadd.xlane.f32.xlu0 %v1518
      %v1521 = vpop.xlane.xlu0 %1520
      %1522 = vadd.xlane.f32.xlu0 %v1519
      %v1523 = vpop.xlane.xlu0 %1522
      %v1524 = vcvt.f32.s32 %v1521
      %v1525 = vcvt.f32.s32 %v1523
      %v1526 = vshll.u32 %v1525, 16
      %v1527 = vadd.s32 %v1526, %v1524
      %vm1528 = vcmp.ge.s32.totalorder %v1527, %v621
      %v1529 = vsel %vm1528, 1, 0
      %v1530 = vor.u32 %v1507, 32
      %vm1531 = vcmp.ge.s32.totalorder %v645, %v1530
      %vm1532 = vcmp.ge.s32.totalorder %v646, %v1530
      %v1533 = vsel %vm1531, 1, 0
      %v1534 = vsel %vm1532, 1, 0
      %v1535 = vsel %vm447, %v1533, 0
      %v1536 = vsel %vm447, %v1534, 0
      %v1537 = vadd.s32 %v1535, %v1536
      %v1538 = vand.u32 %v1537, 65535
      %v1539 = vshrl.u32 %v1537, 16
      %v1540 = vcvt.s32.f32 %v1538
      %v1541 = vcvt.s32.f32 %v1539
      %1542 = vadd.xlane.f32.xlu0 %v1540
      %v1543 = vpop.xlane.xlu0 %1542
      %1544 = vadd.xlane.f32.xlu0 %v1541
      %v1545 = vpop.xlane.xlu0 %1544
      %v1546 = vcvt.f32.s32 %v1543
      %v1547 = vcvt.f32.s32 %v1545
      %v1548 = vshll.u32 %v1547, 16
      %v1549 = vadd.s32 %v1548, %v1546
      %vm1550 = vcmp.ge.s32.totalorder %v1549, %v621
      %v1551 = vsel %vm1550, 1, 0
      %v1552 = vadd.s32 %v1529, %v1551
      %v1553 = vor.u32 %v1507, 48
      %vm1554 = vcmp.ge.s32.totalorder %v645, %v1553
      %vm1555 = vcmp.ge.s32.totalorder %v646, %v1553
      %v1556 = vsel %vm1554, 1, 0
      %v1557 = vsel %vm1555, 1, 0
      %v1558 = vsel %vm447, %v1556, 0
      %v1559 = vsel %vm447, %v1557, 0
      %v1560 = vadd.s32 %v1558, %v1559
      %v1561 = vand.u32 %v1560, 65535
      %v1562 = vshrl.u32 %v1560, 16
      %v1563 = vcvt.s32.f32 %v1561
      %v1564 = vcvt.s32.f32 %v1562
      %1565 = vadd.xlane.f32.xlu0 %v1563
      %v1566 = vpop.xlane.xlu0 %1565
      %1567 = vadd.xlane.f32.xlu0 %v1564
      %v1568 = vpop.xlane.xlu0 %1567
      %v1569 = vcvt.f32.s32 %v1566
      %v1570 = vcvt.f32.s32 %v1568
      %v1571 = vshll.u32 %v1570, 16
      %v1572 = vadd.s32 %v1571, %v1569
      %vm1573 = vcmp.ge.s32.totalorder %v1572, %v621
      %v1574 = vsel %vm1573, 1, 0
      %v1575 = vadd.s32 %v1552, %v1574
      %v1576 = vshll.u32 %v1575, 4
      %v1577 = vadd.s32 %v1507, %v1576
      %v1578 = vor.u32 %v1577, 4
      %vm1579 = vcmp.ge.s32.totalorder %v645, %v1578
      %vm1580 = vcmp.ge.s32.totalorder %v646, %v1578
      %v1581 = vsel %vm1579, 1, 0
      %v1582 = vsel %vm1580, 1, 0
      %v1583 = vsel %vm447, %v1581, 0
      %v1584 = vsel %vm447, %v1582, 0
      %v1585 = vadd.s32 %v1583, %v1584
      %v1586 = vand.u32 %v1585, 65535
      %v1587 = vshrl.u32 %v1585, 16
      %v1588 = vcvt.s32.f32 %v1586
      %v1589 = vcvt.s32.f32 %v1587
      %1590 = vadd.xlane.f32.xlu0 %v1588
      %v1591 = vpop.xlane.xlu0 %1590
      %1592 = vadd.xlane.f32.xlu0 %v1589
      %v1593 = vpop.xlane.xlu0 %1592
      %v1594 = vcvt.f32.s32 %v1591
      %v1595 = vcvt.f32.s32 %v1593
      %v1596 = vshll.u32 %v1595, 16
      %v1597 = vadd.s32 %v1596, %v1594
      %vm1598 = vcmp.ge.s32.totalorder %v1597, %v621
      %v1599 = vsel %vm1598, 1, 0
      %v1600 = vor.u32 %v1577, 8
      %vm1601 = vcmp.ge.s32.totalorder %v645, %v1600
      %vm1602 = vcmp.ge.s32.totalorder %v646, %v1600
      %v1603 = vsel %vm1601, 1, 0
      %v1604 = vsel %vm1602, 1, 0
      %v1605 = vsel %vm447, %v1603, 0
      %v1606 = vsel %vm447, %v1604, 0
      %v1607 = vadd.s32 %v1605, %v1606
      %v1608 = vand.u32 %v1607, 65535
      %v1609 = vshrl.u32 %v1607, 16
      %v1610 = vcvt.s32.f32 %v1608
      %v1611 = vcvt.s32.f32 %v1609
      %1612 = vadd.xlane.f32.xlu0 %v1610
      %v1613 = vpop.xlane.xlu0 %1612
      %1614 = vadd.xlane.f32.xlu0 %v1611
      %v1615 = vpop.xlane.xlu0 %1614
      %v1616 = vcvt.f32.s32 %v1613
      %v1617 = vcvt.f32.s32 %v1615
      %v1618 = vshll.u32 %v1617, 16
      %v1619 = vadd.s32 %v1618, %v1616
      %vm1620 = vcmp.ge.s32.totalorder %v1619, %v621
      %v1621 = vsel %vm1620, 1, 0
      %v1622 = vadd.s32 %v1599, %v1621
      %v1623 = vor.u32 %v1577, 12
      %vm1624 = vcmp.ge.s32.totalorder %v645, %v1623
      %vm1625 = vcmp.ge.s32.totalorder %v646, %v1623
      %v1626 = vsel %vm1624, 1, 0
      %v1627 = vsel %vm1625, 1, 0
      %v1628 = vsel %vm447, %v1626, 0
      %v1629 = vsel %vm447, %v1627, 0
      %v1630 = vadd.s32 %v1628, %v1629
      %v1631 = vand.u32 %v1630, 65535
      %v1632 = vshrl.u32 %v1630, 16
      %v1633 = vcvt.s32.f32 %v1631
      %v1634 = vcvt.s32.f32 %v1632
      %1635 = vadd.xlane.f32.xlu0 %v1633
      %v1636 = vpop.xlane.xlu0 %1635
      %1637 = vadd.xlane.f32.xlu0 %v1634
      %v1638 = vpop.xlane.xlu0 %1637
      %v1639 = vcvt.f32.s32 %v1636
      %v1640 = vcvt.f32.s32 %v1638
      %v1641 = vshll.u32 %v1640, 16
      %v1642 = vadd.s32 %v1641, %v1639
      %vm1643 = vcmp.ge.s32.totalorder %v1642, %v621
      %v1644 = vsel %vm1643, 1, 0
      %v1645 = vadd.s32 %v1622, %v1644
      %v1646 = vshll.u32 %v1645, 2
      %v1647 = vadd.s32 %v1577, %v1646
      %v1648 = vor.u32 %v1647, 1
      %vm1649 = vcmp.ge.s32.totalorder %v645, %v1648
      %vm1650 = vcmp.ge.s32.totalorder %v646, %v1648
      %v1651 = vsel %vm1649, 1, 0
      %v1652 = vsel %vm1650, 1, 0
      %v1653 = vsel %vm447, %v1651, 0
      %v1654 = vsel %vm447, %v1652, 0
      %v1655 = vadd.s32 %v1653, %v1654
      %v1656 = vand.u32 %v1655, 65535
      %v1657 = vshrl.u32 %v1655, 16
      %v1658 = vcvt.s32.f32 %v1656
      %v1659 = vcvt.s32.f32 %v1657
      %1660 = vadd.xlane.f32.xlu0 %v1658
      %v1661 = vpop.xlane.xlu0 %1660
      %1662 = vadd.xlane.f32.xlu0 %v1659
      %v1663 = vpop.xlane.xlu0 %1662
      %v1664 = vcvt.f32.s32 %v1661
      %v1665 = vcvt.f32.s32 %v1663
      %v1666 = vshll.u32 %v1665, 16
      %v1667 = vadd.s32 %v1666, %v1664
      %vm1668 = vcmp.ge.s32.totalorder %v1667, %v621
      %v1669 = vsel %vm1668, 1, 0
      %v1670 = vor.u32 %v1647, 2
      %vm1671 = vcmp.ge.s32.totalorder %v645, %v1670
      %vm1672 = vcmp.ge.s32.totalorder %v646, %v1670
      %v1673 = vsel %vm1671, 1, 0
      %v1674 = vsel %vm1672, 1, 0
      %v1675 = vsel %vm447, %v1673, 0
      %v1676 = vsel %vm447, %v1674, 0
      %v1677 = vadd.s32 %v1675, %v1676
      %v1678 = vand.u32 %v1677, 65535
      %v1679 = vshrl.u32 %v1677, 16
      %v1680 = vcvt.s32.f32 %v1678
      %v1681 = vcvt.s32.f32 %v1679
      %1682 = vadd.xlane.f32.xlu0 %v1680
      %v1683 = vpop.xlane.xlu0 %1682
      %1684 = vadd.xlane.f32.xlu0 %v1681
      %v1685 = vpop.xlane.xlu0 %1684
      %v1686 = vcvt.f32.s32 %v1683
      %v1687 = vcvt.f32.s32 %v1685
      %v1688 = vshll.u32 %v1687, 16
      %v1689 = vadd.s32 %v1688, %v1686
      %vm1690 = vcmp.ge.s32.totalorder %v1689, %v621
      %v1691 = vsel %vm1690, 1, 0
      %v1692 = vadd.s32 %v1669, %v1691
      %v1693 = vor.u32 %v1647, 3
      %vm1694 = vcmp.ge.s32.totalorder %v645, %v1693
      %vm1695 = vcmp.ge.s32.totalorder %v646, %v1693
      %v1696 = vsel %vm1694, 1, 0
      %v1697 = vsel %vm1695, 1, 0
      %v1698 = vsel %vm447, %v1696, 0
      %v1699 = vsel %vm447, %v1697, 0
      %v1700 = vadd.s32 %v1698, %v1699
      %v1701 = vand.u32 %v1700, 65535
      %v1702 = vshrl.u32 %v1700, 16
      %v1703 = vcvt.s32.f32 %v1701
      %v1704 = vcvt.s32.f32 %v1702
      %1705 = vadd.xlane.f32.xlu0 %v1703
      %v1706 = vpop.xlane.xlu0 %1705
      %1707 = vadd.xlane.f32.xlu0 %v1704
      %v1708 = vpop.xlane.xlu0 %1707
      %v1709 = vcvt.f32.s32 %v1706
      %v1710 = vcvt.f32.s32 %v1708
      %v1711 = vshll.u32 %v1710, 16
      %v1712 = vadd.s32 %v1711, %v1709
      %vm1713 = vcmp.ge.s32.totalorder %v1712, %v621
      %v1714 = vsel %vm1713, 1, 0
      %v1715 = vadd.s32 %v1692, %v1714
      %v1716 = vadd.s32 %v1647, %v1715
      %vm1717 = vcmp.gt.s32.totalorder %v645, %v1716
      %vm1718 = vcmp.gt.s32.totalorder %v646, %v1716
      %vm1719 = vcmp.eq.s32.totalorder %v645, %v1716
      %vm1720 = vcmp.eq.s32.totalorder %v646, %v1716
      %v1721 = vsel %vm1717, 1, 0
      %v1722 = vsel %vm1718, 1, 0
      %v1723 = vsel %vm447, %v1721, 0
      %v1724 = vsel %vm447, %v1722, 0
      %v1725 = vadd.s32 %v1723, %v1724
      %v1726 = vand.u32 %v1725, 65535
      %v1727 = vshrl.u32 %v1725, 16
      %v1728 = vcvt.s32.f32 %v1726
      %v1729 = vcvt.s32.f32 %v1727
      %1730 = vadd.xlane.f32.xlu0 %v1728
      %v1731 = vpop.xlane.xlu0 %1730
      %1732 = vadd.xlane.f32.xlu0 %v1729
      %v1733 = vpop.xlane.xlu0 %1732
      %v1734 = vcvt.f32.s32 %v1731
      %v1735 = vcvt.f32.s32 %v1733
      %v1736 = vshll.u32 %v1735, 16
      %v1737 = vadd.s32 %v1736, %v1734
      %v1738 = vsub.s32 %v621, %v1737
      %vm1739 = vcmp.lt.s32.totalorder %v336, 64
      %vm1740 = vcmp.lt.s32.totalorder %v337, 64
      %vm1741 = vmand %vm1719, %vm1739
      %vm1742 = vmand %vm1720, %vm1740
      %v1743 = vsel %vm1741, 1, 0
      %v1744 = vsel %vm1742, 1, 0
      %v1745 = vsel %vm447, %v1743, 0
      %v1746 = vsel %vm447, %v1744, 0
      %v1747 = vadd.s32 %v1745, %v1746
      %v1748 = vand.u32 %v1747, 65535
      %v1749 = vshrl.u32 %v1747, 16
      %v1750 = vcvt.s32.f32 %v1748
      %v1751 = vcvt.s32.f32 %v1749
      %1752 = vadd.xlane.f32.xlu0 %v1750
      %v1753 = vpop.xlane.xlu0 %1752
      %1754 = vadd.xlane.f32.xlu0 %v1751
      %v1755 = vpop.xlane.xlu0 %1754
      %v1756 = vcvt.f32.s32 %v1753
      %v1757 = vcvt.f32.s32 %v1755
      %v1758 = vshll.u32 %v1757, 16
      %v1759 = vadd.s32 %v1758, %v1756
      %vm1760 = vcmp.lt.s32.totalorder %v1759, %v1738
      %v1761 = vsel %vm1760, 1, 0
      %vm1762 = vcmp.lt.s32.totalorder %v336, 128
      %vm1763 = vcmp.lt.s32.totalorder %v337, 128
      %vm1764 = vmand %vm1719, %vm1762
      %vm1765 = vmand %vm1720, %vm1763
      %v1766 = vsel %vm1764, 1, 0
      %v1767 = vsel %vm1765, 1, 0
      %v1768 = vsel %vm447, %v1766, 0
      %v1769 = vsel %vm447, %v1767, 0
      %v1770 = vadd.s32 %v1768, %v1769
      %v1771 = vand.u32 %v1770, 65535
      %v1772 = vshrl.u32 %v1770, 16
      %v1773 = vcvt.s32.f32 %v1771
      %v1774 = vcvt.s32.f32 %v1772
      %1775 = vadd.xlane.f32.xlu0 %v1773
      %v1776 = vpop.xlane.xlu0 %1775
      %1777 = vadd.xlane.f32.xlu0 %v1774
      %v1778 = vpop.xlane.xlu0 %1777
      %v1779 = vcvt.f32.s32 %v1776
      %v1780 = vcvt.f32.s32 %v1778
      %v1781 = vshll.u32 %v1780, 16
      %v1782 = vadd.s32 %v1781, %v1779
      %vm1783 = vcmp.lt.s32.totalorder %v1782, %v1738
      %v1784 = vsel %vm1783, 1, 0
      %v1785 = vadd.s32 %v1761, %v1784
      %vm1786 = vcmp.lt.s32.totalorder %v336, 192
      %vm1787 = vcmp.lt.s32.totalorder %v337, 192
      %vm1788 = vmand %vm1719, %vm1786
      %vm1789 = vmand %vm1720, %vm1787
      %v1790 = vsel %vm1788, 1, 0
      %v1791 = vsel %vm1789, 1, 0
      %v1792 = vsel %vm447, %v1790, 0
      %v1793 = vsel %vm447, %v1791, 0
      %v1794 = vadd.s32 %v1792, %v1793
      %v1795 = vand.u32 %v1794, 65535
      %v1796 = vshrl.u32 %v1794, 16
      %v1797 = vcvt.s32.f32 %v1795
      %v1798 = vcvt.s32.f32 %v1796
      %1799 = vadd.xlane.f32.xlu0 %v1797
      %v1800 = vpop.xlane.xlu0 %1799
      %1801 = vadd.xlane.f32.xlu0 %v1798
      %v1802 = vpop.xlane.xlu0 %1801
      %v1803 = vcvt.f32.s32 %v1800
      %v1804 = vcvt.f32.s32 %v1802
      %v1805 = vshll.u32 %v1804, 16
      %v1806 = vadd.s32 %v1805, %v1803
      %vm1807 = vcmp.lt.s32.totalorder %v1806, %v1738
      %v1808 = vsel %vm1807, 1, 0
      %v1809 = vadd.s32 %v1785, %v1808
      %v1810 = vshll.u32 %v1809, 6
      %v1811 = vor.u32 %v1810, 16
      %vm1812 = vcmp.lt.s32.totalorder %v336, %v1811
      %vm1813 = vcmp.lt.s32.totalorder %v337, %v1811
      %vm1814 = vmand %vm1719, %vm1812
      %vm1815 = vmand %vm1720, %vm1813
      %v1816 = vsel %vm1814, 1, 0
      %v1817 = vsel %vm1815, 1, 0
      %v1818 = vsel %vm447, %v1816, 0
      %v1819 = vsel %vm447, %v1817, 0
      %v1820 = vadd.s32 %v1818, %v1819
      %v1821 = vand.u32 %v1820, 65535
      %v1822 = vshrl.u32 %v1820, 16
      %v1823 = vcvt.s32.f32 %v1821
      %v1824 = vcvt.s32.f32 %v1822
      %1825 = vadd.xlane.f32.xlu0 %v1823
      %v1826 = vpop.xlane.xlu0 %1825
      %1827 = vadd.xlane.f32.xlu0 %v1824
      %v1828 = vpop.xlane.xlu0 %1827
      %v1829 = vcvt.f32.s32 %v1826
      %v1830 = vcvt.f32.s32 %v1828
      %v1831 = vshll.u32 %v1830, 16
      %v1832 = vadd.s32 %v1831, %v1829
      %vm1833 = vcmp.lt.s32.totalorder %v1832, %v1738
      %v1834 = vsel %vm1833, 1, 0
      %v1835 = vor.u32 %v1810, 32
      %vm1836 = vcmp.lt.s32.totalorder %v336, %v1835
      %vm1837 = vcmp.lt.s32.totalorder %v337, %v1835
      %vm1838 = vmand %vm1719, %vm1836
      %vm1839 = vmand %vm1720, %vm1837
      %v1840 = vsel %vm1838, 1, 0
      %v1841 = vsel %vm1839, 1, 0
      %v1842 = vsel %vm447, %v1840, 0
      %v1843 = vsel %vm447, %v1841, 0
      %v1844 = vadd.s32 %v1842, %v1843
      %v1845 = vand.u32 %v1844, 65535
      %v1846 = vshrl.u32 %v1844, 16
      %v1847 = vcvt.s32.f32 %v1845
      %v1848 = vcvt.s32.f32 %v1846
      %1849 = vadd.xlane.f32.xlu0 %v1847
      %v1850 = vpop.xlane.xlu0 %1849
      %1851 = vadd.xlane.f32.xlu0 %v1848
      %v1852 = vpop.xlane.xlu0 %1851
      %v1853 = vcvt.f32.s32 %v1850
      %v1854 = vcvt.f32.s32 %v1852
      %v1855 = vshll.u32 %v1854, 16
      %v1856 = vadd.s32 %v1855, %v1853
      %vm1857 = vcmp.lt.s32.totalorder %v1856, %v1738
      %v1858 = vsel %vm1857, 1, 0
      %v1859 = vadd.s32 %v1834, %v1858
      %v1860 = vor.u32 %v1810, 48
      %vm1861 = vcmp.lt.s32.totalorder %v336, %v1860
      %vm1862 = vcmp.lt.s32.totalorder %v337, %v1860
      %vm1863 = vmand %vm1719, %vm1861
      %vm1864 = vmand %vm1720, %vm1862
      %v1865 = vsel %vm1863, 1, 0
      %v1866 = vsel %vm1864, 1, 0
      %v1867 = vsel %vm447, %v1865, 0
      %v1868 = vsel %vm447, %v1866, 0
      %v1869 = vadd.s32 %v1867, %v1868
      %v1870 = vand.u32 %v1869, 65535
      %v1871 = vshrl.u32 %v1869, 16
      %v1872 = vcvt.s32.f32 %v1870
      %v1873 = vcvt.s32.f32 %v1871
      %1874 = vadd.xlane.f32.xlu0 %v1872
      %v1875 = vpop.xlane.xlu0 %1874
      %1876 = vadd.xlane.f32.xlu0 %v1873
      %v1877 = vpop.xlane.xlu0 %1876
      %v1878 = vcvt.f32.s32 %v1875
      %v1879 = vcvt.f32.s32 %v1877
      %v1880 = vshll.u32 %v1879, 16
      %v1881 = vadd.s32 %v1880, %v1878
      %vm1882 = vcmp.lt.s32.totalorder %v1881, %v1738
      %v1883 = vsel %vm1882, 1, 0
      %v1884 = vadd.s32 %v1859, %v1883
      %v1885 = vshll.u32 %v1884, 4
      %v1886 = vadd.s32 %v1810, %v1885
      %v1887 = vor.u32 %v1886, 4
      %vm1888 = vcmp.lt.s32.totalorder %v336, %v1887
      %vm1889 = vcmp.lt.s32.totalorder %v337, %v1887
      %vm1890 = vmand %vm1719, %vm1888
      %vm1891 = vmand %vm1720, %vm1889
      %v1892 = vsel %vm1890, 1, 0
      %v1893 = vsel %vm1891, 1, 0
      %v1894 = vsel %vm447, %v1892, 0
      %v1895 = vsel %vm447, %v1893, 0
      %v1896 = vadd.s32 %v1894, %v1895
      %v1897 = vand.u32 %v1896, 65535
      %v1898 = vshrl.u32 %v1896, 16
      %v1899 = vcvt.s32.f32 %v1897
      %v1900 = vcvt.s32.f32 %v1898
      %1901 = vadd.xlane.f32.xlu0 %v1899
      %v1902 = vpop.xlane.xlu0 %1901
      %1903 = vadd.xlane.f32.xlu0 %v1900
      %v1904 = vpop.xlane.xlu0 %1903
      %v1905 = vcvt.f32.s32 %v1902
      %v1906 = vcvt.f32.s32 %v1904
      %v1907 = vshll.u32 %v1906, 16
      %v1908 = vadd.s32 %v1907, %v1905
      %vm1909 = vcmp.lt.s32.totalorder %v1908, %v1738
      %v1910 = vsel %vm1909, 1, 0
      %v1911 = vor.u32 %v1886, 8
      %vm1912 = vcmp.lt.s32.totalorder %v336, %v1911
      %vm1913 = vcmp.lt.s32.totalorder %v337, %v1911
      %vm1914 = vmand %vm1719, %vm1912
      %vm1915 = vmand %vm1720, %vm1913
      %v1916 = vsel %vm1914, 1, 0
      %v1917 = vsel %vm1915, 1, 0
      %v1918 = vsel %vm447, %v1916, 0
      %v1919 = vsel %vm447, %v1917, 0
      %v1920 = vadd.s32 %v1918, %v1919
      %v1921 = vand.u32 %v1920, 65535
      %v1922 = vshrl.u32 %v1920, 16
      %v1923 = vcvt.s32.f32 %v1921
      %v1924 = vcvt.s32.f32 %v1922
      %1925 = vadd.xlane.f32.xlu0 %v1923
      %v1926 = vpop.xlane.xlu0 %1925
      %1927 = vadd.xlane.f32.xlu0 %v1924
      %v1928 = vpop.xlane.xlu0 %1927
      %v1929 = vcvt.f32.s32 %v1926
      %v1930 = vcvt.f32.s32 %v1928
      %v1931 = vshll.u32 %v1930, 16
      %v1932 = vadd.s32 %v1931, %v1929
      %vm1933 = vcmp.lt.s32.totalorder %v1932, %v1738
      %v1934 = vsel %vm1933, 1, 0
      %v1935 = vadd.s32 %v1910, %v1934
      %v1936 = vor.u32 %v1886, 12
      %vm1937 = vcmp.lt.s32.totalorder %v336, %v1936
      %vm1938 = vcmp.lt.s32.totalorder %v337, %v1936
      %vm1939 = vmand %vm1719, %vm1937
      %vm1940 = vmand %vm1720, %vm1938
      %v1941 = vsel %vm1939, 1, 0
      %v1942 = vsel %vm1940, 1, 0
      %v1943 = vsel %vm447, %v1941, 0
      %v1944 = vsel %vm447, %v1942, 0
      %v1945 = vadd.s32 %v1943, %v1944
      %v1946 = vand.u32 %v1945, 65535
      %v1947 = vshrl.u32 %v1945, 16
      %v1948 = vcvt.s32.f32 %v1946
      %v1949 = vcvt.s32.f32 %v1947
      %1950 = vadd.xlane.f32.xlu0 %v1948
      %v1951 = vpop.xlane.xlu0 %1950
      %1952 = vadd.xlane.f32.xlu0 %v1949
      %v1953 = vpop.xlane.xlu0 %1952
      %v1954 = vcvt.f32.s32 %v1951
      %v1955 = vcvt.f32.s32 %v1953
      %v1956 = vshll.u32 %v1955, 16
      %v1957 = vadd.s32 %v1956, %v1954
      %vm1958 = vcmp.lt.s32.totalorder %v1957, %v1738
      %v1959 = vsel %vm1958, 1, 0
      %v1960 = vadd.s32 %v1935, %v1959
      %v1961 = vshll.u32 %v1960, 2
      %v1962 = vadd.s32 %v1886, %v1961
      %v1963 = vor.u32 %v1962, 1
      %vm1964 = vcmp.lt.s32.totalorder %v336, %v1963
      %vm1965 = vcmp.lt.s32.totalorder %v337, %v1963
      %vm1966 = vmand %vm1719, %vm1964
      %vm1967 = vmand %vm1720, %vm1965
      %v1968 = vsel %vm1966, 1, 0
      %v1969 = vsel %vm1967, 1, 0
      %v1970 = vsel %vm447, %v1968, 0
      %v1971 = vsel %vm447, %v1969, 0
      %v1972 = vadd.s32 %v1970, %v1971
      %v1973 = vand.u32 %v1972, 65535
      %v1974 = vshrl.u32 %v1972, 16
      %v1975 = vcvt.s32.f32 %v1973
      %v1976 = vcvt.s32.f32 %v1974
      %1977 = vadd.xlane.f32.xlu0 %v1975
      %v1978 = vpop.xlane.xlu0 %1977
      %1979 = vadd.xlane.f32.xlu0 %v1976
      %v1980 = vpop.xlane.xlu0 %1979
      %v1981 = vcvt.f32.s32 %v1978
      %v1982 = vcvt.f32.s32 %v1980
      %v1983 = vshll.u32 %v1982, 16
      %v1984 = vadd.s32 %v1983, %v1981
      %vm1985 = vcmp.lt.s32.totalorder %v1984, %v1738
      %v1986 = vsel %vm1985, 1, 0
      %v1987 = vor.u32 %v1962, 2
      %vm1988 = vcmp.lt.s32.totalorder %v336, %v1987
      %vm1989 = vcmp.lt.s32.totalorder %v337, %v1987
      %vm1990 = vmand %vm1719, %vm1988
      %vm1991 = vmand %vm1720, %vm1989
      %v1992 = vsel %vm1990, 1, 0
      %v1993 = vsel %vm1991, 1, 0
      %v1994 = vsel %vm447, %v1992, 0
      %v1995 = vsel %vm447, %v1993, 0
      %v1996 = vadd.s32 %v1994, %v1995
      %v1997 = vand.u32 %v1996, 65535
      %v1998 = vshrl.u32 %v1996, 16
      %v1999 = vcvt.s32.f32 %v1997
      %v2000 = vcvt.s32.f32 %v1998
      %2001 = vadd.xlane.f32.xlu0 %v1999
      %v2002 = vpop.xlane.xlu0 %2001
      %2003 = vadd.xlane.f32.xlu0 %v2000
      %v2004 = vpop.xlane.xlu0 %2003
      %v2005 = vcvt.f32.s32 %v2002
      %v2006 = vcvt.f32.s32 %v2004
      %v2007 = vshll.u32 %v2006, 16
      %v2008 = vadd.s32 %v2007, %v2005
      %vm2009 = vcmp.lt.s32.totalorder %v2008, %v1738
      %v2010 = vsel %vm2009, 1, 0
      %v2011 = vadd.s32 %v1986, %v2010
      %v2012 = vor.u32 %v1962, 3
      %vm2013 = vcmp.lt.s32.totalorder %v336, %v2012
      %vm2014 = vcmp.lt.s32.totalorder %v337, %v2012
      %vm2015 = vmand %vm1719, %vm2013
      %vm2016 = vmand %vm1720, %vm2014
      %v2017 = vsel %vm2015, 1, 0
      %v2018 = vsel %vm2016, 1, 0
      %v2019 = vsel %vm447, %v2017, 0
      %v2020 = vsel %vm447, %v2018, 0
      %v2021 = vadd.s32 %v2019, %v2020
      %v2022 = vand.u32 %v2021, 65535
      %v2023 = vshrl.u32 %v2021, 16
      %v2024 = vcvt.s32.f32 %v2022
      %v2025 = vcvt.s32.f32 %v2023
      %2026 = vadd.xlane.f32.xlu0 %v2024
      %v2027 = vpop.xlane.xlu0 %2026
      %2028 = vadd.xlane.f32.xlu0 %v2025
      %v2029 = vpop.xlane.xlu0 %2028
      %v2030 = vcvt.f32.s32 %v2027
      %v2031 = vcvt.f32.s32 %v2029
      %v2032 = vshll.u32 %v2031, 16
      %v2033 = vadd.s32 %v2032, %v2030
      %vm2034 = vcmp.lt.s32.totalorder %v2033, %v1738
      %v2035 = vsel %vm2034, 1, 0
      %v2036 = vadd.s32 %v2011, %v2035
      %v2037 = vadd.s32 %v1962, %v2036
      %vm2038 = vcmp.le.s32.totalorder %v336, %v2037
      %vm2039 = vcmp.le.s32.totalorder %v337, %v2037
      %vm2040 = vmand %vm1719, %vm2038
      %vm2041 = vmand %vm1720, %vm2039
      %vm2042 = vmor %vm1717, %vm2040
      %vm2043 = vmor %vm1718, %vm2041
      %v2044 = vsel %vm2042, 1, 0
      %v2045 = vsel %vm2043, 1, 0
      %v2046 = vcvt.s32.f32 %v2044
      %v2047 = vcvt.s32.f32 %v2045
      %v2050 = vcombine.low %v2046, %v2047
      %v2052 = vunpack.c.l.s4 1983009808
      %v2053 = vunpack.c.0.s8 %v2052
      %v2054 = vlaneseq
      %v2055 = vshrl.u32 %v2054, 7
      %v2056 = vsub.s32 %v2053, %v2055
      %v2057 = vrot.slane %v2050, %v2056
      %v2059 = vadd.f32 %v354, %v2057
      %v2060 = vmul.f32 %v595, %v2059
      %v2063 = vunpack.c.l.s4 1983009808
      %v2064 = vunpack.c.0.s8 %v2063
      %v2065 = vlaneseq
      %v2066 = vshrl.u32 %v2065, 7
      %v2067 = vsub.s32 %v2064, %v2066
      %v2068 = vrot.slane %v2060, %v2067
      %v2069 = vcombine.high %v2068, %v2068
      %v2072 = vsel %vm447, %v2068, 0.0
      %v2073 = vsel %vm447, %v2069, 0.0
      %v2074 = vadd.f32 %v2072, %v2073
      %2075 = vadd.xlane.f32.xlu0 %v2074
      %v2076 = vpop.xlane.xlu0 %2075
      %v2077 = vadd.f32 %v588, %v2076
      %vm2078 = vcmp.gt.s32.totalorder %v618, 0
      %v2079 = vsel %vm2078, 1, 0
      %v2080 = vcvt.s32.f32 %v2079
      %v2081 = vcvt.s32.f32 %v618
      %v2082 = vmax.f32 %v2081, 1e-06
      %v2083 = vmul.f32 %v2077, %v2080
      %v2084 = vrcp.pop %v2082
      %v2085 = vmul.f32 %v2083, %v2084
      %2086 = vst [vmem:[#allocation11] sm:$0x3] %v2085
    $region41: #{tpu_custom_call.1} parent=1 // pred_fallthru
      _
    // Predicated region
    $region42: #{tpu_custom_call.1} parent=1 // pred_check
      _
    $region43: #{tpu_custom_call.1} parent=1 // pred_check_branch
      %2088 = sbr.rel (0) target = $region45
    $region44: #{tpu_custom_call.1} parent=1 // pred_region
      %s2090 = ssub.s32 32, 32
      %2091 = vsyncadd [#allocation7], %s2090
      %s2093 = sshll.u32 [#allocation11], 4
      %s2094 = int_to_ptr.vmem [resolvable:$true] %s2093
      %2096 = dma.vmem_to_hbm [thread:$0]  %s2094, 32, %s5, [#allocation7]
    $region45: #{tpu_custom_call.1} parent=1 // pred_fallthru
      _
    // Predicated region
    $region46: #{tpu_custom_call.1} parent=1 // pred_check
      _
    $region47: #{tpu_custom_call.1} parent=1 // pred_check_branch
      %2098 = sbr.rel (0) target = $region49
    $region48: #{tpu_custom_call.1} parent=1 // pred_region
      %2099 = dma.done [#allocation7], 32
    $region49: #{tpu_custom_call.1} parent=1 // pred_fallthru
      _
    %2100 = vsyncpa [#allocation6], 1
    %2101 = vsyncpa [#allocation9], 1
    %2102 = vsyncpa [#allocation7], 1

</llo_original>
